<compile_context>
chip_gen: v5e
topology: v5e:2x2
jax: 0.10.0
libtpu: 0.0.40
codegen_flags: <defaults>
</compile_context>

<pallas_src>
import functools

import jax
import jax.numpy as jnp
from jax import lax
from jax.experimental import pallas as pl
from jax.experimental.pallas import tpu as pltpu

EPS = 1e-5
LANE = 128


def _round_up(x, m):
    return (x + m - 1) // m * m


def _pick_row_block_h(h, w, rows_per_tile):
    """Largest divisor th of h with th*w <= ~rows_per_tile and (th*w) % 8 == 0."""
    target = max(1, min(h, rows_per_tile // max(w, 1)))
    for th in range(target, 0, -1):
        if h % th == 0 and (th * w) % 8 == 0:
            return th
    return h


def _pick_rows_block(m, target):
    """Largest divisor of m that is <= target and a multiple of 8 (or m)."""
    upper = max(1, min(m, target))
    for d in range(upper, 0, -1):
        if m % d == 0 and (d % 8 == 0 or d == m):
            return d
    return m


# ---------------------------------------------------------------------------
# Pass 1: conv as 9 shifted MXU matmuls (f32 accumulate) + BN partial sums.
# ---------------------------------------------------------------------------
def _conv_stats_kernel(xt_ref, w_ref, y_ref, stats_ref):
    # xt_ref:    (TH, 3, W+2, Cin)   dh-shifted, zero-padded input row tile
    # w_ref:     (3, 3, Cin, Cp)     conv weight (grid-resident, constant map)
    # y_ref:     (TH*W, Cp)          pre-BN conv output tile (f32)
    # stats_ref: (1, 2, Cp)          per-tile [sum, sum_of_squares] over rows
    th = xt_ref.shape[0]
    cin = xt_ref.shape[3]
    rows, cp = y_ref.shape
    w = rows // th

    acc = jnp.zeros((rows, cp), jnp.float32)
    for dh in range(3):                      # static unroll: 9 MXU matmuls
        for dw in range(3):
            lhs = xt_ref[:, dh, dw:dw + w, :].reshape(rows, cin)
            acc = acc + jnp.dot(lhs, w_ref[dh, dw],
                                preferred_element_type=jnp.float32)

    y_ref[...] = acc
    s1 = jnp.sum(acc, axis=0, keepdims=True)            # (1, Cp)
    s2 = jnp.sum(acc * acc, axis=0, keepdims=True)      # (1, Cp)
    stats_ref[0] = jnp.concatenate([s1, s2], axis=0)    # (2, Cp)


# ---------------------------------------------------------------------------
# Pass 2: folded BatchNorm affine (one FMA) + ReLU, row-tiled.
# ---------------------------------------------------------------------------
def _bn_relu_kernel(y_ref, scale_ref, shift_ref, o_ref):
    o_ref[...] = jnp.maximum(y_ref[...] * scale_ref[...] + shift_ref[...], 0.0)


def _conv_bn_relu_layer(x_nhwc, w_hwio, gamma, beta, *, rows_per_tile,
                        matmul_dtype):
    n, h, w, cin = x_nhwc.shape
    cp = w_hwio.shape[-1]
    m = n * h * w

    th = _pick_row_block_h(h, w, rows_per_tile)
    hbn = h // th
    nblocks = n * hbn

    # 3x dh-shifted, zero-padded copies of the activation -> each conv tap is a
    # static slice of a plain Blocked row tile (no halo DMA needed).
    xm = x_nhwc.astype(matmul_dtype)
    xp = jnp.pad(xm, ((0, 0), (1, 1), (1, 1), (0, 0)))             # (N,H+2,W+2,C)
    xt = jnp.stack([xp[:, d:d + h] for d in range(3)], axis=2)     # (N,H,3,W+2,C)
    xt = xt.reshape(n * h, 3, w + 2, cin)
    wm = w_hwio.astype(matmul_dtype)

    itemsize = jnp.dtype(matmul_dtype).itemsize
    cost1 = pl.CostEstimate(
        flops=2 * m * 9 * cin * cp + 3 * m * cp,
        transcendentals=0,
        bytes_accessed=int(xt.size * itemsize + wm.size * itemsize
                           + m * cp * 4 + nblocks * 2 * cp * 4))

    y_pre, stats = pl.pallas_call(
        _conv_stats_kernel,
        out_shape=(jax.ShapeDtypeStruct((m, cp), jnp.float32),
                   jax.ShapeDtypeStruct((nblocks, 2, cp), jnp.float32)),
        grid=(nblocks,),
        in_specs=[
            pl.BlockSpec((th, 3, w + 2, cin), lambda i: (i, 0, 0, 0)),
            pl.BlockSpec((3, 3, cin, cp), lambda i: (0, 0, 0, 0)),
        ],
        out_specs=(
            pl.BlockSpec((th * w, cp), lambda i: (i, 0)),
            pl.BlockSpec((1, 2, cp), lambda i: (i, 0, 0)),
        ),
        compiler_params=pltpu.CompilerParams(
            dimension_semantics=("parallel",)),
        cost_estimate=cost1,
    )(xt, wm)

    # Fold training-mode BN (biased variance over N*H*W) into per-channel
    # scale/shift -- computed once, not per tile.  Padded channels give exact 0.
    sums = jnp.sum(stats, axis=0)                       # (2, Cp)
    mean = sums[0] / m
    var = jnp.maximum(sums[1] / m - mean * mean, 0.0)
    scale = gamma * lax.rsqrt(var + EPS)
    shift = beta - mean * scale

    tm = _pick_rows_block(m, rows_per_tile)
    cost2 = pl.CostEstimate(flops=2 * m * cp, transcendentals=0,
                            bytes_accessed=2 * m * cp * 4)
    y = pl.pallas_call(
        _bn_relu_kernel,
        out_shape=jax.ShapeDtypeStruct((m, cp), jnp.float32),
        grid=(m // tm,),
        in_specs=[
            pl.BlockSpec((tm, cp), lambda i: (i, 0)),
            pl.BlockSpec((1, cp), lambda i: (0, 0)),
            pl.BlockSpec((1, cp), lambda i: (0, 0)),
        ],
        out_specs=pl.BlockSpec((tm, cp), lambda i: (i, 0)),
        compiler_params=pltpu.CompilerParams(
            dimension_semantics=("parallel",)),
        cost_estimate=cost2,
    )(y_pre, scale[None, :], shift[None, :])

    return y.reshape(n, h, w, cp)


def _prep_layer_params(w_oihw, gamma, beta, cin_total):
    """PyTorch OIHW weight -> HWIO, input channels padded to cin_total, output
    channels padded to a multiple of 128 (lane-dense kernel I/O)."""
    cout, cin = w_oihw.shape[0], w_oihw.shape[1]
    cp = _round_up(cout, LANE)
    wt = jnp.transpose(w_oihw, (2, 3, 1, 0))            # (3, 3, Cin, Cout)
    wt = jnp.pad(wt, ((0, 0), (0, 0), (0, cin_total - cin), (0, cp - cout)))
    g = jnp.pad(gamma, (0, cp - cout))
    b = jnp.pad(beta, (0, cp - cout))
    return wt, g, b, cp


def conv_block_forward(x_nchw, params, *, rows_per_tile=512,
                       matmul_dtype=jnp.float32):
    """Exact ConvBlock.forward (training-mode BN): NCHW in, NCHW out (f32).

    Note: conv biases b1/b2 are mathematical no-ops here (exactly cancelled by
    the BatchNorm mean subtraction), so they are not sent to the kernels.
    """
    n, cin, h, w = x_nchw.shape
    x = jnp.transpose(x_nchw, (0, 2, 3, 1))             # NCHW -> NHWC

    w1, g1, be1, cp1 = _prep_layer_params(params["w1"], params["g1"],
                                          params["beta1"], cin)
    y1 = _conv_bn_relu_layer(x, w1, g1, be1, rows_per_tile=rows_per_tile,
                             matmul_dtype=matmul_dtype)      # (N,H,W,Cp1), pads=0

    w2, g2, be2, _ = _prep_layer_params(params["w2"], params["g2"],
                                        params["beta2"], cp1)
    y2 = _conv_bn_relu_layer(y1, w2, g2, be2, rows_per_tile=rows_per_tile,
                             matmul_dtype=matmul_dtype)      # (N,H,W,Cp2)

    cout = params["w2"].shape[0]
    return jnp.transpose(y2[..., :cout], (0, 3, 1, 2))  # NHWC -> NCHW


def init_params(key, in_channels, out_channels, hidden_dim=None):
    if not hidden_dim:
        hidden_dim = out_channels
    ks = jax.random.split(key, 6)
    return {
        "w1": 0.1 * jax.random.normal(ks[0], (hidden_dim, in_channels, 3, 3), jnp.float32),
        "b1": 0.1 * jax.random.normal(ks[1], (hidden_dim,), jnp.float32),
        "g1": 1.0 + 0.1 * jax.random.normal(ks[2], (hidden_dim,), jnp.float32),
        "beta1": 0.1 * jax.random.normal(ks[3], (hidden_dim,), jnp.float32),
        "w2": 0.1 * jax.random.normal(ks[4], (out_channels, hidden_dim, 3, 3), jnp.float32),
        "b2": 0.1 * jax.random.normal(ks[5], (out_channels,), jnp.float32),
        "g2": jnp.ones((out_channels,), jnp.float32),
        "beta2": jnp.zeros((out_channels,), jnp.float32),
    }


def _reference_forward(x, p):
    """Pure-JAX reference (lax.conv, with bias) for correctness checking."""
    def half(x, w, b, g, beta):
        y = lax.conv_general_dilated(
            x, w, window_strides=(1, 1), padding="SAME",
            dimension_numbers=("NCHW", "OIHW", "NCHW"))
        y = y + b[None, :, None, None]
        mean = jnp.mean(y, axis=(0, 2, 3), keepdims=True)
        var = jnp.mean(jnp.square(y - mean), axis=(0, 2, 3), keepdims=True)
        y = (y - mean) * lax.rsqrt(var + EPS)
        y = y * g[None, :, None, None] + beta[None, :, None, None]
        return jnp.maximum(y, 0.0)

    y = half(x, p["w1"], p["b1"], p["g1"], p["beta1"])
    return half(y, p["w2"], p["b2"], p["g2"], p["beta2"])


if __name__ == "__main__":
    key = jax.random.PRNGKey(0)
    k_x, k_p = jax.random.split(key)

    N, Cin, H, W = 2, 4, 16, 16
    Cout = 8
    x = jax.random.normal(k_x, (N, Cin, H, W), jnp.float32)
    params = init_params(k_p, Cin, Cout)

    ref = _reference_forward(x, params)

    # f32 MXU operands; two tilings (multi- and single- row-block grids).
    for rpt in (128, 512):
        fwd = jax.jit(functools.partial(conv_block_forward,
                                        rows_per_tile=rpt,
                                        matmul_dtype=jnp.float32))
        out = jax.block_until_ready(fwd(x, params))
        assert out.shape == (N, Cout, H, W), out.shape
        err = float(jnp.max(jnp.abs(out - ref)))
        assert jnp.allclose(out, ref, atol=1e-4, rtol=1e-4), err

    # bf16 MXU operands (f32 accumulation / BN math): looser sanity tolerance.
    fwd_bf16 = jax.jit(functools.partial(conv_block_forward,
                                         rows_per_tile=128,
                                         matmul_dtype=jnp.bfloat16))
    out16 = jax.block_until_ready(fwd_bf16(x, params))
    err16 = float(jnp.max(jnp.abs(out16 - ref)))
    assert jnp.allclose(out16, ref, atol=1e-1, rtol=1e-1), err16

    print("KERNEL_OK")
</pallas_src>

<mosaic_0001>
module attributes {stable_mosaic.version = 11 : i64} {
  func.func @_conv_stats_kernel(%arg0: i32, %arg1: memref<8x3x18x4xf32, #tpu.memory_space<vmem>>, %arg2: memref<3x3x4x128xf32, #tpu.memory_space<vmem>>, %arg3: memref<128x128xf32, #tpu.memory_space<vmem>>, %arg4: memref<1x2x128xf32, #tpu.memory_space<vmem>>) attributes {dimension_semantics = [#tpu.dimension_semantics<parallel>], iteration_bounds = array<i64: 4>, scalar_prefetch = 0 : i64, scratch_operands = 0 : i64, tpu.core_type = #tpu.core_type<tc>, window_params = [{transform_indices = @transform_0, window_bounds = array<i64: 8, 3, 18, 4>}, {pipeline_mode = #tpu.pipeline_mode<synchronous>, transform_indices = @transform_1, window_bounds = array<i64: 3, 3, 4, 128>}, {transform_indices = @transform_2, window_bounds = array<i64: 128, 128>}, {transform_indices = @transform_3, window_bounds = array<i64: 1, 2, 128>}]} {
    %cst = arith.constant 0.000000e+00 : f32
    %0 = vector.broadcast %cst : f32 to vector<128x128xf32>
    %c0 = arith.constant 0 : index
    %c0_0 = arith.constant 0 : index
    %c0_1 = arith.constant 0 : index
    %c0_2 = arith.constant 0 : index
    %1 = vector.load %arg1[%c0, %c0_0, %c0_1, %c0_2] : memref<8x3x18x4xf32, #tpu.memory_space<vmem>>, vector<8x1x16x4xf32>
    %2 = vector.shape_cast %1 : vector<8x1x16x4xf32> to vector<8x16x4xf32>
    %3 = vector.shape_cast %2 : vector<8x16x4xf32> to vector<128x4xf32>
    %c0_3 = arith.constant 0 : index
    %c0_4 = arith.constant 0 : index
    %c0_5 = arith.constant 0 : index
    %c0_6 = arith.constant 0 : index
    %4 = vector.load %arg2[%c0_3, %c0_4, %c0_5, %c0_6] : memref<3x3x4x128xf32, #tpu.memory_space<vmem>>, vector<1x1x4x128xf32>
    %5 = vector.shape_cast %4 : vector<1x1x4x128xf32> to vector<4x128xf32>
    %cst_7 = arith.constant dense<0.000000e+00> : vector<128x128xf32>
    %6 = tpu.matmul %3, %5, %cst_7 {dimension_numbers = #tpu.dot_dimension_numbers<[1], [0], [0], [1], [0, 0, 1, 1], [], []>} : vector<128x4xf32>, vector<4x128xf32>, vector<128x128xf32> -> vector<128x128xf32>
    %7 = arith.addf %0, %6 : vector<128x128xf32>
    %c0_8 = arith.constant 0 : index
    %c0_9 = arith.constant 0 : index
    %c1 = arith.constant 1 : index
    %c0_10 = arith.constant 0 : index
    %8 = vector.load %arg1[%c0_8, %c0_9, %c1, %c0_10] : memref<8x3x18x4xf32, #tpu.memory_space<vmem>>, vector<8x1x16x4xf32>
    %9 = vector.shape_cast %8 : vector<8x1x16x4xf32> to vector<8x16x4xf32>
    %10 = vector.shape_cast %9 : vector<8x16x4xf32> to vector<128x4xf32>
    %c0_11 = arith.constant 0 : index
    %c1_12 = arith.constant 1 : index
    %c0_13 = arith.constant 0 : index
    %c0_14 = arith.constant 0 : index
    %11 = vector.load %arg2[%c0_11, %c1_12, %c0_13, %c0_14] : memref<3x3x4x128xf32, #tpu.memory_space<vmem>>, vector<1x1x4x128xf32>
    %12 = vector.shape_cast %11 : vector<1x1x4x128xf32> to vector<4x128xf32>
    %cst_15 = arith.constant dense<0.000000e+00> : vector<128x128xf32>
    %13 = tpu.matmul %10, %12, %cst_15 {dimension_numbers = #tpu.dot_dimension_numbers<[1], [0], [0], [1], [0, 0, 1, 1], [], []>} : vector<128x4xf32>, vector<4x128xf32>, vector<128x128xf32> -> vector<128x128xf32>
    %14 = arith.addf %7, %13 : vector<128x128xf32>
    %c0_16 = arith.constant 0 : index
    %c0_17 = arith.constant 0 : index
    %c2 = arith.constant 2 : index
    %c0_18 = arith.constant 0 : index
    %15 = vector.load %arg1[%c0_16, %c0_17, %c2, %c0_18] : memref<8x3x18x4xf32, #tpu.memory_space<vmem>>, vector<8x1x16x4xf32>
    %16 = vector.shape_cast %15 : vector<8x1x16x4xf32> to vector<8x16x4xf32>
    %17 = vector.shape_cast %16 : vector<8x16x4xf32> to vector<128x4xf32>
    %c0_19 = arith.constant 0 : index
    %c2_20 = arith.constant 2 : index
    %c0_21 = arith.constant 0 : index
    %c0_22 = arith.constant 0 : index
    %18 = vector.load %arg2[%c0_19, %c2_20, %c0_21, %c0_22] : memref<3x3x4x128xf32, #tpu.memory_space<vmem>>, vector<1x1x4x128xf32>
    %19 = vector.shape_cast %18 : vector<1x1x4x128xf32> to vector<4x128xf32>
    %cst_23 = arith.constant dense<0.000000e+00> : vector<128x128xf32>
    %20 = tpu.matmul %17, %19, %cst_23 {dimension_numbers = #tpu.dot_dimension_numbers<[1], [0], [0], [1], [0, 0, 1, 1], [], []>} : vector<128x4xf32>, vector<4x128xf32>, vector<128x128xf32> -> vector<128x128xf32>
    %21 = arith.addf %14, %20 : vector<128x128xf32>
    %c0_24 = arith.constant 0 : index
    %c1_25 = arith.constant 1 : index
    %c0_26 = arith.constant 0 : index
    %c0_27 = arith.constant 0 : index
    %22 = vector.load %arg1[%c0_24, %c1_25, %c0_26, %c0_27] : memref<8x3x18x4xf32, #tpu.memory_space<vmem>>, vector<8x1x16x4xf32>
    %23 = vector.shape_cast %22 : vector<8x1x16x4xf32> to vector<8x16x4xf32>
    %24 = vector.shape_cast %23 : vector<8x16x4xf32> to vector<128x4xf32>
    %c1_28 = arith.constant 1 : index
    %c0_29 = arith.constant 0 : index
    %c0_30 = arith.constant 0 : index
    %c0_31 = arith.constant 0 : index
    %25 = vector.load %arg2[%c1_28, %c0_29, %c0_30, %c0_31] : memref<3x3x4x128xf32, #tpu.memory_space<vmem>>, vector<1x1x4x128xf32>
    %26 = vector.shape_cast %25 : vector<1x1x4x128xf32> to vector<4x128xf32>
    %cst_32 = arith.constant dense<0.000000e+00> : vector<128x128xf32>
    %27 = tpu.matmul %24, %26, %cst_32 {dimension_numbers = #tpu.dot_dimension_numbers<[1], [0], [0], [1], [0, 0, 1, 1], [], []>} : vector<128x4xf32>, vector<4x128xf32>, vector<128x128xf32> -> vector<128x128xf32>
    %28 = arith.addf %21, %27 : vector<128x128xf32>
    %c0_33 = arith.constant 0 : index
    %c1_34 = arith.constant 1 : index
    %c1_35 = arith.constant 1 : index
    %c0_36 = arith.constant 0 : index
    %29 = vector.load %arg1[%c0_33, %c1_34, %c1_35, %c0_36] : memref<8x3x18x4xf32, #tpu.memory_space<vmem>>, vector<8x1x16x4xf32>
    %30 = vector.shape_cast %29 : vector<8x1x16x4xf32> to vector<8x16x4xf32>
    %31 = vector.shape_cast %30 : vector<8x16x4xf32> to vector<128x4xf32>
    %c1_37 = arith.constant 1 : index
    %c1_38 = arith.constant 1 : index
    %c0_39 = arith.constant 0 : index
    %c0_40 = arith.constant 0 : index
    %32 = vector.load %arg2[%c1_37, %c1_38, %c0_39, %c0_40] : memref<3x3x4x128xf32, #tpu.memory_space<vmem>>, vector<1x1x4x128xf32>
    %33 = vector.shape_cast %32 : vector<1x1x4x128xf32> to vector<4x128xf32>
    %cst_41 = arith.constant dense<0.000000e+00> : vector<128x128xf32>
    %34 = tpu.matmul %31, %33, %cst_41 {dimension_numbers = #tpu.dot_dimension_numbers<[1], [0], [0], [1], [0, 0, 1, 1], [], []>} : vector<128x4xf32>, vector<4x128xf32>, vector<128x128xf32> -> vector<128x128xf32>
    %35 = arith.addf %28, %34 : vector<128x128xf32>
    %c0_42 = arith.constant 0 : index
    %c1_43 = arith.constant 1 : index
    %c2_44 = arith.constant 2 : index
    %c0_45 = arith.constant 0 : index
    %36 = vector.load %arg1[%c0_42, %c1_43, %c2_44, %c0_45] : memref<8x3x18x4xf32, #tpu.memory_space<vmem>>, vector<8x1x16x4xf32>
    %37 = vector.shape_cast %36 : vector<8x1x16x4xf32> to vector<8x16x4xf32>
    %38 = vector.shape_cast %37 : vector<8x16x4xf32> to vector<128x4xf32>
    %c1_46 = arith.constant 1 : index
    %c2_47 = arith.constant 2 : index
    %c0_48 = arith.constant 0 : index
    %c0_49 = arith.constant 0 : index
    %39 = vector.load %arg2[%c1_46, %c2_47, %c0_48, %c0_49] : memref<3x3x4x128xf32, #tpu.memory_space<vmem>>, vector<1x1x4x128xf32>
    %40 = vector.shape_cast %39 : vector<1x1x4x128xf32> to vector<4x128xf32>
    %cst_50 = arith.constant dense<0.000000e+00> : vector<128x128xf32>
    %41 = tpu.matmul %38, %40, %cst_50 {dimension_numbers = #tpu.dot_dimension_numbers<[1], [0], [0], [1], [0, 0, 1, 1], [], []>} : vector<128x4xf32>, vector<4x128xf32>, vector<128x128xf32> -> vector<128x128xf32>
    %42 = arith.addf %35, %41 : vector<128x128xf32>
    %c0_51 = arith.constant 0 : index
    %c2_52 = arith.constant 2 : index
    %c0_53 = arith.constant 0 : index
    %c0_54 = arith.constant 0 : index
    %43 = vector.load %arg1[%c0_51, %c2_52, %c0_53, %c0_54] : memref<8x3x18x4xf32, #tpu.memory_space<vmem>>, vector<8x1x16x4xf32>
    %44 = vector.shape_cast %43 : vector<8x1x16x4xf32> to vector<8x16x4xf32>
    %45 = vector.shape_cast %44 : vector<8x16x4xf32> to vector<128x4xf32>
    %c2_55 = arith.constant 2 : index
    %c0_56 = arith.constant 0 : index
    %c0_57 = arith.constant 0 : index
    %c0_58 = arith.constant 0 : index
    %46 = vector.load %arg2[%c2_55, %c0_56, %c0_57, %c0_58] : memref<3x3x4x128xf32, #tpu.memory_space<vmem>>, vector<1x1x4x128xf32>
    %47 = vector.shape_cast %46 : vector<1x1x4x128xf32> to vector<4x128xf32>
    %cst_59 = arith.constant dense<0.000000e+00> : vector<128x128xf32>
    %48 = tpu.matmul %45, %47, %cst_59 {dimension_numbers = #tpu.dot_dimension_numbers<[1], [0], [0], [1], [0, 0, 1, 1], [], []>} : vector<128x4xf32>, vector<4x128xf32>, vector<128x128xf32> -> vector<128x128xf32>
    %49 = arith.addf %42, %48 : vector<128x128xf32>
    %c0_60 = arith.constant 0 : index
    %c2_61 = arith.constant 2 : index
    %c1_62 = arith.constant 1 : index
    %c0_63 = arith.constant 0 : index
    %50 = vector.load %arg1[%c0_60, %c2_61, %c1_62, %c0_63] : memref<8x3x18x4xf32, #tpu.memory_space<vmem>>, vector<8x1x16x4xf32>
    %51 = vector.shape_cast %50 : vector<8x1x16x4xf32> to vector<8x16x4xf32>
    %52 = vector.shape_cast %51 : vector<8x16x4xf32> to vector<128x4xf32>
    %c2_64 = arith.constant 2 : index
    %c1_65 = arith.constant 1 : index
    %c0_66 = arith.constant 0 : index
    %c0_67 = arith.constant 0 : index
    %53 = vector.load %arg2[%c2_64, %c1_65, %c0_66, %c0_67] : memref<3x3x4x128xf32, #tpu.memory_space<vmem>>, vector<1x1x4x128xf32>
    %54 = vector.shape_cast %53 : vector<1x1x4x128xf32> to vector<4x128xf32>
    %cst_68 = arith.constant dense<0.000000e+00> : vector<128x128xf32>
    %55 = tpu.matmul %52, %54, %cst_68 {dimension_numbers = #tpu.dot_dimension_numbers<[1], [0], [0], [1], [0, 0, 1, 1], [], []>} : vector<128x4xf32>, vector<4x128xf32>, vector<128x128xf32> -> vector<128x128xf32>
    %56 = arith.addf %49, %55 : vector<128x128xf32>
    %c0_69 = arith.constant 0 : index
    %c2_70 = arith.constant 2 : index
    %c2_71 = arith.constant 2 : index
    %c0_72 = arith.constant 0 : index
    %57 = vector.load %arg1[%c0_69, %c2_70, %c2_71, %c0_72] : memref<8x3x18x4xf32, #tpu.memory_space<vmem>>, vector<8x1x16x4xf32>
    %58 = vector.shape_cast %57 : vector<8x1x16x4xf32> to vector<8x16x4xf32>
    %59 = vector.shape_cast %58 : vector<8x16x4xf32> to vector<128x4xf32>
    %c2_73 = arith.constant 2 : index
    %c2_74 = arith.constant 2 : index
    %c0_75 = arith.constant 0 : index
    %c0_76 = arith.constant 0 : index
    %60 = vector.load %arg2[%c2_73, %c2_74, %c0_75, %c0_76] : memref<3x3x4x128xf32, #tpu.memory_space<vmem>>, vector<1x1x4x128xf32>
    %61 = vector.shape_cast %60 : vector<1x1x4x128xf32> to vector<4x128xf32>
    %cst_77 = arith.constant dense<0.000000e+00> : vector<128x128xf32>
    %62 = tpu.matmul %59, %61, %cst_77 {dimension_numbers = #tpu.dot_dimension_numbers<[1], [0], [0], [1], [0, 0, 1, 1], [], []>} : vector<128x4xf32>, vector<4x128xf32>, vector<128x128xf32> -> vector<128x128xf32>
    %63 = arith.addf %56, %62 : vector<128x128xf32>
    %c0_78 = arith.constant 0 : index
    %c0_79 = arith.constant 0 : index
    %64 = vector.load %arg3[%c0_78, %c0_79] : memref<128x128xf32, #tpu.memory_space<vmem>>, vector<128x128xf32>
    tpu.vector_store %arg3[%c0_78, %c0_79], %63 {strides = array<i32>} : memref<128x128xf32, #tpu.memory_space<vmem>>, vector<128x128xf32>,
    %cst_80 = arith.constant dense<0.000000e+00> : vector<128xf32>
    %65 = vector.multi_reduction <add>, %63, %cst_80 [0] : vector<128x128xf32> to vector<128xf32>
    %66 = vector.shape_cast %65 : vector<128xf32> to vector<1x128xf32>
    %67 = arith.mulf %63, %63 : vector<128x128xf32>
    %cst_81 = arith.constant dense<0.000000e+00> : vector<128xf32>
    %68 = vector.multi_reduction <add>, %67, %cst_81 [0] : vector<128x128xf32> to vector<128xf32>
    %69 = vector.shape_cast %68 : vector<128xf32> to vector<1x128xf32>
    %70 = tpu.concatenate %66, %69 in 0 : vector<1x128xf32>, vector<1x128xf32> -> vector<2x128xf32>
    %c0_82 = arith.constant 0 : index
    %c0_83 = arith.constant 0 : index
    %c0_84 = arith.constant 0 : index
    %71 = vector.load %arg4[%c0_82, %c0_83, %c0_84] : memref<1x2x128xf32, #tpu.memory_space<vmem>>, vector<1x2x128xf32>
    %72 = vector.shape_cast %71 : vector<1x2x128xf32> to vector<2x128xf32>
    %73 = vector.shape_cast %70 : vector<2x128xf32> to vector<1x2x128xf32>
    tpu.vector_store %arg4[%c0_82, %c0_83, %c0_84], %73 {strides = array<i32>} : memref<1x2x128xf32, #tpu.memory_space<vmem>>, vector<1x2x128xf32>,
    return
  }
  func.func @transform_0(%arg0: i32) -> (i32, i32, i32, i32) {
    %c0_i32 = arith.constant 0 : i32
    %c0_i32_0 = arith.constant 0 : i32
    %c0_i32_1 = arith.constant 0 : i32
    %c0_i32_2 = arith.constant 0 : i32
    return %arg0, %c0_i32, %c0_i32_0, %c0_i32_1 : i32, i32, i32, i32
  }
  func.func @transform_1(%arg0: i32) -> (i32, i32, i32, i32) {
    %c0_i32 = arith.constant 0 : i32
    %c0_i32_0 = arith.constant 0 : i32
    %c0_i32_1 = arith.constant 0 : i32
    %c0_i32_2 = arith.constant 0 : i32
    %c0_i32_3 = arith.constant 0 : i32
    return %c0_i32, %c0_i32_0, %c0_i32_1, %c0_i32_2 : i32, i32, i32, i32
  }
  func.func @transform_2(%arg0: i32) -> (i32, i32) {
    %c0_i32 = arith.constant 0 : i32
    %c0_i32_0 = arith.constant 0 : i32
    return %arg0, %c0_i32 : i32, i32
  }
  func.func @transform_3(%arg0: i32) -> (i32, i32, i32) {
    %c0_i32 = arith.constant 0 : i32
    %c0_i32_0 = arith.constant 0 : i32
    %c0_i32_1 = arith.constant 0 : i32
    return %arg0, %c0_i32, %c0_i32_0 : i32, i32, i32
  }
}

module attributes {stable_mosaic.version = 11 : i64} {
  func.func @_bn_relu_kernel(%arg0: i32, %arg1: memref<128x128xf32, #tpu.memory_space<vmem>>, %arg2: memref<1x128xf32, #tpu.memory_space<vmem>>, %arg3: memref<1x128xf32, #tpu.memory_space<vmem>>, %arg4: memref<128x128xf32, #tpu.memory_space<vmem>>) attributes {dimension_semantics = [#tpu.dimension_semantics<parallel>], iteration_bounds = array<i64: 4>, scalar_prefetch = 0 : i64, scratch_operands = 0 : i64, tpu.core_type = #tpu.core_type<tc>, window_params = [{transform_indices = @transform_0, window_bounds = array<i64: 128, 128>}, {pipeline_mode = #tpu.pipeline_mode<synchronous>, transform_indices = @transform_1, window_bounds = array<i64: 1, 128>}, {pipeline_mode = #tpu.pipeline_mode<synchronous>, transform_indices = @transform_2, window_bounds = array<i64: 1, 128>}, {transform_indices = @transform_3, window_bounds = array<i64: 128, 128>}]} {
    %c0 = arith.constant 0 : index
    %c0_0 = arith.constant 0 : index
    %0 = vector.load %arg1[%c0, %c0_0] : memref<128x128xf32, #tpu.memory_space<vmem>>, vector<128x128xf32>
    %c0_1 = arith.constant 0 : index
    %c0_2 = arith.constant 0 : index
    %1 = vector.load %arg2[%c0_1, %c0_2] : memref<1x128xf32, #tpu.memory_space<vmem>>, vector<1x128xf32>
    %2 = vector.broadcast %1 : vector<1x128xf32> to vector<128x128xf32>
    %3 = arith.mulf %0, %2 : vector<128x128xf32>
    %c0_3 = arith.constant 0 : index
    %c0_4 = arith.constant 0 : index
    %4 = vector.load %arg3[%c0_3, %c0_4] : memref<1x128xf32, #tpu.memory_space<vmem>>, vector<1x128xf32>
    %5 = vector.broadcast %4 : vector<1x128xf32> to vector<128x128xf32>
    %6 = arith.addf %3, %5 : vector<128x128xf32>
    %cst = arith.constant 0.000000e+00 : f32
    %7 = vector.broadcast %cst : f32 to vector<128x128xf32>
    %8 = arith.maximumf %6, %7 : vector<128x128xf32>
    %c0_5 = arith.constant 0 : index
    %c0_6 = arith.constant 0 : index
    %9 = vector.load %arg4[%c0_5, %c0_6] : memref<128x128xf32, #tpu.memory_space<vmem>>, vector<128x128xf32>
    tpu.vector_store %arg4[%c0_5, %c0_6], %8 {strides = array<i32>} : memref<128x128xf32, #tpu.memory_space<vmem>>, vector<128x128xf32>,
    return
  }
  func.func @transform_0(%arg0: i32) -> (i32, i32) {
    %c0_i32 = arith.constant 0 : i32
    %c0_i32_0 = arith.constant 0 : i32
    return %arg0, %c0_i32 : i32, i32
  }
  func.func @transform_1(%arg0: i32) -> (i32, i32) {
    %c0_i32 = arith.constant 0 : i32
    %c0_i32_0 = arith.constant 0 : i32
    %c0_i32_1 = arith.constant 0 : i32
    return %c0_i32, %c0_i32_0 : i32, i32
  }
  func.func @transform_2(%arg0: i32) -> (i32, i32) {
    %c0_i32 = arith.constant 0 : i32
    %c0_i32_0 = arith.constant 0 : i32
    %c0_i32_1 = arith.constant 0 : i32
    return %c0_i32, %c0_i32_0 : i32, i32
  }
  func.func @transform_3(%arg0: i32) -> (i32, i32) {
    %c0_i32 = arith.constant 0 : i32
    %c0_i32_0 = arith.constant 0 : i32
    return %arg0, %c0_i32 : i32, i32
  }
}

module attributes {stable_mosaic.version = 11 : i64} {
  func.func @_conv_stats_kernel(%arg0: i32, %arg1: memref<8x3x18x128xf32, #tpu.memory_space<vmem>>, %arg2: memref<3x3x128x128xf32, #tpu.memory_space<vmem>>, %arg3: memref<128x128xf32, #tpu.memory_space<vmem>>, %arg4: memref<1x2x128xf32, #tpu.memory_space<vmem>>) attributes {dimension_semantics = [#tpu.dimension_semantics<parallel>], iteration_bounds = array<i64: 4>, scalar_prefetch = 0 : i64, scratch_operands = 0 : i64, tpu.core_type = #tpu.core_type<tc>, window_params = [{transform_indices = @transform_0, window_bounds = array<i64: 8, 3, 18, 128>}, {pipeline_mode = #tpu.pipeline_mode<synchronous>, transform_indices = @transform_1, window_bounds = array<i64: 3, 3, 128, 128>}, {transform_indices = @transform_2, window_bounds = array<i64: 128, 128>}, {transform_indices = @transform_3, window_bounds = array<i64: 1, 2, 128>}]} {
    %cst = arith.constant 0.000000e+00 : f32
    %0 = vector.broadcast %cst : f32 to vector<128x128xf32>
    %c0 = arith.constant 0 : index
    %c0_0 = arith.constant 0 : index
    %c0_1 = arith.constant 0 : index
    %c0_2 = arith.constant 0 : index
    %1 = vector.load %arg1[%c0, %c0_0, %c0_1, %c0_2] : memref<8x3x18x128xf32, #tpu.memory_space<vmem>>, vector<8x1x16x128xf32>
    %2 = vector.shape_cast %1 : vector<8x1x16x128xf32> to vector<8x16x128xf32>
    %3 = vector.shape_cast %2 : vector<8x16x128xf32> to vector<128x128xf32>
    %c0_3 = arith.constant 0 : index
    %c0_4 = arith.constant 0 : index
    %c0_5 = arith.constant 0 : index
    %c0_6 = arith.constant 0 : index
    %4 = vector.load %arg2[%c0_3, %c0_4, %c0_5, %c0_6] : memref<3x3x128x128xf32, #tpu.memory_space<vmem>>, vector<1x1x128x128xf32>
    %5 = vector.shape_cast %4 : vector<1x1x128x128xf32> to vector<128x128xf32>
    %cst_7 = arith.constant dense<0.000000e+00> : vector<128x128xf32>
    %6 = tpu.matmul %3, %5, %cst_7 {dimension_numbers = #tpu.dot_dimension_numbers<[1], [0], [0], [1], [0, 0, 1, 1], [], []>} : vector<128x128xf32>, vector<128x128xf32>, vector<128x128xf32> -> vector<128x128xf32>
    %7 = arith.addf %0, %6 : vector<128x128xf32>
    %c0_8 = arith.constant 0 : index
    %c0_9 = arith.constant 0 : index
    %c1 = arith.constant 1 : index
    %c0_10 = arith.constant 0 : index
    %8 = vector.load %arg1[%c0_8, %c0_9, %c1, %c0_10] : memref<8x3x18x128xf32, #tpu.memory_space<vmem>>, vector<8x1x16x128xf32>
    %9 = vector.shape_cast %8 : vector<8x1x16x128xf32> to vector<8x16x128xf32>
    %10 = vector.shape_cast %9 : vector<8x16x128xf32> to vector<128x128xf32>
    %c0_11 = arith.constant 0 : index
    %c1_12 = arith.constant 1 : index
    %c0_13 = arith.constant 0 : index
    %c0_14 = arith.constant 0 : index
    %11 = vector.load %arg2[%c0_11, %c1_12, %c0_13, %c0_14] : memref<3x3x128x128xf32, #tpu.memory_space<vmem>>, vector<1x1x128x128xf32>
    %12 = vector.shape_cast %11 : vector<1x1x128x128xf32> to vector<128x128xf32>
    %cst_15 = arith.constant dense<0.000000e+00> : vector<128x128xf32>
    %13 = tpu.matmul %10, %12, %cst_15 {dimension_numbers = #tpu.dot_dimension_numbers<[1], [0], [0], [1], [0, 0, 1, 1], [], []>} : vector<128x128xf32>, vector<128x128xf32>, vector<128x128xf32> -> vector<128x128xf32>
    %14 = arith.addf %7, %13 : vector<128x128xf32>
    %c0_16 = arith.constant 0 : index
    %c0_17 = arith.constant 0 : index
    %c2 = arith.constant 2 : index
    %c0_18 = arith.constant 0 : index
    %15 = vector.load %arg1[%c0_16, %c0_17, %c2, %c0_18] : memref<8x3x18x128xf32, #tpu.memory_space<vmem>>, vector<8x1x16x128xf32>
    %16 = vector.shape_cast %15 : vector<8x1x16x128xf32> to vector<8x16x128xf32>
    %17 = vector.shape_cast %16 : vector<8x16x128xf32> to vector<128x128xf32>
    %c0_19 = arith.constant 0 : index
    %c2_20 = arith.constant 2 : index
    %c0_21 = arith.constant 0 : index
    %c0_22 = arith.constant 0 : index
    %18 = vector.load %arg2[%c0_19, %c2_20, %c0_21, %c0_22] : memref<3x3x128x128xf32, #tpu.memory_space<vmem>>, vector<1x1x128x128xf32>
    %19 = vector.shape_cast %18 : vector<1x1x128x128xf32> to vector<128x128xf32>
    %cst_23 = arith.constant dense<0.000000e+00> : vector<128x128xf32>
    %20 = tpu.matmul %17, %19, %cst_23 {dimension_numbers = #tpu.dot_dimension_numbers<[1], [0], [0], [1], [0, 0, 1, 1], [], []>} : vector<128x128xf32>, vector<128x128xf32>, vector<128x128xf32> -> vector<128x128xf32>
    %21 = arith.addf %14, %20 : vector<128x128xf32>
    %c0_24 = arith.constant 0 : index
    %c1_25 = arith.constant 1 : index
    %c0_26 = arith.constant 0 : index
    %c0_27 = arith.constant 0 : index
    %22 = vector.load %arg1[%c0_24, %c1_25, %c0_26, %c0_27] : memref<8x3x18x128xf32, #tpu.memory_space<vmem>>, vector<8x1x16x128xf32>
    %23 = vector.shape_cast %22 : vector<8x1x16x128xf32> to vector<8x16x128xf32>
    %24 = vector.shape_cast %23 : vector<8x16x128xf32> to vector<128x128xf32>
    %c1_28 = arith.constant 1 : index
    %c0_29 = arith.constant 0 : index
    %c0_30 = arith.constant 0 : index
    %c0_31 = arith.constant 0 : index
    %25 = vector.load %arg2[%c1_28, %c0_29, %c0_30, %c0_31] : memref<3x3x128x128xf32, #tpu.memory_space<vmem>>, vector<1x1x128x128xf32>
    %26 = vector.shape_cast %25 : vector<1x1x128x128xf32> to vector<128x128xf32>
    %cst_32 = arith.constant dense<0.000000e+00> : vector<128x128xf32>
    %27 = tpu.matmul %24, %26, %cst_32 {dimension_numbers = #tpu.dot_dimension_numbers<[1], [0], [0], [1], [0, 0, 1, 1], [], []>} : vector<128x128xf32>, vector<128x128xf32>, vector<128x128xf32> -> vector<128x128xf32>
    %28 = arith.addf %21, %27 : vector<128x128xf32>
    %c0_33 = arith.constant 0 : index
    %c1_34 = arith.constant 1 : index
    %c1_35 = arith.constant 1 : index
    %c0_36 = arith.constant 0 : index
    %29 = vector.load %arg1[%c0_33, %c1_34, %c1_35, %c0_36] : memref<8x3x18x128xf32, #tpu.memory_space<vmem>>, vector<8x1x16x128xf32>
    %30 = vector.shape_cast %29 : vector<8x1x16x128xf32> to vector<8x16x128xf32>
    %31 = vector.shape_cast %30 : vector<8x16x128xf32> to vector<128x128xf32>
    %c1_37 = arith.constant 1 : index
    %c1_38 = arith.constant 1 : index
    %c0_39 = arith.constant 0 : index
    %c0_40 = arith.constant 0 : index
    %32 = vector.load %arg2[%c1_37, %c1_38, %c0_39, %c0_40] : memref<3x3x128x128xf32, #tpu.memory_space<vmem>>, vector<1x1x128x128xf32>
    %33 = vector.shape_cast %32 : vector<1x1x128x128xf32> to vector<128x128xf32>
    %cst_41 = arith.constant dense<0.000000e+00> : vector<128x128xf32>
    %34 = tpu.matmul %31, %33, %cst_41 {dimension_numbers = #tpu.dot_dimension_numbers<[1], [0], [0], [1], [0, 0, 1, 1], [], []>} : vector<128x128xf32>, vector<128x128xf32>, vector<128x128xf32> -> vector<128x128xf32>
    %35 = arith.addf %28, %34 : vector<128x128xf32>
    %c0_42 = arith.constant 0 : index
    %c1_43 = arith.constant 1 : index
    %c2_44 = arith.constant 2 : index
    %c0_45 = arith.constant 0 : index
    %36 = vector.load %arg1[%c0_42, %c1_43, %c2_44, %c0_45] : memref<8x3x18x128xf32, #tpu.memory_space<vmem>>, vector<8x1x16x128xf32>
    %37 = vector.shape_cast %36 : vector<8x1x16x128xf32> to vector<8x16x128xf32>
    %38 = vector.shape_cast %37 : vector<8x16x128xf32> to vector<128x128xf32>
    %c1_46 = arith.constant 1 : index
    %c2_47 = arith.constant 2 : index
    %c0_48 = arith.constant 0 : index
    %c0_49 = arith.constant 0 : index
    %39 = vector.load %arg2[%c1_46, %c2_47, %c0_48, %c0_49] : memref<3x3x128x128xf32, #tpu.memory_space<vmem>>, vector<1x1x128x128xf32>
    %40 = vector.shape_cast %39 : vector<1x1x128x128xf32> to vector<128x128xf32>
    %cst_50 = arith.constant dense<0.000000e+00> : vector<128x128xf32>
    %41 = tpu.matmul %38, %40, %cst_50 {dimension_numbers = #tpu.dot_dimension_numbers<[1], [0], [0], [1], [0, 0, 1, 1], [], []>} : vector<128x128xf32>, vector<128x128xf32>, vector<128x128xf32> -> vector<128x128xf32>
    %42 = arith.addf %35, %41 : vector<128x128xf32>
    %c0_51 = arith.constant 0 : index
    %c2_52 = arith.constant 2 : index
    %c0_53 = arith.constant 0 : index
    %c0_54 = arith.constant 0 : index
    %43 = vector.load %arg1[%c0_51, %c2_52, %c0_53, %c0_54] : memref<8x3x18x128xf32, #tpu.memory_space<vmem>>, vector<8x1x16x128xf32>
    %44 = vector.shape_cast %43 : vector<8x1x16x128xf32> to vector<8x16x128xf32>
    %45 = vector.shape_cast %44 : vector<8x16x128xf32> to vector<128x128xf32>
    %c2_55 = arith.constant 2 : index
    %c0_56 = arith.constant 0 : index
    %c0_57 = arith.constant 0 : index
    %c0_58 = arith.constant 0 : index
    %46 = vector.load %arg2[%c2_55, %c0_56, %c0_57, %c0_58] : memref<3x3x128x128xf32, #tpu.memory_space<vmem>>, vector<1x1x128x128xf32>
    %47 = vector.shape_cast %46 : vector<1x1x128x128xf32> to vector<128x128xf32>
    %cst_59 = arith.constant dense<0.000000e+00> : vector<128x128xf32>
    %48 = tpu.matmul %45, %47, %cst_59 {dimension_numbers = #tpu.dot_dimension_numbers<[1], [0], [0], [1], [0, 0, 1, 1], [], []>} : vector<128x128xf32>, vector<128x128xf32>, vector<128x128xf32> -> vector<128x128xf32>
    %49 = arith.addf %42, %48 : vector<128x128xf32>
    %c0_60 = arith.constant 0 : index
    %c2_61 = arith.constant 2 : index
    %c1_62 = arith.constant 1 : index
    %c0_63 = arith.constant 0 : index
    %50 = vector.load %arg1[%c0_60, %c2_61, %c1_62, %c0_63] : memref<8x3x18x128xf32, #tpu.memory_space<vmem>>, vector<8x1x16x128xf32>
    %51 = vector.shape_cast %50 : vector<8x1x16x128xf32> to vector<8x16x128xf32>
    %52 = vector.shape_cast %51 : vector<8x16x128xf32> to vector<128x128xf32>
    %c2_64 = arith.constant 2 : index
    %c1_65 = arith.constant 1 : index
    %c0_66 = arith.constant 0 : index
    %c0_67 = arith.constant 0 : index
    %53 = vector.load %arg2[%c2_64, %c1_65, %c0_66, %c0_67] : memref<3x3x128x128xf32, #tpu.memory_space<vmem>>, vector<1x1x128x128xf32>
    %54 = vector.shape_cast %53 : vector<1x1x128x128xf32> to vector<128x128xf32>
    %cst_68 = arith.constant dense<0.000000e+00> : vector<128x128xf32>
    %55 = tpu.matmul %52, %54, %cst_68 {dimension_numbers = #tpu.dot_dimension_numbers<[1], [0], [0], [1], [0, 0, 1, 1], [], []>} : vector<128x128xf32>, vector<128x128xf32>, vector<128x128xf32> -> vector<128x128xf32>
    %56 = arith.addf %49, %55 : vector<128x128xf32>
    %c0_69 = arith.constant 0 : index
    %c2_70 = arith.constant 2 : index
    %c2_71 = arith.constant 2 : index
    %c0_72 = arith.constant 0 : index
    %57 = vector.load %arg1[%c0_69, %c2_70, %c2_71, %c0_72] : memref<8x3x18x128xf32, #tpu.memory_space<vmem>>, vector<8x1x16x128xf32>
    %58 = vector.shape_cast %57 : vector<8x1x16x128xf32> to vector<8x16x128xf32>
    %59 = vector.shape_cast %58 : vector<8x16x128xf32> to vector<128x128xf32>
    %c2_73 = arith.constant 2 : index
    %c2_74 = arith.constant 2 : index
    %c0_75 = arith.constant 0 : index
    %c0_76 = arith.constant 0 : index
    %60 = vector.load %arg2[%c2_73, %c2_74, %c0_75, %c0_76] : memref<3x3x128x128xf32, #tpu.memory_space<vmem>>, vector<1x1x128x128xf32>
    %61 = vector.shape_cast %60 : vector<1x1x128x128xf32> to vector<128x128xf32>
    %cst_77 = arith.constant dense<0.000000e+00> : vector<128x128xf32>
    %62 = tpu.matmul %59, %61, %cst_77 {dimension_numbers = #tpu.dot_dimension_numbers<[1], [0], [0], [1], [0, 0, 1, 1], [], []>} : vector<128x128xf32>, vector<128x128xf32>, vector<128x128xf32> -> vector<128x128xf32>
    %63 = arith.addf %56, %62 : vector<128x128xf32>
    %c0_78 = arith.constant 0 : index
    %c0_79 = arith.constant 0 : index
    %64 = vector.load %arg3[%c0_78, %c0_79] : memref<128x128xf32, #tpu.memory_space<vmem>>, vector<128x128xf32>
    tpu.vector_store %arg3[%c0_78, %c0_79], %63 {strides = array<i32>} : memref<128x128xf32, #tpu.memory_space<vmem>>, vector<128x128xf32>,
    %cst_80 = arith.constant dense<0.000000e+00> : vector<128xf32>
    %65 = vector.multi_reduction <add>, %63, %cst_80 [0] : vector<128x128xf32> to vector<128xf32>
    %66 = vector.shape_cast %65 : vector<128xf32> to vector<1x128xf32>
    %67 = arith.mulf %63, %63 : vector<128x128xf32>
    %cst_81 = arith.constant dense<0.000000e+00> : vector<128xf32>
    %68 = vector.multi_reduction <add>, %67, %cst_81 [0] : vector<128x128xf32> to vector<128xf32>
    %69 = vector.shape_cast %68 : vector<128xf32> to vector<1x128xf32>
    %70 = tpu.concatenate %66, %69 in 0 : vector<1x128xf32>, vector<1x128xf32> -> vector<2x128xf32>
    %c0_82 = arith.constant 0 : index
    %c0_83 = arith.constant 0 : index
    %c0_84 = arith.constant 0 : index
    %71 = vector.load %arg4[%c0_82, %c0_83, %c0_84] : memref<1x2x128xf32, #tpu.memory_space<vmem>>, vector<1x2x128xf32>
    %72 = vector.shape_cast %71 : vector<1x2x128xf32> to vector<2x128xf32>
    %73 = vector.shape_cast %70 : vector<2x128xf32> to vector<1x2x128xf32>
    tpu.vector_store %arg4[%c0_82, %c0_83, %c0_84], %73 {strides = array<i32>} : memref<1x2x128xf32, #tpu.memory_space<vmem>>, vector<1x2x128xf32>,
    return
  }
  func.func @transform_0(%arg0: i32) -> (i32, i32, i32, i32) {
    %c0_i32 = arith.constant 0 : i32
    %c0_i32_0 = arith.constant 0 : i32
    %c0_i32_1 = arith.constant 0 : i32
    %c0_i32_2 = arith.constant 0 : i32
    return %arg0, %c0_i32, %c0_i32_0, %c0_i32_1 : i32, i32, i32, i32
  }
  func.func @transform_1(%arg0: i32) -> (i32, i32, i32, i32) {
    %c0_i32 = arith.constant 0 : i32
    %c0_i32_0 = arith.constant 0 : i32
    %c0_i32_1 = arith.constant 0 : i32
    %c0_i32_2 = arith.constant 0 : i32
    %c0_i32_3 = arith.constant 0 : i32
    return %c0_i32, %c0_i32_0, %c0_i32_1, %c0_i32_2 : i32, i32, i32, i32
  }
  func.func @transform_2(%arg0: i32) -> (i32, i32) {
    %c0_i32 = arith.constant 0 : i32
    %c0_i32_0 = arith.constant 0 : i32
    return %arg0, %c0_i32 : i32, i32
  }
  func.func @transform_3(%arg0: i32) -> (i32, i32, i32) {
    %c0_i32 = arith.constant 0 : i32
    %c0_i32_0 = arith.constant 0 : i32
    %c0_i32_1 = arith.constant 0 : i32
    return %arg0, %c0_i32, %c0_i32_0 : i32, i32, i32
  }
}

</mosaic_0001>

<llo_original>
// kernel: conv_block_forward.5
$region0: #{conv_block_forward.5}
  #allocation0 [shape = 'u32[]', space=smem, size = 0x4, offset = 0x4, fixed_abs, tag = 'smem constant byte address 0x4 - core index']
  #allocation1 [shape = 'u32[72,128]{1,0:T(1,128)}', space=vmem, size = 0x9000, scoped, tag = 'internal scratch']
  %s0 = inlined_call_operand.vmem [shape: f32[512,128], index: 0, kind: input, shape index: {}]
  %s1 = inlined_call_operand.vmem [shape: f32[1,128], index: 1, kind: input, shape index: {}]
  %s2 = inlined_call_operand.vmem [shape: f32[1,128], index: 2, kind: input, shape index: {}]
  %s3 = inlined_call_operand.vmem [shape: f32[512,128], index: 3, kind: output, shape index: {}]
  %s4 = sld [smem:[#allocation0]]
  $region45: #{conv_block_forward.5} parent=0
    _
  %s6 = ssub.s32 1, %s4
  %s7 = scalar_select 0, %s6, %s4
  loop: start=0, step=1, limit=6
  $region2: #{conv_block_forward.5} parent=0 // loop_pre_header
    _
  $region3: #{conv_block_forward.5} parent=0 // loop_header
    %s9 = sphi 0, %s13
    %p10 = scmp.ge.s32.totalorder %s9, 6
    %s19 = sphi 0, %s21
    %s22 = sphi 0, %s19
    %s23 = sphi 0, %s22
    %s39 = sphi 0, %s23
    %s43 = sphi 0, %s43
    %s45 = sphi 0, %s43
    %s46 = sphi 0, %s45
    %s60 = sphi 0, %s46
    %s64 = sphi 0, %s64
    %s66 = sphi 0, %s64
    %s67 = sphi 0, %s66
    %s81 = sphi 0, %s67
    %s87 = sphi 0, %s89
    %s90 = sphi 0, %s87
    %s91 = sphi 0, %s90
    %s107 = sphi 0, %s91
  $region4: #{conv_block_forward.5} parent=0 // loop_header_branch
    %12 = sbr.rel (%p10) target = $region8
  $region5: #{conv_block_forward.5} parent=0 // loop_body
    %s14 = ssub.s32 %s9, 1
    %s15 = ssub.s32 %s9, 2
    %s16 = sadd.s32 %s9, 1
    %s17 = ssub.s32 %s9, %s16
    %p18 = scmp.eq.s32.totalorder %s17, 0
    %s20 = sadd.s32 %s19, 1
    %s21 = scalar_select %p18, %s19, %s20
    %p24 = pneg %p18
    %p25 = scmp.eq.s32.totalorder %s9, 3
    %p26 = por %p24, %p25
    %p27 = scmp.ne.s32.totalorder %s19, %s22
    %p28 = scmp.eq.s32.totalorder %s9, 0
    %p29 = por %p27, %p28
    %p30 = scmp.ne.s32.totalorder %s19, %s22
    %p31 = scmp.eq.s32.totalorder %s14, 3
    %p32 = por %p30, %p31
    %p33 = scmp.ne.s32.totalorder %s22, %s23
    %p34 = scmp.eq.s32.totalorder %s14, 0
    %p35 = por %p33, %p34
    %p36 = scmp.ne.s32.totalorder %s22, %s23
    %p37 = scmp.eq.s32.totalorder %s15, 3
    %p38 = por %p36, %p37
    %p40 = scmp.ne.s32.totalorder %s23, %s39
    %p41 = scmp.eq.s32.totalorder %s15, 0
    %p42 = por %p40, %p41
    %s44 = sadd.s32 %s43, 1
    %p47 = scmp.eq.s32.totalorder %s9, 3
    %p48 = scmp.ne.s32.totalorder %s43, %s45
    %p49 = scmp.eq.s32.totalorder %s9, 0
    %p50 = por %p48, %p49
    %p51 = scmp.ne.s32.totalorder %s43, %s45
    %p52 = scmp.eq.s32.totalorder %s14, 3
    %p53 = por %p51, %p52
    %p54 = scmp.ne.s32.totalorder %s45, %s46
    %p55 = scmp.eq.s32.totalorder %s14, 0
    %p56 = por %p54, %p55
    %p57 = scmp.ne.s32.totalorder %s45, %s46
    %p58 = scmp.eq.s32.totalorder %s15, 3
    %p59 = por %p57, %p58
    %p61 = scmp.ne.s32.totalorder %s46, %s60
    %p62 = scmp.eq.s32.totalorder %s15, 0
    %p63 = por %p61, %p62
    %s65 = sadd.s32 %s64, 1
    %p68 = scmp.eq.s32.totalorder %s9, 3
    %p69 = scmp.ne.s32.totalorder %s64, %s66
    %p70 = scmp.eq.s32.totalorder %s9, 0
    %p71 = por %p69, %p70
    %p72 = scmp.ne.s32.totalorder %s64, %s66
    %p73 = scmp.eq.s32.totalorder %s14, 3
    %p74 = por %p72, %p73
    %p75 = scmp.ne.s32.totalorder %s66, %s67
    %p76 = scmp.eq.s32.totalorder %s14, 0
    %p77 = por %p75, %p76
    %p78 = scmp.ne.s32.totalorder %s66, %s67
    %p79 = scmp.eq.s32.totalorder %s15, 3
    %p80 = por %p78, %p79
    %p82 = scmp.ne.s32.totalorder %s67, %s81
    %p83 = scmp.eq.s32.totalorder %s15, 0
    %p84 = por %p82, %p83
    %s85 = ssub.s32 %s9, %s16
    %p86 = scmp.eq.s32.totalorder %s85, 0
    %s88 = sadd.s32 %s87, 1
    %s89 = scalar_select %p86, %s87, %s88
    %p92 = pneg %p86
    %p93 = scmp.eq.s32.totalorder %s9, 3
    %p94 = por %p92, %p93
    %p95 = scmp.ne.s32.totalorder %s87, %s90
    %p96 = scmp.eq.s32.totalorder %s9, 0
    %p97 = por %p95, %p96
    %p98 = scmp.ne.s32.totalorder %s87, %s90
    %p99 = scmp.eq.s32.totalorder %s14, 3
    %p100 = por %p98, %p99
    %p101 = scmp.ne.s32.totalorder %s90, %s91
    %p102 = scmp.eq.s32.totalorder %s14, 0
    %p103 = por %p101, %p102
    %p104 = scmp.ne.s32.totalorder %s90, %s91
    %p105 = scmp.eq.s32.totalorder %s15, 3
    %p106 = por %p104, %p105
    %p108 = scmp.ne.s32.totalorder %s91, %s107
    %p109 = scmp.eq.s32.totalorder %s15, 0
    %p110 = por %p108, %p109
    %p111 = scmp.le.s32.totalorder 1, %s9
    %p112 = scmp.lt.s32.totalorder %s9, 5
    %p113 = pnand %p111, %p112
    %p114 = pneg %p113
    // Predicated region
    $region9: #{conv_block_forward.5} parent=5 // pred_check
      _
    $region10: #{conv_block_forward.5} parent=5 // pred_check_branch
      %116 = sbr.rel (%p113) target = $region12
    $region11: #{conv_block_forward.5} parent=5 // pred_region
      %s117 = ssub.s32 %s9, 1
      // Predicated region
      $region13: #{conv_block_forward.5} parent=11 // pred_check
        %p118 = pneg %p56
      $region14: #{conv_block_forward.5} parent=11 // pred_check_branch
        %120 = sbr.rel (%p118) target = $region16
      $region15: #{conv_block_forward.5} parent=11 // pred_region
        _
      $region16: #{conv_block_forward.5} parent=11 // pred_fallthru
        _
      // Predicated region
      $region17: #{conv_block_forward.5} parent=11 // pred_check
        %p121 = pneg %p77
      $region18: #{conv_block_forward.5} parent=11 // pred_check_branch
        %123 = sbr.rel (%p121) target = $region20
      $region19: #{conv_block_forward.5} parent=11 // pred_region
        _
      $region20: #{conv_block_forward.5} parent=11 // pred_fallthru
        _
    $region12: #{conv_block_forward.5} parent=5 // pred_fallthru
      _
    %p124 = scmp.lt.s32.totalorder %s9, 4
    // Predicated region
    $region21: #{conv_block_forward.5} parent=5 // pred_check
      %p125 = pneg %p124
    $region22: #{conv_block_forward.5} parent=5 // pred_check_branch
      %127 = sbr.rel (%p125) target = $region24
    $region23: #{conv_block_forward.5} parent=5 // pred_region
      // Predicated region
      $region25: #{conv_block_forward.5} parent=23 // pred_check
        %p128 = pneg %p29
      $region26: #{conv_block_forward.5} parent=23 // pred_check_branch
        %130 = sbr.rel (%p128) target = $region28
      $region27: #{conv_block_forward.5} parent=23 // pred_region
        %s131 = smul.u32 16, %s9
        %p132 = scmp.lt.s32.totalorder %s131, 63
        %s133 = scalar_select %p132, %s131, 63
        %s134 = smul.addr %s133, 8
        %s135 = scalar_lea.vmem %s0, %s134
        %s136 = smul.u32 16, %s9
      $region28: #{conv_block_forward.5} parent=23 // pred_fallthru
        _
    $region24: #{conv_block_forward.5} parent=5 // pred_fallthru
      _
    %p137 = scmp.le.s32.totalorder 1, %s9
    %p138 = scmp.lt.s32.totalorder %s9, 5
    %p139 = pnand %p137, %p138
    %p140 = pneg %p139
    // Predicated region
    $region29: #{conv_block_forward.5} parent=5 // pred_check
      _
    $region30: #{conv_block_forward.5} parent=5 // pred_check_branch
      %142 = sbr.rel (%p139) target = $region32
    $region31: #{conv_block_forward.5} parent=5 // pred_region
      %s143 = ssub.s32 %s9, 1
      %s144 = smul.u32 16, %s14
      %p145 = scmp.lt.s32.totalorder %s144, 63
      %s146 = scalar_select %p145, %s144, 63
      %s147 = smul.addr %s146, 8
      %s148 = scalar_lea.vmem %s0, %s147
      %p149 = pneg %p35
      %p150 = pneg %p32
      %p151 = pneg %p56
      %p152 = pneg %p53
      %p153 = pneg %p77
      %p154 = pneg %p74
      %p155 = pneg %p103
      %p156 = pneg %p100
      %s157 = smul.u32 16, %s14
      %p158 = scmp.lt.s32.totalorder %s157, 63
      %s159 = scalar_select %p158, %s157, 63
      %s160 = smul.addr %s159, 8
      %s161 = scalar_lea.vmem %s3, %s160
      %s162 = smul.u32 16, %s14
      %p163 = scmp.lt.s32.totalorder %s162, 63
      %s164 = scalar_select %p163, %s162, 63
      %s165 = smul.addr %s164, 8
      %s166 = scalar_lea.vmem %s0, %s165
      %s167 = smul.u32 16, %s14
      %s168 = smul.u32 16, %s14
      %p169 = scmp.lt.s32.totalorder %s168, 63
      %s170 = scalar_select %p169, %s168, 63
      %s171 = smul.addr %s170, 8
      %s172 = scalar_lea.vmem %s3, %s171
      %s173 = smul.u32 16, %s14
      %v174 = vld [vmem:[%s166] sm:$0xff]
      %v175 = vld [vmem:[%s166 + $0x8] sm:$0xff]
      %v176 = vld [vmem:[%s166 + $0x10] sm:$0xff]
      %v177 = vld [vmem:[%s166 + $0x18] sm:$0xff]
      %v178 = vld [vmem:[%s166 + $0x20] sm:$0xff]
      %v179 = vld [vmem:[%s166 + $0x28] sm:$0xff]
      %v180 = vld [vmem:[%s166 + $0x30] sm:$0xff]
      %v181 = vld [vmem:[%s166 + $0x38] sm:$0xff]
      %v182 = vld [vmem:[%s166 + $0x40] sm:$0xff]
      %v183 = vld [vmem:[%s166 + $0x48] sm:$0xff]
      %v184 = vld [vmem:[%s166 + $0x50] sm:$0xff]
      %v185 = vld [vmem:[%s166 + $0x58] sm:$0xff]
      %v186 = vld [vmem:[%s166 + $0x60] sm:$0xff]
      %v187 = vld [vmem:[%s166 + $0x68] sm:$0xff]
      %v188 = vld [vmem:[%s166 + $0x70] sm:$0xff]
      %v189 = vld [vmem:[%s166 + $0x78] sm:$0xff]
      %v190 = vld [vmem:[%s1] sm:$0x1]
      %v192 = vperm.slane %v190, 0
      %v194 = vmul.f32 %v174, %v192
      %v195 = vmul.f32 %v175, %v192
      %v196 = vmul.f32 %v176, %v192
      %v197 = vmul.f32 %v177, %v192
      %v198 = vmul.f32 %v178, %v192
      %v199 = vmul.f32 %v179, %v192
      %v200 = vmul.f32 %v180, %v192
      %v201 = vmul.f32 %v181, %v192
      %v202 = vmul.f32 %v182, %v192
      %v203 = vmul.f32 %v183, %v192
      %v204 = vmul.f32 %v184, %v192
      %v205 = vmul.f32 %v185, %v192
      %v206 = vmul.f32 %v186, %v192
      %v207 = vmul.f32 %v187, %v192
      %v208 = vmul.f32 %v188, %v192
      %v209 = vmul.f32 %v189, %v192
      %v210 = vld [vmem:[%s2] sm:$0x1]
      %v212 = vperm.slane %v210, 0
      %v214 = vadd.f32 %v194, %v212
      %v215 = vadd.f32 %v195, %v212
      %v216 = vadd.f32 %v196, %v212
      %v217 = vadd.f32 %v197, %v212
      %v218 = vadd.f32 %v198, %v212
      %v219 = vadd.f32 %v199, %v212
      %v220 = vadd.f32 %v200, %v212
      %v221 = vadd.f32 %v201, %v212
      %v222 = vadd.f32 %v202, %v212
      %v223 = vadd.f32 %v203, %v212
      %v224 = vadd.f32 %v204, %v212
      %v225 = vadd.f32 %v205, %v212
      %v226 = vadd.f32 %v206, %v212
      %v227 = vadd.f32 %v207, %v212
      %v228 = vadd.f32 %v208, %v212
      %v229 = vadd.f32 %v209, %v212
      %v230 = vmax.f32 %v214, 0.0
      %v231 = vmax.f32 %v215, 0.0
      %v232 = vmax.f32 %v216, 0.0
      %v233 = vmax.f32 %v217, 0.0
      %v234 = vmax.f32 %v218, 0.0
      %v235 = vmax.f32 %v219, 0.0
      %v236 = vmax.f32 %v220, 0.0
      %v237 = vmax.f32 %v221, 0.0
      %v238 = vmax.f32 %v222, 0.0
      %v239 = vmax.f32 %v223, 0.0
      %v240 = vmax.f32 %v224, 0.0
      %v241 = vmax.f32 %v225, 0.0
      %v242 = vmax.f32 %v226, 0.0
      %v243 = vmax.f32 %v227, 0.0
      %v244 = vmax.f32 %v228, 0.0
      %v245 = vmax.f32 %v229, 0.0
      %246 = vst [vmem:[%s172] sm:$0xff] %v230
      %247 = vst [vmem:[%s172 + $0x8] sm:$0xff] %v231
      %248 = vst [vmem:[%s172 + $0x10] sm:$0xff] %v232
      %249 = vst [vmem:[%s172 + $0x18] sm:$0xff] %v233
      %250 = vst [vmem:[%s172 + $0x20] sm:$0xff] %v234
      %251 = vst [vmem:[%s172 + $0x28] sm:$0xff] %v235
      %252 = vst [vmem:[%s172 + $0x30] sm:$0xff] %v236
      %253 = vst [vmem:[%s172 + $0x38] sm:$0xff] %v237
      %254 = vst [vmem:[%s172 + $0x40] sm:$0xff] %v238
      %255 = vst [vmem:[%s172 + $0x48] sm:$0xff] %v239
      %256 = vst [vmem:[%s172 + $0x50] sm:$0xff] %v240
      %257 = vst [vmem:[%s172 + $0x58] sm:$0xff] %v241
      %258 = vst [vmem:[%s172 + $0x60] sm:$0xff] %v242
      %259 = vst [vmem:[%s172 + $0x68] sm:$0xff] %v243
      %260 = vst [vmem:[%s172 + $0x70] sm:$0xff] %v244
      %261 = vst [vmem:[%s172 + $0x78] sm:$0xff] %v245
      %s262 = smul.u32 16, %s14
      %p263 = scmp.lt.s32.totalorder %s262, 63
      %s264 = scalar_select %p263, %s262, 63
      %s265 = smul.addr %s264, 8
      %s266 = scalar_lea.vmem %s3, %s265
      // Predicated region
      $region33: #{conv_block_forward.5} parent=31 // pred_check
        %p267 = pneg %p100
      $region34: #{conv_block_forward.5} parent=31 // pred_check_branch
        %269 = sbr.rel (%p267) target = $region36
      $region35: #{conv_block_forward.5} parent=31 // pred_region
        %s270 = smul.u32 16, %s14
      $region36: #{conv_block_forward.5} parent=31 // pred_fallthru
        _
    $region32: #{conv_block_forward.5} parent=5 // pred_fallthru
      _
    %p271 = scmp.le.s32.totalorder 2, %s9
    // Predicated region
    $region37: #{conv_block_forward.5} parent=5 // pred_check
      %p272 = pneg %p271
    $region38: #{conv_block_forward.5} parent=5 // pred_check_branch
      %274 = sbr.rel (%p272) target = $region40
    $region39: #{conv_block_forward.5} parent=5 // pred_region
      %s275 = ssub.s32 %s9, 2
      // Predicated region
      $region41: #{conv_block_forward.5} parent=39 // pred_check
        %p276 = pneg %p106
      $region42: #{conv_block_forward.5} parent=39 // pred_check_branch
        %278 = sbr.rel (%p276) target = $region44
      $region43: #{conv_block_forward.5} parent=39 // pred_region
        %s279 = smul.u32 16, %s15
        %p280 = scmp.lt.s32.totalorder %s279, 63
        %s281 = scalar_select %p280, %s279, 63
        %s282 = smul.addr %s281, 8
        %s283 = scalar_lea.vmem %s3, %s282
      $region44: #{conv_block_forward.5} parent=39 // pred_fallthru
        _
    $region40: #{conv_block_forward.5} parent=5 // pred_fallthru
      _
  $region6: #{conv_block_forward.5} parent=0 // loop_footer
    %s13 = sadd.s32 1, %s9
  $region7: #{conv_block_forward.5} parent=0 // loop_footer_branch
    %8 = sbr.rel target = $region3
  $region8: #{conv_block_forward.5} parent=0 // loop_exit
    _

// kernel: conv_block_forward.4
$region0: #{conv_block_forward.4}
  #allocation0 [shape = 'u32[]', space=smem, size = 0x4, offset = 0x4, fixed_abs, tag = 'smem constant byte address 0x4 - core index']
  #allocation1 [shape = 'u32[72,128]{1,0:T(1,128)}', space=vmem, size = 0x9000, scoped, tag = 'internal scratch']
  %s0 = inlined_call_operand.vmem [shape: f32[32,3,18,4], index: 0, kind: input, shape index: {}]
  %s1 = inlined_call_operand.vmem [shape: f32[3,3,4,128], index: 1, kind: input, shape index: {}]
  %s2 = inlined_call_operand.vmem [shape: f32[512,128], index: 2, kind: output, shape index: {0}]
  %s3 = inlined_call_operand.vmem [shape: f32[4,2,128], index: 3, kind: output, shape index: {1}]
  %4 = xla_tuple %s2, %s3
  %s5 = sld [smem:[#allocation0]]
  $region49: #{conv_block_forward.4} parent=0
    _
  %s7 = ssub.s32 1, %s5
  %s8 = scalar_select 0, %s7, %s5
  loop: start=0, step=1, limit=6
  $region2: #{conv_block_forward.4} parent=0 // loop_pre_header
    _
  $region3: #{conv_block_forward.4} parent=0 // loop_header
    %s10 = sphi 0, %s14
    %p11 = scmp.ge.s32.totalorder %s10, 6
    %s20 = sphi 0, %s22
    %s23 = sphi 0, %s20
    %s24 = sphi 0, %s23
    %s40 = sphi 0, %s24
    %s44 = sphi 0, %s44
    %s46 = sphi 0, %s44
    %s47 = sphi 0, %s46
    %s61 = sphi 0, %s47
    %s67 = sphi 0, %s69
    %s70 = sphi 0, %s67
    %s71 = sphi 0, %s70
    %s87 = sphi 0, %s71
    %s93 = sphi 0, %s95
    %s96 = sphi 0, %s93
    %s97 = sphi 0, %s96
    %s113 = sphi 0, %s97
  $region4: #{conv_block_forward.4} parent=0 // loop_header_branch
    %13 = sbr.rel (%p11) target = $region8
  $region5: #{conv_block_forward.4} parent=0 // loop_body
    %s15 = ssub.s32 %s10, 1
    %s16 = ssub.s32 %s10, 2
    %s17 = sadd.s32 %s10, 1
    %s18 = ssub.s32 %s10, %s17
    %p19 = scmp.eq.s32.totalorder %s18, 0
    %s21 = sadd.s32 %s20, 1
    %s22 = scalar_select %p19, %s20, %s21
    %p25 = pneg %p19
    %p26 = scmp.eq.s32.totalorder %s10, 3
    %p27 = por %p25, %p26
    %p28 = scmp.ne.s32.totalorder %s20, %s23
    %p29 = scmp.eq.s32.totalorder %s10, 0
    %p30 = por %p28, %p29
    %p31 = scmp.ne.s32.totalorder %s20, %s23
    %p32 = scmp.eq.s32.totalorder %s15, 3
    %p33 = por %p31, %p32
    %p34 = scmp.ne.s32.totalorder %s23, %s24
    %p35 = scmp.eq.s32.totalorder %s15, 0
    %p36 = por %p34, %p35
    %p37 = scmp.ne.s32.totalorder %s23, %s24
    %p38 = scmp.eq.s32.totalorder %s16, 3
    %p39 = por %p37, %p38
    %p41 = scmp.ne.s32.totalorder %s24, %s40
    %p42 = scmp.eq.s32.totalorder %s16, 0
    %p43 = por %p41, %p42
    %s45 = sadd.s32 %s44, 1
    %p48 = scmp.eq.s32.totalorder %s10, 3
    %p49 = scmp.ne.s32.totalorder %s44, %s46
    %p50 = scmp.eq.s32.totalorder %s10, 0
    %p51 = por %p49, %p50
    %p52 = scmp.ne.s32.totalorder %s44, %s46
    %p53 = scmp.eq.s32.totalorder %s15, 3
    %p54 = por %p52, %p53
    %p55 = scmp.ne.s32.totalorder %s46, %s47
    %p56 = scmp.eq.s32.totalorder %s15, 0
    %p57 = por %p55, %p56
    %p58 = scmp.ne.s32.totalorder %s46, %s47
    %p59 = scmp.eq.s32.totalorder %s16, 3
    %p60 = por %p58, %p59
    %p62 = scmp.ne.s32.totalorder %s47, %s61
    %p63 = scmp.eq.s32.totalorder %s16, 0
    %p64 = por %p62, %p63
    %s65 = ssub.s32 %s10, %s17
    %p66 = scmp.eq.s32.totalorder %s65, 0
    %s68 = sadd.s32 %s67, 1
    %s69 = scalar_select %p66, %s67, %s68
    %p72 = pneg %p66
    %p73 = scmp.eq.s32.totalorder %s10, 3
    %p74 = por %p72, %p73
    %p75 = scmp.ne.s32.totalorder %s67, %s70
    %p76 = scmp.eq.s32.totalorder %s10, 0
    %p77 = por %p75, %p76
    %p78 = scmp.ne.s32.totalorder %s67, %s70
    %p79 = scmp.eq.s32.totalorder %s15, 3
    %p80 = por %p78, %p79
    %p81 = scmp.ne.s32.totalorder %s70, %s71
    %p82 = scmp.eq.s32.totalorder %s15, 0
    %p83 = por %p81, %p82
    %p84 = scmp.ne.s32.totalorder %s70, %s71
    %p85 = scmp.eq.s32.totalorder %s16, 3
    %p86 = por %p84, %p85
    %p88 = scmp.ne.s32.totalorder %s71, %s87
    %p89 = scmp.eq.s32.totalorder %s16, 0
    %p90 = por %p88, %p89
    %s91 = ssub.s32 %s10, %s17
    %p92 = scmp.eq.s32.totalorder %s91, 0
    %s94 = sadd.s32 %s93, 1
    %s95 = scalar_select %p92, %s93, %s94
    %p98 = pneg %p92
    %p99 = scmp.eq.s32.totalorder %s10, 3
    %p100 = por %p98, %p99
    %p101 = scmp.ne.s32.totalorder %s93, %s96
    %p102 = scmp.eq.s32.totalorder %s10, 0
    %p103 = por %p101, %p102
    %p104 = scmp.ne.s32.totalorder %s93, %s96
    %p105 = scmp.eq.s32.totalorder %s15, 3
    %p106 = por %p104, %p105
    %p107 = scmp.ne.s32.totalorder %s96, %s97
    %p108 = scmp.eq.s32.totalorder %s15, 0
    %p109 = por %p107, %p108
    %p110 = scmp.ne.s32.totalorder %s96, %s97
    %p111 = scmp.eq.s32.totalorder %s16, 3
    %p112 = por %p110, %p111
    %p114 = scmp.ne.s32.totalorder %s97, %s113
    %p115 = scmp.eq.s32.totalorder %s16, 0
    %p116 = por %p114, %p115
    %p117 = scmp.le.s32.totalorder 1, %s10
    %p118 = scmp.lt.s32.totalorder %s10, 5
    %p119 = pnand %p117, %p118
    %p120 = pneg %p119
    // Predicated region
    $region9: #{conv_block_forward.4} parent=5 // pred_check
      _
    $region10: #{conv_block_forward.4} parent=5 // pred_check_branch
      %122 = sbr.rel (%p119) target = $region12
    $region11: #{conv_block_forward.4} parent=5 // pred_region
      %s123 = ssub.s32 %s10, 1
      // Predicated region
      $region13: #{conv_block_forward.4} parent=11 // pred_check
        %p124 = pneg %p57
      $region14: #{conv_block_forward.4} parent=11 // pred_check_branch
        %126 = sbr.rel (%p124) target = $region16
      $region15: #{conv_block_forward.4} parent=11 // pred_region
        _
      $region16: #{conv_block_forward.4} parent=11 // pred_fallthru
        _
    $region12: #{conv_block_forward.4} parent=5 // pred_fallthru
      _
    %p127 = scmp.lt.s32.totalorder %s10, 4
    // Predicated region
    $region17: #{conv_block_forward.4} parent=5 // pred_check
      %p128 = pneg %p127
    $region18: #{conv_block_forward.4} parent=5 // pred_check_branch
      %130 = sbr.rel (%p128) target = $region20
    $region19: #{conv_block_forward.4} parent=5 // pred_region
      // Predicated region
      $region21: #{conv_block_forward.4} parent=19 // pred_check
        %p131 = pneg %p30
      $region22: #{conv_block_forward.4} parent=19 // pred_check_branch
        %133 = sbr.rel (%p131) target = $region24
      $region23: #{conv_block_forward.4} parent=19 // pred_region
        %s134 = smul.u32 8, %s10
        %p135 = scmp.lt.s32.totalorder %s134, 31
        %s136 = scalar_select %p135, %s134, 31
        %s137 = smul.addr %s136, 9
        %s138 = smul.addr %s137, 8
        %s139 = scalar_lea.vmem %s0, %s138
        %s140 = smul.u32 8, %s10
      $region24: #{conv_block_forward.4} parent=19 // pred_fallthru
        _
    $region20: #{conv_block_forward.4} parent=5 // pred_fallthru
      _
    %p141 = scmp.le.s32.totalorder 1, %s10
    %p142 = scmp.lt.s32.totalorder %s10, 5
    %p143 = pnand %p141, %p142
    %p144 = pneg %p143
    // Predicated region
    $region25: #{conv_block_forward.4} parent=5 // pred_check
      _
    $region26: #{conv_block_forward.4} parent=5 // pred_check_branch
      %146 = sbr.rel (%p143) target = $region28
    $region27: #{conv_block_forward.4} parent=5 // pred_region
      %s147 = ssub.s32 %s10, 1
      %s148 = smul.u32 8, %s15
      %p149 = scmp.lt.s32.totalorder %s148, 31
      %s150 = scalar_select %p149, %s148, 31
      %s151 = smul.addr %s150, 9
      %s152 = smul.addr %s151, 8
      %s153 = scalar_lea.vmem %s0, %s152
      %p154 = pneg %p36
      %p155 = pneg %p33
      %p156 = pneg %p57
      %p157 = pneg %p54
      %p158 = pneg %p83
      %p159 = pneg %p80
      %s160 = smul.u32 16, %s15
      %p161 = scmp.lt.s32.totalorder %s160, 63
      %s162 = scalar_select %p161, %s160, 63
      %s163 = smul.addr %s162, 8
      %s164 = scalar_lea.vmem %s2, %s163
      %p165 = pneg %p109
      %p166 = pneg %p106
      %p167 = scmp.lt.s32.totalorder %s15, 3
      %s168 = scalar_select %p167, %s15, 3
      %s169 = smul.addr %s168, 2
      %s170 = scalar_lea.vmem %s3, %s169
      %s171 = smul.u32 8, %s15
      %p172 = scmp.lt.s32.totalorder %s171, 31
      %s173 = scalar_select %p172, %s171, 31
      %s174 = smul.addr %s173, 9
      %s175 = smul.addr %s174, 8
      %s176 = scalar_lea.vmem %s0, %s175
      %s177 = smul.u32 8, %s15
      %s178 = smul.u32 16, %s15
      %p179 = scmp.lt.s32.totalorder %s178, 63
      %s180 = scalar_select %p179, %s178, 63
      %s181 = smul.addr %s180, 8
      %s182 = scalar_lea.vmem %s2, %s181
      %s183 = smul.u32 16, %s15
      %p184 = scmp.lt.s32.totalorder %s15, 3
      %s185 = scalar_select %p184, %s15, 3
      %s186 = smul.addr %s185, 2
      %s187 = scalar_lea.vmem %s3, %s186
      %v188 = vld [vmem:[%s176] sm:$0xff]
      %v189 = vld [vmem:[%s176 + $0x8] sm:$0xff]
      %v190 = vld [vmem:[%s176 + $0x48] sm:$0xff]
      %v191 = vld [vmem:[%s176 + $0x50] sm:$0xff]
      %v192 = vld [vmem:[%s176 + $0x90] sm:$0xff]
      %v193 = vld [vmem:[%s176 + $0x98] sm:$0xff]
      %v194 = vld [vmem:[%s176 + $0xd8] sm:$0xff]
      %v195 = vld [vmem:[%s176 + $0xe0] sm:$0xff]
      %v196 = vld [vmem:[%s176 + $0x120] sm:$0xff]
      %v197 = vld [vmem:[%s176 + $0x128] sm:$0xff]
      %v198 = vld [vmem:[%s176 + $0x168] sm:$0xff]
      %v199 = vld [vmem:[%s176 + $0x170] sm:$0xff]
      %v200 = vld [vmem:[%s176 + $0x1b0] sm:$0xff]
      %v201 = vld [vmem:[%s176 + $0x1b8] sm:$0xff]
      %v202 = vld [vmem:[%s176 + $0x1f8] sm:$0xff]
      %v203 = vld [vmem:[%s176 + $0x200] sm:$0xff]
      %v204 = vld [vmem:[%s1] sm:$0xf]
      %v205 = vld [vmem:[%s176 + $0x1] sm:$0xff]
      %v206 = vld [vmem:[%s176 + $0x9] sm:$0xff]
      %v207 = vld [vmem:[%s176 + $0x49] sm:$0xff]
      %v208 = vld [vmem:[%s176 + $0x51] sm:$0xff]
      %v209 = vld [vmem:[%s176 + $0x91] sm:$0xff]
      %v210 = vld [vmem:[%s176 + $0x99] sm:$0xff]
      %v211 = vld [vmem:[%s176 + $0xd9] sm:$0xff]
      %v212 = vld [vmem:[%s176 + $0xe1] sm:$0xff]
      %v213 = vld [vmem:[%s176 + $0x121] sm:$0xff]
      %v214 = vld [vmem:[%s176 + $0x129] sm:$0xff]
      %v215 = vld [vmem:[%s176 + $0x169] sm:$0xff]
      %v216 = vld [vmem:[%s176 + $0x171] sm:$0xff]
      %v217 = vld [vmem:[%s176 + $0x1b1] sm:$0xff]
      %v218 = vld [vmem:[%s176 + $0x1b9] sm:$0xff]
      %v219 = vld [vmem:[%s176 + $0x1f9] sm:$0xff]
      %v220 = vld [vmem:[%s176 + $0x201] sm:$0xff]
      %s221 = scalar_lea.vmem %s1, 4
      %v222 = vld [vmem:[%s221] sm:$0xf]
      %vm223 = vcmask 31744
      %v225 = vsel %vm223, %v205, 0
      %v228 = vsel %vm223, %v206, 0
      %v231 = vsel %vm223, %v207, 0
      %v234 = vsel %vm223, %v208, 0
      %v237 = vsel %vm223, %v209, 0
      %v240 = vsel %vm223, %v210, 0
      %v243 = vsel %vm223, %v211, 0
      %v246 = vsel %vm223, %v212, 0
      %v249 = vsel %vm223, %v213, 0
      %v252 = vsel %vm223, %v214, 0
      %v255 = vsel %vm223, %v215, 0
      %v258 = vsel %vm223, %v216, 0
      %v261 = vsel %vm223, %v217, 0
      %v264 = vsel %vm223, %v218, 0
      %v267 = vsel %vm223, %v219, 0
      %v270 = vsel %vm223, %v220, 0
      %vm272 = vcmask 1043456
      %v274 = vsel %vm272, %v222, 0
      %276 = vmatpush.msra.mxu0 0.0
      %277 = vmatpush.msra.mxu0 0.0
      %278 = vmatpush.msra.mxu0 0.0
      %279 = vmatpush.msra.mxu0 0.0
      %280 = vmatpush.msra.mxu0 0.0
      %281 = vmatpush.msra.mxu0 0.0
      %282 = vmatpush.msra.mxu0 0.0
      %283 = vmatpush.msra.mxu0 0.0
      %284 = vmatpush.msra.mxu0 0.0
      %285 = vmatpush.msra.mxu0 0.0
      %286 = vmatpush.msra.mxu0 0.0
      %287 = vmatpush.msra.mxu0 0.0
      %288 = vmatpush.msra.mxu0 0.0
      %289 = vmatpush.msra.mxu0 0.0
      %290 = vmatpush.msra.mxu0 0.0
      %291 = vmatpush.msra.mxu0 %v274
      %292 = vmatmul.f32.gmra.mxu0 %v225
      %v293 = vpop.f32.mrf.mxu0
      %v294 = vadd.f32 0.0, %v293
      %295 = vmatmul.f32.gmra.mxu0 %v228
      %v296 = vpop.f32.mrf.mxu0
      %v297 = vadd.f32 0.0, %v296
      %298 = vmatmul.f32.gmra.mxu0 %v231
      %v299 = vpop.f32.mrf.mxu0
      %v300 = vadd.f32 0.0, %v299
      %301 = vmatmul.f32.gmra.mxu0 %v234
      %v302 = vpop.f32.mrf.mxu0
      %v303 = vadd.f32 0.0, %v302
      %304 = vmatmul.f32.gmra.mxu0 %v237
      %v305 = vpop.f32.mrf.mxu0
      %v306 = vadd.f32 0.0, %v305
      %307 = vmatmul.f32.gmra.mxu0 %v240
      %v308 = vpop.f32.mrf.mxu0
      %v309 = vadd.f32 0.0, %v308
      %310 = vmatmul.f32.gmra.mxu0 %v243
      %v311 = vpop.f32.mrf.mxu0
      %v312 = vadd.f32 0.0, %v311
      %313 = vmatmul.f32.gmra.mxu0 %v246
      %v314 = vpop.f32.mrf.mxu0
      %v315 = vadd.f32 0.0, %v314
      %316 = vmatmul.f32.gmra.mxu0 %v249
      %v317 = vpop.f32.mrf.mxu0
      %v318 = vadd.f32 0.0, %v317
      %319 = vmatmul.f32.gmra.mxu0 %v252
      %v320 = vpop.f32.mrf.mxu0
      %v321 = vadd.f32 0.0, %v320
      %322 = vmatmul.f32.gmra.mxu0 %v255
      %v323 = vpop.f32.mrf.mxu0
      %v324 = vadd.f32 0.0, %v323
      %325 = vmatmul.f32.gmra.mxu0 %v258
      %v326 = vpop.f32.mrf.mxu0
      %v327 = vadd.f32 0.0, %v326
      %328 = vmatmul.f32.gmra.mxu0 %v261
      %v329 = vpop.f32.mrf.mxu0
      %v330 = vadd.f32 0.0, %v329
      %331 = vmatmul.f32.gmra.mxu0 %v264
      %v332 = vpop.f32.mrf.mxu0
      %v333 = vadd.f32 0.0, %v332
      %334 = vmatmul.f32.gmra.mxu0 %v267
      %v335 = vpop.f32.mrf.mxu0
      %v336 = vadd.f32 0.0, %v335
      %337 = vmatmul.f32.gmra.mxu0 %v270
      %v338 = vpop.f32.mrf.mxu0
      %v339 = vadd.f32 0.0, %v338
      %340 = vdwg.mxu0
      %v342 = vsel %vm223, %v188, 0
      %v345 = vsel %vm223, %v189, 0
      %v348 = vsel %vm223, %v190, 0
      %v351 = vsel %vm223, %v191, 0
      %v354 = vsel %vm223, %v192, 0
      %v357 = vsel %vm223, %v193, 0
      %v360 = vsel %vm223, %v194, 0
      %v363 = vsel %vm223, %v195, 0
      %v366 = vsel %vm223, %v196, 0
      %v369 = vsel %vm223, %v197, 0
      %v372 = vsel %vm223, %v198, 0
      %v375 = vsel %vm223, %v199, 0
      %v378 = vsel %vm223, %v200, 0
      %v381 = vsel %vm223, %v201, 0
      %v384 = vsel %vm223, %v202, 0
      %v387 = vsel %vm223, %v203, 0
      %v390 = vsel %vm272, %v204, 0
      %392 = vmatpush.msra.mxu0 0.0
      %393 = vmatpush.msra.mxu0 0.0
      %394 = vmatpush.msra.mxu0 0.0
      %395 = vmatpush.msra.mxu0 0.0
      %396 = vmatpush.msra.mxu0 0.0
      %397 = vmatpush.msra.mxu0 0.0
      %398 = vmatpush.msra.mxu0 0.0
      %399 = vmatpush.msra.mxu0 0.0
      %400 = vmatpush.msra.mxu0 0.0
      %401 = vmatpush.msra.mxu0 0.0
      %402 = vmatpush.msra.mxu0 0.0
      %403 = vmatpush.msra.mxu0 0.0
      %404 = vmatpush.msra.mxu0 0.0
      %405 = vmatpush.msra.mxu0 0.0
      %406 = vmatpush.msra.mxu0 0.0
      %407 = vmatpush.msra.mxu0 %v390
      %408 = vmatmul.f32.gmra.mxu0 %v342
      %v409 = vpop.f32.mrf.mxu0
      %v410 = vadd.f32 %v294, %v409
      %411 = vmatmul.f32.gmra.mxu0 %v345
      %v412 = vpop.f32.mrf.mxu0
      %v413 = vadd.f32 %v297, %v412
      %414 = vmatmul.f32.gmra.mxu0 %v348
      %v415 = vpop.f32.mrf.mxu0
      %v416 = vadd.f32 %v300, %v415
      %417 = vmatmul.f32.gmra.mxu0 %v351
      %v418 = vpop.f32.mrf.mxu0
      %v419 = vadd.f32 %v303, %v418
      %420 = vmatmul.f32.gmra.mxu0 %v354
      %v421 = vpop.f32.mrf.mxu0
      %v422 = vadd.f32 %v306, %v421
      %423 = vmatmul.f32.gmra.mxu0 %v357
      %v424 = vpop.f32.mrf.mxu0
      %v425 = vadd.f32 %v309, %v424
      %426 = vmatmul.f32.gmra.mxu0 %v360
      %v427 = vpop.f32.mrf.mxu0
      %v428 = vadd.f32 %v312, %v427
      %429 = vmatmul.f32.gmra.mxu0 %v363
      %v430 = vpop.f32.mrf.mxu0
      %v431 = vadd.f32 %v315, %v430
      %432 = vmatmul.f32.gmra.mxu0 %v366
      %v433 = vpop.f32.mrf.mxu0
      %v434 = vadd.f32 %v318, %v433
      %435 = vmatmul.f32.gmra.mxu0 %v369
      %v436 = vpop.f32.mrf.mxu0
      %v437 = vadd.f32 %v321, %v436
      %438 = vmatmul.f32.gmra.mxu0 %v372
      %v439 = vpop.f32.mrf.mxu0
      %v440 = vadd.f32 %v324, %v439
      %441 = vmatmul.f32.gmra.mxu0 %v375
      %v442 = vpop.f32.mrf.mxu0
      %v443 = vadd.f32 %v327, %v442
      %444 = vmatmul.f32.gmra.mxu0 %v378
      %v445 = vpop.f32.mrf.mxu0
      %v446 = vadd.f32 %v330, %v445
      %447 = vmatmul.f32.gmra.mxu0 %v381
      %v448 = vpop.f32.mrf.mxu0
      %v449 = vadd.f32 %v333, %v448
      %450 = vmatmul.f32.gmra.mxu0 %v384
      %v451 = vpop.f32.mrf.mxu0
      %v452 = vadd.f32 %v336, %v451
      %453 = vmatmul.f32.gmra.mxu0 %v387
      %v454 = vpop.f32.mrf.mxu0
      %v455 = vadd.f32 %v339, %v454
      %456 = vdwg.mxu0
      %v457 = vld [vmem:[%s176 + $0x2] sm:$0xff]
      %v458 = vld [vmem:[%s176 + $0xa] sm:$0xff]
      %v459 = vld [vmem:[%s176 + $0x4a] sm:$0xff]
      %v460 = vld [vmem:[%s176 + $0x52] sm:$0xff]
      %v461 = vld [vmem:[%s176 + $0x92] sm:$0xff]
      %v462 = vld [vmem:[%s176 + $0x9a] sm:$0xff]
      %v463 = vld [vmem:[%s176 + $0xda] sm:$0xff]
      %v464 = vld [vmem:[%s176 + $0xe2] sm:$0xff]
      %v465 = vld [vmem:[%s176 + $0x122] sm:$0xff]
      %v466 = vld [vmem:[%s176 + $0x12a] sm:$0xff]
      %v467 = vld [vmem:[%s176 + $0x16a] sm:$0xff]
      %v468 = vld [vmem:[%s176 + $0x172] sm:$0xff]
      %v469 = vld [vmem:[%s176 + $0x1b2] sm:$0xff]
      %v470 = vld [vmem:[%s176 + $0x1ba] sm:$0xff]
      %v471 = vld [vmem:[%s176 + $0x1fa] sm:$0xff]
      %v472 = vld [vmem:[%s176 + $0x202] sm:$0xff]
      %s473 = scalar_lea.vmem %s1, 8
      %v474 = vld [vmem:[%s473] sm:$0xf]
      %v476 = vsel %vm223, %v457, 0
      %v479 = vsel %vm223, %v458, 0
      %v482 = vsel %vm223, %v459, 0
      %v485 = vsel %vm223, %v460, 0
      %v488 = vsel %vm223, %v461, 0
      %v491 = vsel %vm223, %v462, 0
      %v494 = vsel %vm223, %v463, 0
      %v497 = vsel %vm223, %v464, 0
      %v500 = vsel %vm223, %v465, 0
      %v503 = vsel %vm223, %v466, 0
      %v506 = vsel %vm223, %v467, 0
      %v509 = vsel %vm223, %v468, 0
      %v512 = vsel %vm223, %v469, 0
      %v515 = vsel %vm223, %v470, 0
      %v518 = vsel %vm223, %v471, 0
      %v521 = vsel %vm223, %v472, 0
      %v524 = vsel %vm272, %v474, 0
      %526 = vmatpush.msra.mxu0 0.0
      %527 = vmatpush.msra.mxu0 0.0
      %528 = vmatpush.msra.mxu0 0.0
      %529 = vmatpush.msra.mxu0 0.0
      %530 = vmatpush.msra.mxu0 0.0
      %531 = vmatpush.msra.mxu0 0.0
      %532 = vmatpush.msra.mxu0 0.0
      %533 = vmatpush.msra.mxu0 0.0
      %534 = vmatpush.msra.mxu0 0.0
      %535 = vmatpush.msra.mxu0 0.0
      %536 = vmatpush.msra.mxu0 0.0
      %537 = vmatpush.msra.mxu0 0.0
      %538 = vmatpush.msra.mxu0 0.0
      %539 = vmatpush.msra.mxu0 0.0
      %540 = vmatpush.msra.mxu0 0.0
      %541 = vmatpush.msra.mxu0 %v524
      %542 = vmatmul.f32.gmra.mxu0 %v476
      %v543 = vpop.f32.mrf.mxu0
      %v544 = vadd.f32 0.0, %v543
      %545 = vmatmul.f32.gmra.mxu0 %v479
      %v546 = vpop.f32.mrf.mxu0
      %v547 = vadd.f32 0.0, %v546
      %548 = vmatmul.f32.gmra.mxu0 %v482
      %v549 = vpop.f32.mrf.mxu0
      %v550 = vadd.f32 0.0, %v549
      %551 = vmatmul.f32.gmra.mxu0 %v485
      %v552 = vpop.f32.mrf.mxu0
      %v553 = vadd.f32 0.0, %v552
      %554 = vmatmul.f32.gmra.mxu0 %v488
      %v555 = vpop.f32.mrf.mxu0
      %v556 = vadd.f32 0.0, %v555
      %557 = vmatmul.f32.gmra.mxu0 %v491
      %v558 = vpop.f32.mrf.mxu0
      %v559 = vadd.f32 0.0, %v558
      %560 = vmatmul.f32.gmra.mxu0 %v494
      %v561 = vpop.f32.mrf.mxu0
      %v562 = vadd.f32 0.0, %v561
      %563 = vmatmul.f32.gmra.mxu0 %v497
      %v564 = vpop.f32.mrf.mxu0
      %v565 = vadd.f32 0.0, %v564
      %566 = vmatmul.f32.gmra.mxu0 %v500
      %v567 = vpop.f32.mrf.mxu0
      %v568 = vadd.f32 0.0, %v567
      %569 = vmatmul.f32.gmra.mxu0 %v503
      %v570 = vpop.f32.mrf.mxu0
      %v571 = vadd.f32 0.0, %v570
      %572 = vmatmul.f32.gmra.mxu0 %v506
      %v573 = vpop.f32.mrf.mxu0
      %v574 = vadd.f32 0.0, %v573
      %575 = vmatmul.f32.gmra.mxu0 %v509
      %v576 = vpop.f32.mrf.mxu0
      %v577 = vadd.f32 0.0, %v576
      %578 = vmatmul.f32.gmra.mxu0 %v512
      %v579 = vpop.f32.mrf.mxu0
      %v580 = vadd.f32 0.0, %v579
      %581 = vmatmul.f32.gmra.mxu0 %v515
      %v582 = vpop.f32.mrf.mxu0
      %v583 = vadd.f32 0.0, %v582
      %584 = vmatmul.f32.gmra.mxu0 %v518
      %v585 = vpop.f32.mrf.mxu0
      %v586 = vadd.f32 0.0, %v585
      %587 = vmatmul.f32.gmra.mxu0 %v521
      %v588 = vpop.f32.mrf.mxu0
      %v589 = vadd.f32 0.0, %v588
      %590 = vdwg.mxu0
      %v591 = vadd.f32 %v410, %v544
      %v592 = vadd.f32 %v413, %v547
      %v593 = vadd.f32 %v416, %v550
      %v594 = vadd.f32 %v419, %v553
      %v595 = vadd.f32 %v422, %v556
      %v596 = vadd.f32 %v425, %v559
      %v597 = vadd.f32 %v428, %v562
      %v598 = vadd.f32 %v431, %v565
      %v599 = vadd.f32 %v434, %v568
      %v600 = vadd.f32 %v437, %v571
      %v601 = vadd.f32 %v440, %v574
      %v602 = vadd.f32 %v443, %v577
      %v603 = vadd.f32 %v446, %v580
      %v604 = vadd.f32 %v449, %v583
      %v605 = vadd.f32 %v452, %v586
      %v606 = vadd.f32 %v455, %v589
      %s607 = scalar_lea.vmem %s176, 24
      %v608 = vld [vmem:[%s607] sm:$0xff]
      %v609 = vld [vmem:[%s607 + $0x8] sm:$0xff]
      %v610 = vld [vmem:[%s607 + $0x48] sm:$0xff]
      %v611 = vld [vmem:[%s607 + $0x50] sm:$0xff]
      %v612 = vld [vmem:[%s607 + $0x90] sm:$0xff]
      %v613 = vld [vmem:[%s607 + $0x98] sm:$0xff]
      %v614 = vld [vmem:[%s607 + $0xd8] sm:$0xff]
      %v615 = vld [vmem:[%s607 + $0xe0] sm:$0xff]
      %v616 = vld [vmem:[%s607 + $0x120] sm:$0xff]
      %v617 = vld [vmem:[%s607 + $0x128] sm:$0xff]
      %v618 = vld [vmem:[%s607 + $0x168] sm:$0xff]
      %v619 = vld [vmem:[%s607 + $0x170] sm:$0xff]
      %v620 = vld [vmem:[%s607 + $0x1b0] sm:$0xff]
      %v621 = vld [vmem:[%s607 + $0x1b8] sm:$0xff]
      %v622 = vld [vmem:[%s607 + $0x1f8] sm:$0xff]
      %v623 = vld [vmem:[%s607 + $0x200] sm:$0xff]
      %s624 = scalar_lea.vmem %s1, 12
      %v625 = vld [vmem:[%s624] sm:$0xf]
      %v627 = vsel %vm223, %v608, 0
      %v630 = vsel %vm223, %v609, 0
      %v633 = vsel %vm223, %v610, 0
      %v636 = vsel %vm223, %v611, 0
      %v639 = vsel %vm223, %v612, 0
      %v642 = vsel %vm223, %v613, 0
      %v645 = vsel %vm223, %v614, 0
      %v648 = vsel %vm223, %v615, 0
      %v651 = vsel %vm223, %v616, 0
      %v654 = vsel %vm223, %v617, 0
      %v657 = vsel %vm223, %v618, 0
      %v660 = vsel %vm223, %v619, 0
      %v663 = vsel %vm223, %v620, 0
      %v666 = vsel %vm223, %v621, 0
      %v669 = vsel %vm223, %v622, 0
      %v672 = vsel %vm223, %v623, 0
      %v675 = vsel %vm272, %v625, 0
      %677 = vmatpush.msra.mxu0 0.0
      %678 = vmatpush.msra.mxu0 0.0
      %679 = vmatpush.msra.mxu0 0.0
      %680 = vmatpush.msra.mxu0 0.0
      %681 = vmatpush.msra.mxu0 0.0
      %682 = vmatpush.msra.mxu0 0.0
      %683 = vmatpush.msra.mxu0 0.0
      %684 = vmatpush.msra.mxu0 0.0
      %685 = vmatpush.msra.mxu0 0.0
      %686 = vmatpush.msra.mxu0 0.0
      %687 = vmatpush.msra.mxu0 0.0
      %688 = vmatpush.msra.mxu0 0.0
      %689 = vmatpush.msra.mxu0 0.0
      %690 = vmatpush.msra.mxu0 0.0
      %691 = vmatpush.msra.mxu0 0.0
      %692 = vmatpush.msra.mxu0 %v675
      %693 = vmatmul.f32.gmra.mxu0 %v627
      %v694 = vpop.f32.mrf.mxu0
      %v695 = vadd.f32 0.0, %v694
      %696 = vmatmul.f32.gmra.mxu0 %v630
      %v697 = vpop.f32.mrf.mxu0
      %v698 = vadd.f32 0.0, %v697
      %699 = vmatmul.f32.gmra.mxu0 %v633
      %v700 = vpop.f32.mrf.mxu0
      %v701 = vadd.f32 0.0, %v700
      %702 = vmatmul.f32.gmra.mxu0 %v636
      %v703 = vpop.f32.mrf.mxu0
      %v704 = vadd.f32 0.0, %v703
      %705 = vmatmul.f32.gmra.mxu0 %v639
      %v706 = vpop.f32.mrf.mxu0
      %v707 = vadd.f32 0.0, %v706
      %708 = vmatmul.f32.gmra.mxu0 %v642
      %v709 = vpop.f32.mrf.mxu0
      %v710 = vadd.f32 0.0, %v709
      %711 = vmatmul.f32.gmra.mxu0 %v645
      %v712 = vpop.f32.mrf.mxu0
      %v713 = vadd.f32 0.0, %v712
      %714 = vmatmul.f32.gmra.mxu0 %v648
      %v715 = vpop.f32.mrf.mxu0
      %v716 = vadd.f32 0.0, %v715
      %717 = vmatmul.f32.gmra.mxu0 %v651
      %v718 = vpop.f32.mrf.mxu0
      %v719 = vadd.f32 0.0, %v718
      %720 = vmatmul.f32.gmra.mxu0 %v654
      %v721 = vpop.f32.mrf.mxu0
      %v722 = vadd.f32 0.0, %v721
      %723 = vmatmul.f32.gmra.mxu0 %v657
      %v724 = vpop.f32.mrf.mxu0
      %v725 = vadd.f32 0.0, %v724
      %726 = vmatmul.f32.gmra.mxu0 %v660
      %v727 = vpop.f32.mrf.mxu0
      %v728 = vadd.f32 0.0, %v727
      %729 = vmatmul.f32.gmra.mxu0 %v663
      %v730 = vpop.f32.mrf.mxu0
      %v731 = vadd.f32 0.0, %v730
      %732 = vmatmul.f32.gmra.mxu0 %v666
      %v733 = vpop.f32.mrf.mxu0
      %v734 = vadd.f32 0.0, %v733
      %735 = vmatmul.f32.gmra.mxu0 %v669
      %v736 = vpop.f32.mrf.mxu0
      %v737 = vadd.f32 0.0, %v736
      %738 = vmatmul.f32.gmra.mxu0 %v672
      %v739 = vpop.f32.mrf.mxu0
      %v740 = vadd.f32 0.0, %v739
      %741 = vdwg.mxu0
      %v742 = vadd.f32 %v591, %v695
      %v743 = vadd.f32 %v592, %v698
      %v744 = vadd.f32 %v593, %v701
      %v745 = vadd.f32 %v594, %v704
      %v746 = vadd.f32 %v595, %v707
      %v747 = vadd.f32 %v596, %v710
      %v748 = vadd.f32 %v597, %v713
      %v749 = vadd.f32 %v598, %v716
      %v750 = vadd.f32 %v599, %v719
      %v751 = vadd.f32 %v600, %v722
      %v752 = vadd.f32 %v601, %v725
      %v753 = vadd.f32 %v602, %v728
      %v754 = vadd.f32 %v603, %v731
      %v755 = vadd.f32 %v604, %v734
      %v756 = vadd.f32 %v605, %v737
      %v757 = vadd.f32 %v606, %v740
      %v758 = vld [vmem:[%s607 + $0x1] sm:$0xff]
      %v759 = vld [vmem:[%s607 + $0x9] sm:$0xff]
      %v760 = vld [vmem:[%s607 + $0x49] sm:$0xff]
      %v761 = vld [vmem:[%s607 + $0x51] sm:$0xff]
      %v762 = vld [vmem:[%s607 + $0x91] sm:$0xff]
      %v763 = vld [vmem:[%s607 + $0x99] sm:$0xff]
      %v764 = vld [vmem:[%s607 + $0xd9] sm:$0xff]
      %v765 = vld [vmem:[%s607 + $0xe1] sm:$0xff]
      %v766 = vld [vmem:[%s607 + $0x121] sm:$0xff]
      %v767 = vld [vmem:[%s607 + $0x129] sm:$0xff]
      %v768 = vld [vmem:[%s607 + $0x169] sm:$0xff]
      %v769 = vld [vmem:[%s607 + $0x171] sm:$0xff]
      %v770 = vld [vmem:[%s607 + $0x1b1] sm:$0xff]
      %v771 = vld [vmem:[%s607 + $0x1b9] sm:$0xff]
      %v772 = vld [vmem:[%s607 + $0x1f9] sm:$0xff]
      %v773 = vld [vmem:[%s607 + $0x201] sm:$0xff]
      %s774 = scalar_lea.vmem %s1, 16
      %v775 = vld [vmem:[%s774] sm:$0xf]
      %v777 = vsel %vm223, %v758, 0
      %v780 = vsel %vm223, %v759, 0
      %v783 = vsel %vm223, %v760, 0
      %v786 = vsel %vm223, %v761, 0
      %v789 = vsel %vm223, %v762, 0
      %v792 = vsel %vm223, %v763, 0
      %v795 = vsel %vm223, %v764, 0
      %v798 = vsel %vm223, %v765, 0
      %v801 = vsel %vm223, %v766, 0
      %v804 = vsel %vm223, %v767, 0
      %v807 = vsel %vm223, %v768, 0
      %v810 = vsel %vm223, %v769, 0
      %v813 = vsel %vm223, %v770, 0
      %v816 = vsel %vm223, %v771, 0
      %v819 = vsel %vm223, %v772, 0
      %v822 = vsel %vm223, %v773, 0
      %v825 = vsel %vm272, %v775, 0
      %827 = vmatpush.msra.mxu0 0.0
      %828 = vmatpush.msra.mxu0 0.0
      %829 = vmatpush.msra.mxu0 0.0
      %830 = vmatpush.msra.mxu0 0.0
      %831 = vmatpush.msra.mxu0 0.0
      %832 = vmatpush.msra.mxu0 0.0
      %833 = vmatpush.msra.mxu0 0.0
      %834 = vmatpush.msra.mxu0 0.0
      %835 = vmatpush.msra.mxu0 0.0
      %836 = vmatpush.msra.mxu0 0.0
      %837 = vmatpush.msra.mxu0 0.0
      %838 = vmatpush.msra.mxu0 0.0
      %839 = vmatpush.msra.mxu0 0.0
      %840 = vmatpush.msra.mxu0 0.0
      %841 = vmatpush.msra.mxu0 0.0
      %842 = vmatpush.msra.mxu0 %v825
      %843 = vmatmul.f32.gmra.mxu0 %v777
      %v844 = vpop.f32.mrf.mxu0
      %v845 = vadd.f32 0.0, %v844
      %846 = vmatmul.f32.gmra.mxu0 %v780
      %v847 = vpop.f32.mrf.mxu0
      %v848 = vadd.f32 0.0, %v847
      %849 = vmatmul.f32.gmra.mxu0 %v783
      %v850 = vpop.f32.mrf.mxu0
      %v851 = vadd.f32 0.0, %v850
      %852 = vmatmul.f32.gmra.mxu0 %v786
      %v853 = vpop.f32.mrf.mxu0
      %v854 = vadd.f32 0.0, %v853
      %855 = vmatmul.f32.gmra.mxu0 %v789
      %v856 = vpop.f32.mrf.mxu0
      %v857 = vadd.f32 0.0, %v856
      %858 = vmatmul.f32.gmra.mxu0 %v792
      %v859 = vpop.f32.mrf.mxu0
      %v860 = vadd.f32 0.0, %v859
      %861 = vmatmul.f32.gmra.mxu0 %v795
      %v862 = vpop.f32.mrf.mxu0
      %v863 = vadd.f32 0.0, %v862
      %864 = vmatmul.f32.gmra.mxu0 %v798
      %v865 = vpop.f32.mrf.mxu0
      %v866 = vadd.f32 0.0, %v865
      %867 = vmatmul.f32.gmra.mxu0 %v801
      %v868 = vpop.f32.mrf.mxu0
      %v869 = vadd.f32 0.0, %v868
      %870 = vmatmul.f32.gmra.mxu0 %v804
      %v871 = vpop.f32.mrf.mxu0
      %v872 = vadd.f32 0.0, %v871
      %873 = vmatmul.f32.gmra.mxu0 %v807
      %v874 = vpop.f32.mrf.mxu0
      %v875 = vadd.f32 0.0, %v874
      %876 = vmatmul.f32.gmra.mxu0 %v810
      %v877 = vpop.f32.mrf.mxu0
      %v878 = vadd.f32 0.0, %v877
      %879 = vmatmul.f32.gmra.mxu0 %v813
      %v880 = vpop.f32.mrf.mxu0
      %v881 = vadd.f32 0.0, %v880
      %882 = vmatmul.f32.gmra.mxu0 %v816
      %v883 = vpop.f32.mrf.mxu0
      %v884 = vadd.f32 0.0, %v883
      %885 = vmatmul.f32.gmra.mxu0 %v819
      %v886 = vpop.f32.mrf.mxu0
      %v887 = vadd.f32 0.0, %v886
      %888 = vmatmul.f32.gmra.mxu0 %v822
      %v889 = vpop.f32.mrf.mxu0
      %v890 = vadd.f32 0.0, %v889
      %891 = vdwg.mxu0
      %v892 = vadd.f32 %v742, %v845
      %v893 = vadd.f32 %v743, %v848
      %v894 = vadd.f32 %v744, %v851
      %v895 = vadd.f32 %v745, %v854
      %v896 = vadd.f32 %v746, %v857
      %v897 = vadd.f32 %v747, %v860
      %v898 = vadd.f32 %v748, %v863
      %v899 = vadd.f32 %v749, %v866
      %v900 = vadd.f32 %v750, %v869
      %v901 = vadd.f32 %v751, %v872
      %v902 = vadd.f32 %v752, %v875
      %v903 = vadd.f32 %v753, %v878
      %v904 = vadd.f32 %v754, %v881
      %v905 = vadd.f32 %v755, %v884
      %v906 = vadd.f32 %v756, %v887
      %v907 = vadd.f32 %v757, %v890
      %v908 = vld [vmem:[%s607 + $0x2] sm:$0xff]
      %v909 = vld [vmem:[%s607 + $0xa] sm:$0xff]
      %v910 = vld [vmem:[%s607 + $0x4a] sm:$0xff]
      %v911 = vld [vmem:[%s607 + $0x52] sm:$0xff]
      %v912 = vld [vmem:[%s607 + $0x92] sm:$0xff]
      %v913 = vld [vmem:[%s607 + $0x9a] sm:$0xff]
      %v914 = vld [vmem:[%s607 + $0xda] sm:$0xff]
      %v915 = vld [vmem:[%s607 + $0xe2] sm:$0xff]
      %v916 = vld [vmem:[%s607 + $0x122] sm:$0xff]
      %v917 = vld [vmem:[%s607 + $0x12a] sm:$0xff]
      %v918 = vld [vmem:[%s607 + $0x16a] sm:$0xff]
      %v919 = vld [vmem:[%s607 + $0x172] sm:$0xff]
      %v920 = vld [vmem:[%s607 + $0x1b2] sm:$0xff]
      %v921 = vld [vmem:[%s607 + $0x1ba] sm:$0xff]
      %v922 = vld [vmem:[%s607 + $0x1fa] sm:$0xff]
      %v923 = vld [vmem:[%s607 + $0x202] sm:$0xff]
      %s924 = scalar_lea.vmem %s1, 20
      %v925 = vld [vmem:[%s924] sm:$0xf]
      %v927 = vsel %vm223, %v908, 0
      %v930 = vsel %vm223, %v909, 0
      %v933 = vsel %vm223, %v910, 0
      %v936 = vsel %vm223, %v911, 0
      %v939 = vsel %vm223, %v912, 0
      %v942 = vsel %vm223, %v913, 0
      %v945 = vsel %vm223, %v914, 0
      %v948 = vsel %vm223, %v915, 0
      %v951 = vsel %vm223, %v916, 0
      %v954 = vsel %vm223, %v917, 0
      %v957 = vsel %vm223, %v918, 0
      %v960 = vsel %vm223, %v919, 0
      %v963 = vsel %vm223, %v920, 0
      %v966 = vsel %vm223, %v921, 0
      %v969 = vsel %vm223, %v922, 0
      %v972 = vsel %vm223, %v923, 0
      %v975 = vsel %vm272, %v925, 0
      %977 = vmatpush.msra.mxu0 0.0
      %978 = vmatpush.msra.mxu0 0.0
      %979 = vmatpush.msra.mxu0 0.0
      %980 = vmatpush.msra.mxu0 0.0
      %981 = vmatpush.msra.mxu0 0.0
      %982 = vmatpush.msra.mxu0 0.0
      %983 = vmatpush.msra.mxu0 0.0
      %984 = vmatpush.msra.mxu0 0.0
      %985 = vmatpush.msra.mxu0 0.0
      %986 = vmatpush.msra.mxu0 0.0
      %987 = vmatpush.msra.mxu0 0.0
      %988 = vmatpush.msra.mxu0 0.0
      %989 = vmatpush.msra.mxu0 0.0
      %990 = vmatpush.msra.mxu0 0.0
      %991 = vmatpush.msra.mxu0 0.0
      %992 = vmatpush.msra.mxu0 %v975
      %993 = vmatmul.f32.gmra.mxu0 %v927
      %v994 = vpop.f32.mrf.mxu0
      %v995 = vadd.f32 0.0, %v994
      %996 = vmatmul.f32.gmra.mxu0 %v930
      %v997 = vpop.f32.mrf.mxu0
      %v998 = vadd.f32 0.0, %v997
      %999 = vmatmul.f32.gmra.mxu0 %v933
      %v1000 = vpop.f32.mrf.mxu0
      %v1001 = vadd.f32 0.0, %v1000
      %1002 = vmatmul.f32.gmra.mxu0 %v936
      %v1003 = vpop.f32.mrf.mxu0
      %v1004 = vadd.f32 0.0, %v1003
      %1005 = vmatmul.f32.gmra.mxu0 %v939
      %v1006 = vpop.f32.mrf.mxu0
      %v1007 = vadd.f32 0.0, %v1006
      %1008 = vmatmul.f32.gmra.mxu0 %v942
      %v1009 = vpop.f32.mrf.mxu0
      %v1010 = vadd.f32 0.0, %v1009
      %1011 = vmatmul.f32.gmra.mxu0 %v945
      %v1012 = vpop.f32.mrf.mxu0
      %v1013 = vadd.f32 0.0, %v1012
      %1014 = vmatmul.f32.gmra.mxu0 %v948
      %v1015 = vpop.f32.mrf.mxu0
      %v1016 = vadd.f32 0.0, %v1015
      %1017 = vmatmul.f32.gmra.mxu0 %v951
      %v1018 = vpop.f32.mrf.mxu0
      %v1019 = vadd.f32 0.0, %v1018
      %1020 = vmatmul.f32.gmra.mxu0 %v954
      %v1021 = vpop.f32.mrf.mxu0
      %v1022 = vadd.f32 0.0, %v1021
      %1023 = vmatmul.f32.gmra.mxu0 %v957
      %v1024 = vpop.f32.mrf.mxu0
      %v1025 = vadd.f32 0.0, %v1024
      %1026 = vmatmul.f32.gmra.mxu0 %v960
      %v1027 = vpop.f32.mrf.mxu0
      %v1028 = vadd.f32 0.0, %v1027
      %1029 = vmatmul.f32.gmra.mxu0 %v963
      %v1030 = vpop.f32.mrf.mxu0
      %v1031 = vadd.f32 0.0, %v1030
      %1032 = vmatmul.f32.gmra.mxu0 %v966
      %v1033 = vpop.f32.mrf.mxu0
      %v1034 = vadd.f32 0.0, %v1033
      %1035 = vmatmul.f32.gmra.mxu0 %v969
      %v1036 = vpop.f32.mrf.mxu0
      %v1037 = vadd.f32 0.0, %v1036
      %1038 = vmatmul.f32.gmra.mxu0 %v972
      %v1039 = vpop.f32.mrf.mxu0
      %v1040 = vadd.f32 0.0, %v1039
      %1041 = vdwg.mxu0
      %v1042 = vadd.f32 %v892, %v995
      %v1043 = vadd.f32 %v893, %v998
      %v1044 = vadd.f32 %v894, %v1001
      %v1045 = vadd.f32 %v895, %v1004
      %v1046 = vadd.f32 %v896, %v1007
      %v1047 = vadd.f32 %v897, %v1010
      %v1048 = vadd.f32 %v898, %v1013
      %v1049 = vadd.f32 %v899, %v1016
      %v1050 = vadd.f32 %v900, %v1019
      %v1051 = vadd.f32 %v901, %v1022
      %v1052 = vadd.f32 %v902, %v1025
      %v1053 = vadd.f32 %v903, %v1028
      %v1054 = vadd.f32 %v904, %v1031
      %v1055 = vadd.f32 %v905, %v1034
      %v1056 = vadd.f32 %v906, %v1037
      %v1057 = vadd.f32 %v907, %v1040
      %s1058 = scalar_lea.vmem %s176, 48
      %v1059 = vld [vmem:[%s1058] sm:$0xff]
      %v1060 = vld [vmem:[%s1058 + $0x8] sm:$0xff]
      %v1061 = vld [vmem:[%s1058 + $0x48] sm:$0xff]
      %v1062 = vld [vmem:[%s1058 + $0x50] sm:$0xff]
      %v1063 = vld [vmem:[%s1058 + $0x90] sm:$0xff]
      %v1064 = vld [vmem:[%s1058 + $0x98] sm:$0xff]
      %v1065 = vld [vmem:[%s1058 + $0xd8] sm:$0xff]
      %v1066 = vld [vmem:[%s1058 + $0xe0] sm:$0xff]
      %v1067 = vld [vmem:[%s1058 + $0x120] sm:$0xff]
      %v1068 = vld [vmem:[%s1058 + $0x128] sm:$0xff]
      %v1069 = vld [vmem:[%s1058 + $0x168] sm:$0xff]
      %v1070 = vld [vmem:[%s1058 + $0x170] sm:$0xff]
      %v1071 = vld [vmem:[%s1058 + $0x1b0] sm:$0xff]
      %v1072 = vld [vmem:[%s1058 + $0x1b8] sm:$0xff]
      %v1073 = vld [vmem:[%s1058 + $0x1f8] sm:$0xff]
      %v1074 = vld [vmem:[%s1058 + $0x200] sm:$0xff]
      %s1075 = scalar_lea.vmem %s1, 24
      %v1076 = vld [vmem:[%s1075] sm:$0xf]
      %v1078 = vsel %vm223, %v1059, 0
      %v1081 = vsel %vm223, %v1060, 0
      %v1084 = vsel %vm223, %v1061, 0
      %v1087 = vsel %vm223, %v1062, 0
      %v1090 = vsel %vm223, %v1063, 0
      %v1093 = vsel %vm223, %v1064, 0
      %v1096 = vsel %vm223, %v1065, 0
      %v1099 = vsel %vm223, %v1066, 0
      %v1102 = vsel %vm223, %v1067, 0
      %v1105 = vsel %vm223, %v1068, 0
      %v1108 = vsel %vm223, %v1069, 0
      %v1111 = vsel %vm223, %v1070, 0
      %v1114 = vsel %vm223, %v1071, 0
      %v1117 = vsel %vm223, %v1072, 0
      %v1120 = vsel %vm223, %v1073, 0
      %v1123 = vsel %vm223, %v1074, 0
      %v1126 = vsel %vm272, %v1076, 0
      %1128 = vmatpush.msra.mxu0 0.0
      %1129 = vmatpush.msra.mxu0 0.0
      %1130 = vmatpush.msra.mxu0 0.0
      %1131 = vmatpush.msra.mxu0 0.0
      %1132 = vmatpush.msra.mxu0 0.0
      %1133 = vmatpush.msra.mxu0 0.0
      %1134 = vmatpush.msra.mxu0 0.0
      %1135 = vmatpush.msra.mxu0 0.0
      %1136 = vmatpush.msra.mxu0 0.0
      %1137 = vmatpush.msra.mxu0 0.0
      %1138 = vmatpush.msra.mxu0 0.0
      %1139 = vmatpush.msra.mxu0 0.0
      %1140 = vmatpush.msra.mxu0 0.0
      %1141 = vmatpush.msra.mxu0 0.0
      %1142 = vmatpush.msra.mxu0 0.0
      %1143 = vmatpush.msra.mxu0 %v1126
      %1144 = vmatmul.f32.gmra.mxu0 %v1078
      %v1145 = vpop.f32.mrf.mxu0
      %v1146 = vadd.f32 0.0, %v1145
      %1147 = vmatmul.f32.gmra.mxu0 %v1081
      %v1148 = vpop.f32.mrf.mxu0
      %v1149 = vadd.f32 0.0, %v1148
      %1150 = vmatmul.f32.gmra.mxu0 %v1084
      %v1151 = vpop.f32.mrf.mxu0
      %v1152 = vadd.f32 0.0, %v1151
      %1153 = vmatmul.f32.gmra.mxu0 %v1087
      %v1154 = vpop.f32.mrf.mxu0
      %v1155 = vadd.f32 0.0, %v1154
      %1156 = vmatmul.f32.gmra.mxu0 %v1090
      %v1157 = vpop.f32.mrf.mxu0
      %v1158 = vadd.f32 0.0, %v1157
      %1159 = vmatmul.f32.gmra.mxu0 %v1093
      %v1160 = vpop.f32.mrf.mxu0
      %v1161 = vadd.f32 0.0, %v1160
      %1162 = vmatmul.f32.gmra.mxu0 %v1096
      %v1163 = vpop.f32.mrf.mxu0
      %v1164 = vadd.f32 0.0, %v1163
      %1165 = vmatmul.f32.gmra.mxu0 %v1099
      %v1166 = vpop.f32.mrf.mxu0
      %v1167 = vadd.f32 0.0, %v1166
      %1168 = vmatmul.f32.gmra.mxu0 %v1102
      %v1169 = vpop.f32.mrf.mxu0
      %v1170 = vadd.f32 0.0, %v1169
      %1171 = vmatmul.f32.gmra.mxu0 %v1105
      %v1172 = vpop.f32.mrf.mxu0
      %v1173 = vadd.f32 0.0, %v1172
      %1174 = vmatmul.f32.gmra.mxu0 %v1108
      %v1175 = vpop.f32.mrf.mxu0
      %v1176 = vadd.f32 0.0, %v1175
      %1177 = vmatmul.f32.gmra.mxu0 %v1111
      %v1178 = vpop.f32.mrf.mxu0
      %v1179 = vadd.f32 0.0, %v1178
      %1180 = vmatmul.f32.gmra.mxu0 %v1114
      %v1181 = vpop.f32.mrf.mxu0
      %v1182 = vadd.f32 0.0, %v1181
      %1183 = vmatmul.f32.gmra.mxu0 %v1117
      %v1184 = vpop.f32.mrf.mxu0
      %v1185 = vadd.f32 0.0, %v1184
      %1186 = vmatmul.f32.gmra.mxu0 %v1120
      %v1187 = vpop.f32.mrf.mxu0
      %v1188 = vadd.f32 0.0, %v1187
      %1189 = vmatmul.f32.gmra.mxu0 %v1123
      %v1190 = vpop.f32.mrf.mxu0
      %v1191 = vadd.f32 0.0, %v1190
      %1192 = vdwg.mxu0
      %v1193 = vadd.f32 %v1042, %v1146
      %v1194 = vadd.f32 %v1043, %v1149
      %v1195 = vadd.f32 %v1044, %v1152
      %v1196 = vadd.f32 %v1045, %v1155
      %v1197 = vadd.f32 %v1046, %v1158
      %v1198 = vadd.f32 %v1047, %v1161
      %v1199 = vadd.f32 %v1048, %v1164
      %v1200 = vadd.f32 %v1049, %v1167
      %v1201 = vadd.f32 %v1050, %v1170
      %v1202 = vadd.f32 %v1051, %v1173
      %v1203 = vadd.f32 %v1052, %v1176
      %v1204 = vadd.f32 %v1053, %v1179
      %v1205 = vadd.f32 %v1054, %v1182
      %v1206 = vadd.f32 %v1055, %v1185
      %v1207 = vadd.f32 %v1056, %v1188
      %v1208 = vadd.f32 %v1057, %v1191
      %v1209 = vld [vmem:[%s1058 + $0x1] sm:$0xff]
      %v1210 = vld [vmem:[%s1058 + $0x9] sm:$0xff]
      %v1211 = vld [vmem:[%s1058 + $0x49] sm:$0xff]
      %v1212 = vld [vmem:[%s1058 + $0x51] sm:$0xff]
      %v1213 = vld [vmem:[%s1058 + $0x91] sm:$0xff]
      %v1214 = vld [vmem:[%s1058 + $0x99] sm:$0xff]
      %v1215 = vld [vmem:[%s1058 + $0xd9] sm:$0xff]
      %v1216 = vld [vmem:[%s1058 + $0xe1] sm:$0xff]
      %v1217 = vld [vmem:[%s1058 + $0x121] sm:$0xff]
      %v1218 = vld [vmem:[%s1058 + $0x129] sm:$0xff]
      %v1219 = vld [vmem:[%s1058 + $0x169] sm:$0xff]
      %v1220 = vld [vmem:[%s1058 + $0x171] sm:$0xff]
      %v1221 = vld [vmem:[%s1058 + $0x1b1] sm:$0xff]
      %v1222 = vld [vmem:[%s1058 + $0x1b9] sm:$0xff]
      %v1223 = vld [vmem:[%s1058 + $0x1f9] sm:$0xff]
      %v1224 = vld [vmem:[%s1058 + $0x201] sm:$0xff]
      %s1225 = scalar_lea.vmem %s1, 28
      %v1226 = vld [vmem:[%s1225] sm:$0xf]
      %v1228 = vsel %vm223, %v1209, 0
      %v1231 = vsel %vm223, %v1210, 0
      %v1234 = vsel %vm223, %v1211, 0
      %v1237 = vsel %vm223, %v1212, 0
      %v1240 = vsel %vm223, %v1213, 0
      %v1243 = vsel %vm223, %v1214, 0
      %v1246 = vsel %vm223, %v1215, 0
      %v1249 = vsel %vm223, %v1216, 0
      %v1252 = vsel %vm223, %v1217, 0
      %v1255 = vsel %vm223, %v1218, 0
      %v1258 = vsel %vm223, %v1219, 0
      %v1261 = vsel %vm223, %v1220, 0
      %v1264 = vsel %vm223, %v1221, 0
      %v1267 = vsel %vm223, %v1222, 0
      %v1270 = vsel %vm223, %v1223, 0
      %v1273 = vsel %vm223, %v1224, 0
      %v1276 = vsel %vm272, %v1226, 0
      %1278 = vmatpush.msra.mxu0 0.0
      %1279 = vmatpush.msra.mxu0 0.0
      %1280 = vmatpush.msra.mxu0 0.0
      %1281 = vmatpush.msra.mxu0 0.0
      %1282 = vmatpush.msra.mxu0 0.0
      %1283 = vmatpush.msra.mxu0 0.0
      %1284 = vmatpush.msra.mxu0 0.0
      %1285 = vmatpush.msra.mxu0 0.0
      %1286 = vmatpush.msra.mxu0 0.0
      %1287 = vmatpush.msra.mxu0 0.0
      %1288 = vmatpush.msra.mxu0 0.0
      %1289 = vmatpush.msra.mxu0 0.0
      %1290 = vmatpush.msra.mxu0 0.0
      %1291 = vmatpush.msra.mxu0 0.0
      %1292 = vmatpush.msra.mxu0 0.0
      %1293 = vmatpush.msra.mxu0 %v1276
      %1294 = vmatmul.f32.gmra.mxu0 %v1228
      %v1295 = vpop.f32.mrf.mxu0
      %v1296 = vadd.f32 0.0, %v1295
      %1297 = vmatmul.f32.gmra.mxu0 %v1231
      %v1298 = vpop.f32.mrf.mxu0
      %v1299 = vadd.f32 0.0, %v1298
      %1300 = vmatmul.f32.gmra.mxu0 %v1234
      %v1301 = vpop.f32.mrf.mxu0
      %v1302 = vadd.f32 0.0, %v1301
      %1303 = vmatmul.f32.gmra.mxu0 %v1237
      %v1304 = vpop.f32.mrf.mxu0
      %v1305 = vadd.f32 0.0, %v1304
      %1306 = vmatmul.f32.gmra.mxu0 %v1240
      %v1307 = vpop.f32.mrf.mxu0
      %v1308 = vadd.f32 0.0, %v1307
      %1309 = vmatmul.f32.gmra.mxu0 %v1243
      %v1310 = vpop.f32.mrf.mxu0
      %v1311 = vadd.f32 0.0, %v1310
      %1312 = vmatmul.f32.gmra.mxu0 %v1246
      %v1313 = vpop.f32.mrf.mxu0
      %v1314 = vadd.f32 0.0, %v1313
      %1315 = vmatmul.f32.gmra.mxu0 %v1249
      %v1316 = vpop.f32.mrf.mxu0
      %v1317 = vadd.f32 0.0, %v1316
      %1318 = vmatmul.f32.gmra.mxu0 %v1252
      %v1319 = vpop.f32.mrf.mxu0
      %v1320 = vadd.f32 0.0, %v1319
      %1321 = vmatmul.f32.gmra.mxu0 %v1255
      %v1322 = vpop.f32.mrf.mxu0
      %v1323 = vadd.f32 0.0, %v1322
      %1324 = vmatmul.f32.gmra.mxu0 %v1258
      %v1325 = vpop.f32.mrf.mxu0
      %v1326 = vadd.f32 0.0, %v1325
      %1327 = vmatmul.f32.gmra.mxu0 %v1261
      %v1328 = vpop.f32.mrf.mxu0
      %v1329 = vadd.f32 0.0, %v1328
      %1330 = vmatmul.f32.gmra.mxu0 %v1264
      %v1331 = vpop.f32.mrf.mxu0
      %v1332 = vadd.f32 0.0, %v1331
      %1333 = vmatmul.f32.gmra.mxu0 %v1267
      %v1334 = vpop.f32.mrf.mxu0
      %v1335 = vadd.f32 0.0, %v1334
      %1336 = vmatmul.f32.gmra.mxu0 %v1270
      %v1337 = vpop.f32.mrf.mxu0
      %v1338 = vadd.f32 0.0, %v1337
      %1339 = vmatmul.f32.gmra.mxu0 %v1273
      %v1340 = vpop.f32.mrf.mxu0
      %v1341 = vadd.f32 0.0, %v1340
      %1342 = vdwg.mxu0
      %v1343 = vadd.f32 %v1193, %v1296
      %v1344 = vadd.f32 %v1194, %v1299
      %v1345 = vadd.f32 %v1195, %v1302
      %v1346 = vadd.f32 %v1196, %v1305
      %v1347 = vadd.f32 %v1197, %v1308
      %v1348 = vadd.f32 %v1198, %v1311
      %v1349 = vadd.f32 %v1199, %v1314
      %v1350 = vadd.f32 %v1200, %v1317
      %v1351 = vadd.f32 %v1201, %v1320
      %v1352 = vadd.f32 %v1202, %v1323
      %v1353 = vadd.f32 %v1203, %v1326
      %v1354 = vadd.f32 %v1204, %v1329
      %v1355 = vadd.f32 %v1205, %v1332
      %v1356 = vadd.f32 %v1206, %v1335
      %v1357 = vadd.f32 %v1207, %v1338
      %v1358 = vadd.f32 %v1208, %v1341
      %v1359 = vld [vmem:[%s1058 + $0x2] sm:$0xff]
      %v1360 = vld [vmem:[%s1058 + $0xa] sm:$0xff]
      %v1361 = vld [vmem:[%s1058 + $0x4a] sm:$0xff]
      %v1362 = vld [vmem:[%s1058 + $0x52] sm:$0xff]
      %v1363 = vld [vmem:[%s1058 + $0x92] sm:$0xff]
      %v1364 = vld [vmem:[%s1058 + $0x9a] sm:$0xff]
      %v1365 = vld [vmem:[%s1058 + $0xda] sm:$0xff]
      %v1366 = vld [vmem:[%s1058 + $0xe2] sm:$0xff]
      %v1367 = vld [vmem:[%s1058 + $0x122] sm:$0xff]
      %v1368 = vld [vmem:[%s1058 + $0x12a] sm:$0xff]
      %v1369 = vld [vmem:[%s1058 + $0x16a] sm:$0xff]
      %v1370 = vld [vmem:[%s1058 + $0x172] sm:$0xff]
      %v1371 = vld [vmem:[%s1058 + $0x1b2] sm:$0xff]
      %v1372 = vld [vmem:[%s1058 + $0x1ba] sm:$0xff]
      %v1373 = vld [vmem:[%s1058 + $0x1fa] sm:$0xff]
      %v1374 = vld [vmem:[%s1058 + $0x202] sm:$0xff]
      %s1375 = scalar_lea.vmem %s1, 32
      %v1376 = vld [vmem:[%s1375] sm:$0xf]
      %v1378 = vsel %vm223, %v1359, 0
      %v1381 = vsel %vm223, %v1360, 0
      %v1384 = vsel %vm223, %v1361, 0
      %v1387 = vsel %vm223, %v1362, 0
      %v1390 = vsel %vm223, %v1363, 0
      %v1393 = vsel %vm223, %v1364, 0
      %v1396 = vsel %vm223, %v1365, 0
      %v1399 = vsel %vm223, %v1366, 0
      %v1402 = vsel %vm223, %v1367, 0
      %v1405 = vsel %vm223, %v1368, 0
      %v1408 = vsel %vm223, %v1369, 0
      %v1411 = vsel %vm223, %v1370, 0
      %v1414 = vsel %vm223, %v1371, 0
      %v1417 = vsel %vm223, %v1372, 0
      %v1420 = vsel %vm223, %v1373, 0
      %v1423 = vsel %vm223, %v1374, 0
      %v1426 = vsel %vm272, %v1376, 0
      %1428 = vmatpush.msra.mxu0 0.0
      %1429 = vmatpush.msra.mxu0 0.0
      %1430 = vmatpush.msra.mxu0 0.0
      %1431 = vmatpush.msra.mxu0 0.0
      %1432 = vmatpush.msra.mxu0 0.0
      %1433 = vmatpush.msra.mxu0 0.0
      %1434 = vmatpush.msra.mxu0 0.0
      %1435 = vmatpush.msra.mxu0 0.0
      %1436 = vmatpush.msra.mxu0 0.0
      %1437 = vmatpush.msra.mxu0 0.0
      %1438 = vmatpush.msra.mxu0 0.0
      %1439 = vmatpush.msra.mxu0 0.0
      %1440 = vmatpush.msra.mxu0 0.0
      %1441 = vmatpush.msra.mxu0 0.0
      %1442 = vmatpush.msra.mxu0 0.0
      %1443 = vmatpush.msra.mxu0 %v1426
      %1444 = vmatmul.f32.gmra.mxu0 %v1378
      %v1445 = vpop.f32.mrf.mxu0
      %v1446 = vadd.f32 0.0, %v1445
      %1447 = vmatmul.f32.gmra.mxu0 %v1381
      %v1448 = vpop.f32.mrf.mxu0
      %v1449 = vadd.f32 0.0, %v1448
      %1450 = vmatmul.f32.gmra.mxu0 %v1384
      %v1451 = vpop.f32.mrf.mxu0
      %v1452 = vadd.f32 0.0, %v1451
      %1453 = vmatmul.f32.gmra.mxu0 %v1387
      %v1454 = vpop.f32.mrf.mxu0
      %v1455 = vadd.f32 0.0, %v1454
      %1456 = vmatmul.f32.gmra.mxu0 %v1390
      %v1457 = vpop.f32.mrf.mxu0
      %v1458 = vadd.f32 0.0, %v1457
      %1459 = vmatmul.f32.gmra.mxu0 %v1393
      %v1460 = vpop.f32.mrf.mxu0
      %v1461 = vadd.f32 0.0, %v1460
      %1462 = vmatmul.f32.gmra.mxu0 %v1396
      %v1463 = vpop.f32.mrf.mxu0
      %v1464 = vadd.f32 0.0, %v1463
      %1465 = vmatmul.f32.gmra.mxu0 %v1399
      %v1466 = vpop.f32.mrf.mxu0
      %v1467 = vadd.f32 0.0, %v1466
      %1468 = vmatmul.f32.gmra.mxu0 %v1402
      %v1469 = vpop.f32.mrf.mxu0
      %v1470 = vadd.f32 0.0, %v1469
      %1471 = vmatmul.f32.gmra.mxu0 %v1405
      %v1472 = vpop.f32.mrf.mxu0
      %v1473 = vadd.f32 0.0, %v1472
      %1474 = vmatmul.f32.gmra.mxu0 %v1408
      %v1475 = vpop.f32.mrf.mxu0
      %v1476 = vadd.f32 0.0, %v1475
      %1477 = vmatmul.f32.gmra.mxu0 %v1411
      %v1478 = vpop.f32.mrf.mxu0
      %v1479 = vadd.f32 0.0, %v1478
      %1480 = vmatmul.f32.gmra.mxu0 %v1414
      %v1481 = vpop.f32.mrf.mxu0
      %v1482 = vadd.f32 0.0, %v1481
      %1483 = vmatmul.f32.gmra.mxu0 %v1417
      %v1484 = vpop.f32.mrf.mxu0
      %v1485 = vadd.f32 0.0, %v1484
      %1486 = vmatmul.f32.gmra.mxu0 %v1420
      %v1487 = vpop.f32.mrf.mxu0
      %v1488 = vadd.f32 0.0, %v1487
      %1489 = vmatmul.f32.gmra.mxu0 %v1423
      %v1490 = vpop.f32.mrf.mxu0
      %v1491 = vadd.f32 0.0, %v1490
      %1492 = vdwg.mxu0
      %v1493 = vadd.f32 %v1343, %v1446
      %v1494 = vadd.f32 %v1344, %v1449
      %v1495 = vadd.f32 %v1345, %v1452
      %v1496 = vadd.f32 %v1346, %v1455
      %v1497 = vadd.f32 %v1347, %v1458
      %v1498 = vadd.f32 %v1348, %v1461
      %v1499 = vadd.f32 %v1349, %v1464
      %v1500 = vadd.f32 %v1350, %v1467
      %v1501 = vadd.f32 %v1351, %v1470
      %v1502 = vadd.f32 %v1352, %v1473
      %v1503 = vadd.f32 %v1353, %v1476
      %v1504 = vadd.f32 %v1354, %v1479
      %v1505 = vadd.f32 %v1355, %v1482
      %v1506 = vadd.f32 %v1356, %v1485
      %v1507 = vadd.f32 %v1357, %v1488
      %v1508 = vadd.f32 %v1358, %v1491
      %1509 = vst [vmem:[%s182] sm:$0xff] %v1493
      %1510 = vst [vmem:[%s182 + $0x8] sm:$0xff] %v1494
      %1511 = vst [vmem:[%s182 + $0x10] sm:$0xff] %v1495
      %1512 = vst [vmem:[%s182 + $0x18] sm:$0xff] %v1496
      %1513 = vst [vmem:[%s182 + $0x20] sm:$0xff] %v1497
      %1514 = vst [vmem:[%s182 + $0x28] sm:$0xff] %v1498
      %1515 = vst [vmem:[%s182 + $0x30] sm:$0xff] %v1499
      %1516 = vst [vmem:[%s182 + $0x38] sm:$0xff] %v1500
      %1517 = vst [vmem:[%s182 + $0x40] sm:$0xff] %v1501
      %1518 = vst [vmem:[%s182 + $0x48] sm:$0xff] %v1502
      %1519 = vst [vmem:[%s182 + $0x50] sm:$0xff] %v1503
      %1520 = vst [vmem:[%s182 + $0x58] sm:$0xff] %v1504
      %1521 = vst [vmem:[%s182 + $0x60] sm:$0xff] %v1505
      %1522 = vst [vmem:[%s182 + $0x68] sm:$0xff] %v1506
      %1523 = vst [vmem:[%s182 + $0x70] sm:$0xff] %v1507
      %1524 = vst [vmem:[%s182 + $0x78] sm:$0xff] %v1508
      %v1525 = vadd.f32 %v1493, %v1494
      %v1526 = vadd.f32 %v1525, %v1495
      %v1527 = vadd.f32 %v1526, %v1496
      %v1528 = vadd.f32 %v1527, %v1497
      %v1529 = vadd.f32 %v1528, %v1498
      %v1530 = vadd.f32 %v1529, %v1499
      %v1531 = vadd.f32 %v1530, %v1500
      %v1532 = vadd.f32 %v1531, %v1501
      %v1533 = vadd.f32 %v1532, %v1502
      %v1534 = vadd.f32 %v1533, %v1503
      %v1535 = vadd.f32 %v1534, %v1504
      %v1536 = vadd.f32 %v1535, %v1505
      %v1537 = vadd.f32 %v1536, %v1506
      %v1538 = vadd.f32 %v1537, %v1507
      %v1539 = vadd.f32 %v1538, %v1508
      %v1540 = vrot.slane %v1539, 4
      %v1541 = vadd.f32 %v1539, %v1540
      %v1542 = vrot.slane %v1541, 2
      %v1543 = vadd.f32 %v1541, %v1542
      %v1544 = vrot.slane %v1543, 1
      %v1545 = vadd.f32 %v1543, %v1544
      %v1546 = vmul.f32 %v1493, %v1493
      %v1547 = vmul.f32 %v1494, %v1494
      %v1548 = vmul.f32 %v1495, %v1495
      %v1549 = vmul.f32 %v1496, %v1496
      %v1550 = vmul.f32 %v1497, %v1497
      %v1551 = vmul.f32 %v1498, %v1498
      %v1552 = vmul.f32 %v1499, %v1499
      %v1553 = vmul.f32 %v1500, %v1500
      %v1554 = vmul.f32 %v1501, %v1501
      %v1555 = vmul.f32 %v1502, %v1502
      %v1556 = vmul.f32 %v1503, %v1503
      %v1557 = vmul.f32 %v1504, %v1504
      %v1558 = vmul.f32 %v1505, %v1505
      %v1559 = vmul.f32 %v1506, %v1506
      %v1560 = vmul.f32 %v1507, %v1507
      %v1561 = vmul.f32 %v1508, %v1508
      %v1562 = vadd.f32 %v1546, %v1547
      %v1563 = vadd.f32 %v1562, %v1548
      %v1564 = vadd.f32 %v1563, %v1549
      %v1565 = vadd.f32 %v1564, %v1550
      %v1566 = vadd.f32 %v1565, %v1551
      %v1567 = vadd.f32 %v1566, %v1552
      %v1568 = vadd.f32 %v1567, %v1553
      %v1569 = vadd.f32 %v1568, %v1554
      %v1570 = vadd.f32 %v1569, %v1555
      %v1571 = vadd.f32 %v1570, %v1556
      %v1572 = vadd.f32 %v1571, %v1557
      %v1573 = vadd.f32 %v1572, %v1558
      %v1574 = vadd.f32 %v1573, %v1559
      %v1575 = vadd.f32 %v1574, %v1560
      %v1576 = vadd.f32 %v1575, %v1561
      %v1577 = vrot.slane %v1576, 4
      %v1578 = vadd.f32 %v1576, %v1577
      %v1579 = vrot.slane %v1578, 2
      %v1580 = vadd.f32 %v1578, %v1579
      %v1581 = vrot.slane %v1580, 1
      %v1582 = vadd.f32 %v1580, %v1581
      %vm1583 = vcmask 1040384
      %v1584 = vsel %vm1583, %v1545, %v1582
      %1585 = vst [vmem:[%s187] sm:$0x3] %v1584
      %s1586 = smul.u32 16, %s15
      %p1587 = scmp.lt.s32.totalorder %s1586, 63
      %s1588 = scalar_select %p1587, %s1586, 63
      %s1589 = smul.addr %s1588, 8
      %s1590 = scalar_lea.vmem %s2, %s1589
      %p1591 = scmp.lt.s32.totalorder %s15, 3
      %s1592 = scalar_select %p1591, %s15, 3
      %s1593 = smul.addr %s1592, 2
      %s1594 = scalar_lea.vmem %s3, %s1593
      // Predicated region
      $region29: #{conv_block_forward.4} parent=27 // pred_check
        %p1595 = pneg %p80
      $region30: #{conv_block_forward.4} parent=27 // pred_check_branch
        %1597 = sbr.rel (%p1595) target = $region32
      $region31: #{conv_block_forward.4} parent=27 // pred_region
        %s1598 = smul.u32 16, %s15
      $region32: #{conv_block_forward.4} parent=27 // pred_fallthru
        _
      // Predicated region
      $region33: #{conv_block_forward.4} parent=27 // pred_check
        %p1599 = pneg %p106
      $region34: #{conv_block_forward.4} parent=27 // pred_check_branch
        %1601 = sbr.rel (%p1599) target = $region36
      $region35: #{conv_block_forward.4} parent=27 // pred_region
        _
      $region36: #{conv_block_forward.4} parent=27 // pred_fallthru
        _
    $region28: #{conv_block_forward.4} parent=5 // pred_fallthru
      _
    %p1602 = scmp.le.s32.totalorder 2, %s10
    // Predicated region
    $region37: #{conv_block_forward.4} parent=5 // pred_check
      %p1603 = pneg %p1602
    $region38: #{conv_block_forward.4} parent=5 // pred_check_branch
      %1605 = sbr.rel (%p1603) target = $region40
    $region39: #{conv_block_forward.4} parent=5 // pred_region
      %s1606 = ssub.s32 %s10, 2
      // Predicated region
      $region41: #{conv_block_forward.4} parent=39 // pred_check
        %p1607 = pneg %p86
      $region42: #{conv_block_forward.4} parent=39 // pred_check_branch
        %1609 = sbr.rel (%p1607) target = $region44
      $region43: #{conv_block_forward.4} parent=39 // pred_region
        %s1610 = smul.u32 16, %s16
        %p1611 = scmp.lt.s32.totalorder %s1610, 63
        %s1612 = scalar_select %p1611, %s1610, 63
        %s1613 = smul.addr %s1612, 8
        %s1614 = scalar_lea.vmem %s2, %s1613
      $region44: #{conv_block_forward.4} parent=39 // pred_fallthru
        _
      // Predicated region
      $region45: #{conv_block_forward.4} parent=39 // pred_check
        %p1615 = pneg %p112
      $region46: #{conv_block_forward.4} parent=39 // pred_check_branch
        %1617 = sbr.rel (%p1615) target = $region48
      $region47: #{conv_block_forward.4} parent=39 // pred_region
        %p1618 = scmp.lt.s32.totalorder %s16, 3
        %s1619 = scalar_select %p1618, %s16, 3
        %s1620 = smul.addr %s1619, 2
        %s1621 = scalar_lea.vmem %s3, %s1620
      $region48: #{conv_block_forward.4} parent=39 // pred_fallthru
        _
    $region40: #{conv_block_forward.4} parent=5 // pred_fallthru
      _
  $region6: #{conv_block_forward.4} parent=0 // loop_footer
    %s14 = sadd.s32 1, %s10
  $region7: #{conv_block_forward.4} parent=0 // loop_footer_branch
    %9 = sbr.rel target = $region3
  $region8: #{conv_block_forward.4} parent=0 // loop_exit
    _

// kernel: conv_block_forward.6
$region0: #{conv_block_forward.6}
  #allocation0 [shape = 'u32[]', space=smem, size = 0x4, offset = 0x4, fixed_abs, tag = 'smem constant byte address 0x4 - core index']
  #allocation1 [shape = 'u32[72,128]{1,0:T(1,128)}', space=vmem, size = 0x9000, scoped, tag = 'internal scratch']
  %s0 = inlined_call_operand.vmem [shape: f32[32,3,18,128], index: 0, kind: input, shape index: {}]
  %s1 = inlined_call_operand.vmem [shape: f32[3,3,128,128], index: 1, kind: input, shape index: {}]
  %s2 = inlined_call_operand.vmem [shape: f32[512,128], index: 2, kind: output, shape index: {0}]
  %s3 = inlined_call_operand.vmem [shape: f32[4,2,128], index: 3, kind: output, shape index: {1}]
  %4 = xla_tuple %s2, %s3
  %s5 = sld [smem:[#allocation0]]
  $region49: #{conv_block_forward.6} parent=0
    _
  %s7 = ssub.s32 1, %s5
  %s8 = scalar_select 0, %s7, %s5
  loop: start=0, step=1, limit=6
  $region2: #{conv_block_forward.6} parent=0 // loop_pre_header
    _
  $region3: #{conv_block_forward.6} parent=0 // loop_header
    %s10 = sphi 0, %s14
    %p11 = scmp.ge.s32.totalorder %s10, 6
    %s20 = sphi 0, %s22
    %s23 = sphi 0, %s20
    %s24 = sphi 0, %s23
    %s40 = sphi 0, %s24
    %s44 = sphi 0, %s44
    %s46 = sphi 0, %s44
    %s47 = sphi 0, %s46
    %s61 = sphi 0, %s47
    %s67 = sphi 0, %s69
    %s70 = sphi 0, %s67
    %s71 = sphi 0, %s70
    %s87 = sphi 0, %s71
    %s93 = sphi 0, %s95
    %s96 = sphi 0, %s93
    %s97 = sphi 0, %s96
    %s113 = sphi 0, %s97
  $region4: #{conv_block_forward.6} parent=0 // loop_header_branch
    %13 = sbr.rel (%p11) target = $region8
  $region5: #{conv_block_forward.6} parent=0 // loop_body
    %s15 = ssub.s32 %s10, 1
    %s16 = ssub.s32 %s10, 2
    %s17 = sadd.s32 %s10, 1
    %s18 = ssub.s32 %s10, %s17
    %p19 = scmp.eq.s32.totalorder %s18, 0
    %s21 = sadd.s32 %s20, 1
    %s22 = scalar_select %p19, %s20, %s21
    %p25 = pneg %p19
    %p26 = scmp.eq.s32.totalorder %s10, 3
    %p27 = por %p25, %p26
    %p28 = scmp.ne.s32.totalorder %s20, %s23
    %p29 = scmp.eq.s32.totalorder %s10, 0
    %p30 = por %p28, %p29
    %p31 = scmp.ne.s32.totalorder %s20, %s23
    %p32 = scmp.eq.s32.totalorder %s15, 3
    %p33 = por %p31, %p32
    %p34 = scmp.ne.s32.totalorder %s23, %s24
    %p35 = scmp.eq.s32.totalorder %s15, 0
    %p36 = por %p34, %p35
    %p37 = scmp.ne.s32.totalorder %s23, %s24
    %p38 = scmp.eq.s32.totalorder %s16, 3
    %p39 = por %p37, %p38
    %p41 = scmp.ne.s32.totalorder %s24, %s40
    %p42 = scmp.eq.s32.totalorder %s16, 0
    %p43 = por %p41, %p42
    %s45 = sadd.s32 %s44, 1
    %p48 = scmp.eq.s32.totalorder %s10, 3
    %p49 = scmp.ne.s32.totalorder %s44, %s46
    %p50 = scmp.eq.s32.totalorder %s10, 0
    %p51 = por %p49, %p50
    %p52 = scmp.ne.s32.totalorder %s44, %s46
    %p53 = scmp.eq.s32.totalorder %s15, 3
    %p54 = por %p52, %p53
    %p55 = scmp.ne.s32.totalorder %s46, %s47
    %p56 = scmp.eq.s32.totalorder %s15, 0
    %p57 = por %p55, %p56
    %p58 = scmp.ne.s32.totalorder %s46, %s47
    %p59 = scmp.eq.s32.totalorder %s16, 3
    %p60 = por %p58, %p59
    %p62 = scmp.ne.s32.totalorder %s47, %s61
    %p63 = scmp.eq.s32.totalorder %s16, 0
    %p64 = por %p62, %p63
    %s65 = ssub.s32 %s10, %s17
    %p66 = scmp.eq.s32.totalorder %s65, 0
    %s68 = sadd.s32 %s67, 1
    %s69 = scalar_select %p66, %s67, %s68
    %p72 = pneg %p66
    %p73 = scmp.eq.s32.totalorder %s10, 3
    %p74 = por %p72, %p73
    %p75 = scmp.ne.s32.totalorder %s67, %s70
    %p76 = scmp.eq.s32.totalorder %s10, 0
    %p77 = por %p75, %p76
    %p78 = scmp.ne.s32.totalorder %s67, %s70
    %p79 = scmp.eq.s32.totalorder %s15, 3
    %p80 = por %p78, %p79
    %p81 = scmp.ne.s32.totalorder %s70, %s71
    %p82 = scmp.eq.s32.totalorder %s15, 0
    %p83 = por %p81, %p82
    %p84 = scmp.ne.s32.totalorder %s70, %s71
    %p85 = scmp.eq.s32.totalorder %s16, 3
    %p86 = por %p84, %p85
    %p88 = scmp.ne.s32.totalorder %s71, %s87
    %p89 = scmp.eq.s32.totalorder %s16, 0
    %p90 = por %p88, %p89
    %s91 = ssub.s32 %s10, %s17
    %p92 = scmp.eq.s32.totalorder %s91, 0
    %s94 = sadd.s32 %s93, 1
    %s95 = scalar_select %p92, %s93, %s94
    %p98 = pneg %p92
    %p99 = scmp.eq.s32.totalorder %s10, 3
    %p100 = por %p98, %p99
    %p101 = scmp.ne.s32.totalorder %s93, %s96
    %p102 = scmp.eq.s32.totalorder %s10, 0
    %p103 = por %p101, %p102
    %p104 = scmp.ne.s32.totalorder %s93, %s96
    %p105 = scmp.eq.s32.totalorder %s15, 3
    %p106 = por %p104, %p105
    %p107 = scmp.ne.s32.totalorder %s96, %s97
    %p108 = scmp.eq.s32.totalorder %s15, 0
    %p109 = por %p107, %p108
    %p110 = scmp.ne.s32.totalorder %s96, %s97
    %p111 = scmp.eq.s32.totalorder %s16, 3
    %p112 = por %p110, %p111
    %p114 = scmp.ne.s32.totalorder %s97, %s113
    %p115 = scmp.eq.s32.totalorder %s16, 0
    %p116 = por %p114, %p115
    %p117 = scmp.le.s32.totalorder 1, %s10
    %p118 = scmp.lt.s32.totalorder %s10, 5
    %p119 = pnand %p117, %p118
    %p120 = pneg %p119
    // Predicated region
    $region9: #{conv_block_forward.6} parent=5 // pred_check
      _
    $region10: #{conv_block_forward.6} parent=5 // pred_check_branch
      %122 = sbr.rel (%p119) target = $region12
    $region11: #{conv_block_forward.6} parent=5 // pred_region
      %s123 = ssub.s32 %s10, 1
      // Predicated region
      $region13: #{conv_block_forward.6} parent=11 // pred_check
        %p124 = pneg %p57
      $region14: #{conv_block_forward.6} parent=11 // pred_check_branch
        %126 = sbr.rel (%p124) target = $region16
      $region15: #{conv_block_forward.6} parent=11 // pred_region
        _
      $region16: #{conv_block_forward.6} parent=11 // pred_fallthru
        _
    $region12: #{conv_block_forward.6} parent=5 // pred_fallthru
      _
    %p127 = scmp.lt.s32.totalorder %s10, 4
    // Predicated region
    $region17: #{conv_block_forward.6} parent=5 // pred_check
      %p128 = pneg %p127
    $region18: #{conv_block_forward.6} parent=5 // pred_check_branch
      %130 = sbr.rel (%p128) target = $region20
    $region19: #{conv_block_forward.6} parent=5 // pred_region
      // Predicated region
      $region21: #{conv_block_forward.6} parent=19 // pred_check
        %p131 = pneg %p30
      $region22: #{conv_block_forward.6} parent=19 // pred_check_branch
        %133 = sbr.rel (%p131) target = $region24
      $region23: #{conv_block_forward.6} parent=19 // pred_region
        %s134 = smul.u32 8, %s10
        %p135 = scmp.lt.s32.totalorder %s134, 31
        %s136 = scalar_select %p135, %s134, 31
        %s137 = smul.addr %s136, 9
        %s138 = smul.addr %s137, 8
        %s139 = scalar_lea.vmem %s0, %s138
        %s140 = smul.u32 8, %s10
      $region24: #{conv_block_forward.6} parent=19 // pred_fallthru
        _
    $region20: #{conv_block_forward.6} parent=5 // pred_fallthru
      _
    %p141 = scmp.le.s32.totalorder 1, %s10
    %p142 = scmp.lt.s32.totalorder %s10, 5
    %p143 = pnand %p141, %p142
    %p144 = pneg %p143
    // Predicated region
    $region25: #{conv_block_forward.6} parent=5 // pred_check
      _
    $region26: #{conv_block_forward.6} parent=5 // pred_check_branch
      %146 = sbr.rel (%p143) target = $region28
    $region27: #{conv_block_forward.6} parent=5 // pred_region
      %s147 = ssub.s32 %s10, 1
      %s148 = smul.u32 8, %s15
      %p149 = scmp.lt.s32.totalorder %s148, 31
      %s150 = scalar_select %p149, %s148, 31
      %s151 = smul.addr %s150, 9
      %s152 = smul.addr %s151, 8
      %s153 = scalar_lea.vmem %s0, %s152
      %p154 = pneg %p36
      %p155 = pneg %p33
      %p156 = pneg %p57
      %p157 = pneg %p54
      %p158 = pneg %p83
      %p159 = pneg %p80
      %s160 = smul.u32 16, %s15
      %p161 = scmp.lt.s32.totalorder %s160, 63
      %s162 = scalar_select %p161, %s160, 63
      %s163 = smul.addr %s162, 8
      %s164 = scalar_lea.vmem %s2, %s163
      %p165 = pneg %p109
      %p166 = pneg %p106
      %p167 = scmp.lt.s32.totalorder %s15, 3
      %s168 = scalar_select %p167, %s15, 3
      %s169 = smul.addr %s168, 2
      %s170 = scalar_lea.vmem %s3, %s169
      %s171 = smul.u32 8, %s15
      %p172 = scmp.lt.s32.totalorder %s171, 31
      %s173 = scalar_select %p172, %s171, 31
      %s174 = smul.addr %s173, 9
      %s175 = smul.addr %s174, 8
      %s176 = scalar_lea.vmem %s0, %s175
      %s177 = smul.u32 8, %s15
      %s178 = smul.u32 16, %s15
      %p179 = scmp.lt.s32.totalorder %s178, 63
      %s180 = scalar_select %p179, %s178, 63
      %s181 = smul.addr %s180, 8
      %s182 = scalar_lea.vmem %s2, %s181
      %s183 = smul.u32 16, %s15
      %p184 = scmp.lt.s32.totalorder %s15, 3
      %s185 = scalar_select %p184, %s15, 3
      %s186 = smul.addr %s185, 2
      %s187 = scalar_lea.vmem %s3, %s186
      %v188 = vld [vmem:[%s176] sm:$0xff]
      %v189 = vld [vmem:[%s176 + $0x8] sm:$0xff]
      %v190 = vld [vmem:[%s176 + $0x48] sm:$0xff]
      %v191 = vld [vmem:[%s176 + $0x50] sm:$0xff]
      %v192 = vld [vmem:[%s176 + $0x90] sm:$0xff]
      %v193 = vld [vmem:[%s176 + $0x98] sm:$0xff]
      %v194 = vld [vmem:[%s176 + $0xd8] sm:$0xff]
      %v195 = vld [vmem:[%s176 + $0xe0] sm:$0xff]
      %v196 = vld [vmem:[%s176 + $0x120] sm:$0xff]
      %v197 = vld [vmem:[%s176 + $0x128] sm:$0xff]
      %v198 = vld [vmem:[%s176 + $0x168] sm:$0xff]
      %v199 = vld [vmem:[%s176 + $0x170] sm:$0xff]
      %v200 = vld [vmem:[%s176 + $0x1b0] sm:$0xff]
      %v201 = vld [vmem:[%s176 + $0x1b8] sm:$0xff]
      %v202 = vld [vmem:[%s176 + $0x1f8] sm:$0xff]
      %v203 = vld [vmem:[%s176 + $0x200] sm:$0xff]
      %v204 = vld [vmem:[%s1] sm:$0xff]
      %v205 = vld [vmem:[%s1 + $0x8] sm:$0xff]
      %v206 = vld [vmem:[%s1 + $0x10] sm:$0xff]
      %v207 = vld [vmem:[%s1 + $0x18] sm:$0xff]
      %v208 = vld [vmem:[%s1 + $0x20] sm:$0xff]
      %v209 = vld [vmem:[%s1 + $0x28] sm:$0xff]
      %v210 = vld [vmem:[%s1 + $0x30] sm:$0xff]
      %v211 = vld [vmem:[%s1 + $0x38] sm:$0xff]
      %v212 = vld [vmem:[%s1 + $0x40] sm:$0xff]
      %v213 = vld [vmem:[%s1 + $0x48] sm:$0xff]
      %v214 = vld [vmem:[%s1 + $0x50] sm:$0xff]
      %v215 = vld [vmem:[%s1 + $0x58] sm:$0xff]
      %v216 = vld [vmem:[%s1 + $0x60] sm:$0xff]
      %v217 = vld [vmem:[%s1 + $0x68] sm:$0xff]
      %v218 = vld [vmem:[%s1 + $0x70] sm:$0xff]
      %v219 = vld [vmem:[%s1 + $0x78] sm:$0xff]
      %v220 = vld [vmem:[%s176 + $0x1] sm:$0xff]
      %v221 = vld [vmem:[%s176 + $0x9] sm:$0xff]
      %v222 = vld [vmem:[%s176 + $0x49] sm:$0xff]
      %v223 = vld [vmem:[%s176 + $0x51] sm:$0xff]
      %v224 = vld [vmem:[%s176 + $0x91] sm:$0xff]
      %v225 = vld [vmem:[%s176 + $0x99] sm:$0xff]
      %v226 = vld [vmem:[%s176 + $0xd9] sm:$0xff]
      %v227 = vld [vmem:[%s176 + $0xe1] sm:$0xff]
      %v228 = vld [vmem:[%s176 + $0x121] sm:$0xff]
      %v229 = vld [vmem:[%s176 + $0x129] sm:$0xff]
      %v230 = vld [vmem:[%s176 + $0x169] sm:$0xff]
      %v231 = vld [vmem:[%s176 + $0x171] sm:$0xff]
      %v232 = vld [vmem:[%s176 + $0x1b1] sm:$0xff]
      %v233 = vld [vmem:[%s176 + $0x1b9] sm:$0xff]
      %v234 = vld [vmem:[%s176 + $0x1f9] sm:$0xff]
      %v235 = vld [vmem:[%s176 + $0x201] sm:$0xff]
      %s236 = scalar_lea.vmem %s1, 128
      %v237 = vld [vmem:[%s236] sm:$0xff]
      %v238 = vld [vmem:[%s236 + $0x8] sm:$0xff]
      %v239 = vld [vmem:[%s236 + $0x10] sm:$0xff]
      %v240 = vld [vmem:[%s236 + $0x18] sm:$0xff]
      %v241 = vld [vmem:[%s236 + $0x20] sm:$0xff]
      %v242 = vld [vmem:[%s236 + $0x28] sm:$0xff]
      %v243 = vld [vmem:[%s236 + $0x30] sm:$0xff]
      %v244 = vld [vmem:[%s236 + $0x38] sm:$0xff]
      %v245 = vld [vmem:[%s236 + $0x40] sm:$0xff]
      %v246 = vld [vmem:[%s236 + $0x48] sm:$0xff]
      %v247 = vld [vmem:[%s236 + $0x50] sm:$0xff]
      %v248 = vld [vmem:[%s236 + $0x58] sm:$0xff]
      %v249 = vld [vmem:[%s236 + $0x60] sm:$0xff]
      %v250 = vld [vmem:[%s236 + $0x68] sm:$0xff]
      %v251 = vld [vmem:[%s236 + $0x70] sm:$0xff]
      %v252 = vld [vmem:[%s236 + $0x78] sm:$0xff]
      %253 = vmatpush.msra.mxu0 %v252
      %254 = vmatpush.msra.mxu0 %v251
      %255 = vmatpush.msra.mxu0 %v250
      %256 = vmatpush.msra.mxu0 %v249
      %257 = vmatpush.msra.mxu0 %v248
      %258 = vmatpush.msra.mxu0 %v247
      %259 = vmatpush.msra.mxu0 %v246
      %260 = vmatpush.msra.mxu0 %v245
      %261 = vmatpush.msra.mxu0 %v244
      %262 = vmatpush.msra.mxu0 %v243
      %263 = vmatpush.msra.mxu0 %v242
      %264 = vmatpush.msra.mxu0 %v241
      %265 = vmatpush.msra.mxu0 %v240
      %266 = vmatpush.msra.mxu0 %v239
      %267 = vmatpush.msra.mxu0 %v238
      %268 = vmatpush.msra.mxu0 %v237
      %269 = vmatmul.f32.gmra.mxu0 %v220
      %v270 = vpop.f32.mrf.mxu0
      %v271 = vadd.f32 0.0, %v270
      %272 = vmatmul.f32.gmra.mxu0 %v221
      %v273 = vpop.f32.mrf.mxu0
      %v274 = vadd.f32 0.0, %v273
      %275 = vmatmul.f32.gmra.mxu0 %v222
      %v276 = vpop.f32.mrf.mxu0
      %v277 = vadd.f32 0.0, %v276
      %278 = vmatmul.f32.gmra.mxu0 %v223
      %v279 = vpop.f32.mrf.mxu0
      %v280 = vadd.f32 0.0, %v279
      %281 = vmatmul.f32.gmra.mxu0 %v224
      %v282 = vpop.f32.mrf.mxu0
      %v283 = vadd.f32 0.0, %v282
      %284 = vmatmul.f32.gmra.mxu0 %v225
      %v285 = vpop.f32.mrf.mxu0
      %v286 = vadd.f32 0.0, %v285
      %287 = vmatmul.f32.gmra.mxu0 %v226
      %v288 = vpop.f32.mrf.mxu0
      %v289 = vadd.f32 0.0, %v288
      %290 = vmatmul.f32.gmra.mxu0 %v227
      %v291 = vpop.f32.mrf.mxu0
      %v292 = vadd.f32 0.0, %v291
      %293 = vmatmul.f32.gmra.mxu0 %v228
      %v294 = vpop.f32.mrf.mxu0
      %v295 = vadd.f32 0.0, %v294
      %296 = vmatmul.f32.gmra.mxu0 %v229
      %v297 = vpop.f32.mrf.mxu0
      %v298 = vadd.f32 0.0, %v297
      %299 = vmatmul.f32.gmra.mxu0 %v230
      %v300 = vpop.f32.mrf.mxu0
      %v301 = vadd.f32 0.0, %v300
      %302 = vmatmul.f32.gmra.mxu0 %v231
      %v303 = vpop.f32.mrf.mxu0
      %v304 = vadd.f32 0.0, %v303
      %305 = vmatmul.f32.gmra.mxu0 %v232
      %v306 = vpop.f32.mrf.mxu0
      %v307 = vadd.f32 0.0, %v306
      %308 = vmatmul.f32.gmra.mxu0 %v233
      %v309 = vpop.f32.mrf.mxu0
      %v310 = vadd.f32 0.0, %v309
      %311 = vmatmul.f32.gmra.mxu0 %v234
      %v312 = vpop.f32.mrf.mxu0
      %v313 = vadd.f32 0.0, %v312
      %314 = vmatmul.f32.gmra.mxu0 %v235
      %v315 = vpop.f32.mrf.mxu0
      %v316 = vadd.f32 0.0, %v315
      %317 = vdwg.mxu0
      %318 = vmatpush.msra.mxu0 %v219
      %319 = vmatpush.msra.mxu0 %v218
      %320 = vmatpush.msra.mxu0 %v217
      %321 = vmatpush.msra.mxu0 %v216
      %322 = vmatpush.msra.mxu0 %v215
      %323 = vmatpush.msra.mxu0 %v214
      %324 = vmatpush.msra.mxu0 %v213
      %325 = vmatpush.msra.mxu0 %v212
      %326 = vmatpush.msra.mxu0 %v211
      %327 = vmatpush.msra.mxu0 %v210
      %328 = vmatpush.msra.mxu0 %v209
      %329 = vmatpush.msra.mxu0 %v208
      %330 = vmatpush.msra.mxu0 %v207
      %331 = vmatpush.msra.mxu0 %v206
      %332 = vmatpush.msra.mxu0 %v205
      %333 = vmatpush.msra.mxu0 %v204
      %334 = vmatmul.f32.gmra.mxu0 %v188
      %v335 = vpop.f32.mrf.mxu0
      %v336 = vadd.f32 %v271, %v335
      %337 = vmatmul.f32.gmra.mxu0 %v189
      %v338 = vpop.f32.mrf.mxu0
      %v339 = vadd.f32 %v274, %v338
      %340 = vmatmul.f32.gmra.mxu0 %v190
      %v341 = vpop.f32.mrf.mxu0
      %v342 = vadd.f32 %v277, %v341
      %343 = vmatmul.f32.gmra.mxu0 %v191
      %v344 = vpop.f32.mrf.mxu0
      %v345 = vadd.f32 %v280, %v344
      %346 = vmatmul.f32.gmra.mxu0 %v192
      %v347 = vpop.f32.mrf.mxu0
      %v348 = vadd.f32 %v283, %v347
      %349 = vmatmul.f32.gmra.mxu0 %v193
      %v350 = vpop.f32.mrf.mxu0
      %v351 = vadd.f32 %v286, %v350
      %352 = vmatmul.f32.gmra.mxu0 %v194
      %v353 = vpop.f32.mrf.mxu0
      %v354 = vadd.f32 %v289, %v353
      %355 = vmatmul.f32.gmra.mxu0 %v195
      %v356 = vpop.f32.mrf.mxu0
      %v357 = vadd.f32 %v292, %v356
      %358 = vmatmul.f32.gmra.mxu0 %v196
      %v359 = vpop.f32.mrf.mxu0
      %v360 = vadd.f32 %v295, %v359
      %361 = vmatmul.f32.gmra.mxu0 %v197
      %v362 = vpop.f32.mrf.mxu0
      %v363 = vadd.f32 %v298, %v362
      %364 = vmatmul.f32.gmra.mxu0 %v198
      %v365 = vpop.f32.mrf.mxu0
      %v366 = vadd.f32 %v301, %v365
      %367 = vmatmul.f32.gmra.mxu0 %v199
      %v368 = vpop.f32.mrf.mxu0
      %v369 = vadd.f32 %v304, %v368
      %370 = vmatmul.f32.gmra.mxu0 %v200
      %v371 = vpop.f32.mrf.mxu0
      %v372 = vadd.f32 %v307, %v371
      %373 = vmatmul.f32.gmra.mxu0 %v201
      %v374 = vpop.f32.mrf.mxu0
      %v375 = vadd.f32 %v310, %v374
      %376 = vmatmul.f32.gmra.mxu0 %v202
      %v377 = vpop.f32.mrf.mxu0
      %v378 = vadd.f32 %v313, %v377
      %379 = vmatmul.f32.gmra.mxu0 %v203
      %v380 = vpop.f32.mrf.mxu0
      %v381 = vadd.f32 %v316, %v380
      %382 = vdwg.mxu0
      %v383 = vld [vmem:[%s176 + $0x2] sm:$0xff]
      %v384 = vld [vmem:[%s176 + $0xa] sm:$0xff]
      %v385 = vld [vmem:[%s176 + $0x4a] sm:$0xff]
      %v386 = vld [vmem:[%s176 + $0x52] sm:$0xff]
      %v387 = vld [vmem:[%s176 + $0x92] sm:$0xff]
      %v388 = vld [vmem:[%s176 + $0x9a] sm:$0xff]
      %v389 = vld [vmem:[%s176 + $0xda] sm:$0xff]
      %v390 = vld [vmem:[%s176 + $0xe2] sm:$0xff]
      %v391 = vld [vmem:[%s176 + $0x122] sm:$0xff]
      %v392 = vld [vmem:[%s176 + $0x12a] sm:$0xff]
      %v393 = vld [vmem:[%s176 + $0x16a] sm:$0xff]
      %v394 = vld [vmem:[%s176 + $0x172] sm:$0xff]
      %v395 = vld [vmem:[%s176 + $0x1b2] sm:$0xff]
      %v396 = vld [vmem:[%s176 + $0x1ba] sm:$0xff]
      %v397 = vld [vmem:[%s176 + $0x1fa] sm:$0xff]
      %v398 = vld [vmem:[%s176 + $0x202] sm:$0xff]
      %s399 = scalar_lea.vmem %s1, 256
      %v400 = vld [vmem:[%s399] sm:$0xff]
      %v401 = vld [vmem:[%s399 + $0x8] sm:$0xff]
      %v402 = vld [vmem:[%s399 + $0x10] sm:$0xff]
      %v403 = vld [vmem:[%s399 + $0x18] sm:$0xff]
      %v404 = vld [vmem:[%s399 + $0x20] sm:$0xff]
      %v405 = vld [vmem:[%s399 + $0x28] sm:$0xff]
      %v406 = vld [vmem:[%s399 + $0x30] sm:$0xff]
      %v407 = vld [vmem:[%s399 + $0x38] sm:$0xff]
      %v408 = vld [vmem:[%s399 + $0x40] sm:$0xff]
      %v409 = vld [vmem:[%s399 + $0x48] sm:$0xff]
      %v410 = vld [vmem:[%s399 + $0x50] sm:$0xff]
      %v411 = vld [vmem:[%s399 + $0x58] sm:$0xff]
      %v412 = vld [vmem:[%s399 + $0x60] sm:$0xff]
      %v413 = vld [vmem:[%s399 + $0x68] sm:$0xff]
      %v414 = vld [vmem:[%s399 + $0x70] sm:$0xff]
      %v415 = vld [vmem:[%s399 + $0x78] sm:$0xff]
      %416 = vmatpush.msra.mxu0 %v415
      %417 = vmatpush.msra.mxu0 %v414
      %418 = vmatpush.msra.mxu0 %v413
      %419 = vmatpush.msra.mxu0 %v412
      %420 = vmatpush.msra.mxu0 %v411
      %421 = vmatpush.msra.mxu0 %v410
      %422 = vmatpush.msra.mxu0 %v409
      %423 = vmatpush.msra.mxu0 %v408
      %424 = vmatpush.msra.mxu0 %v407
      %425 = vmatpush.msra.mxu0 %v406
      %426 = vmatpush.msra.mxu0 %v405
      %427 = vmatpush.msra.mxu0 %v404
      %428 = vmatpush.msra.mxu0 %v403
      %429 = vmatpush.msra.mxu0 %v402
      %430 = vmatpush.msra.mxu0 %v401
      %431 = vmatpush.msra.mxu0 %v400
      %432 = vmatmul.f32.gmra.mxu0 %v383
      %v433 = vpop.f32.mrf.mxu0
      %v434 = vadd.f32 0.0, %v433
      %435 = vmatmul.f32.gmra.mxu0 %v384
      %v436 = vpop.f32.mrf.mxu0
      %v437 = vadd.f32 0.0, %v436
      %438 = vmatmul.f32.gmra.mxu0 %v385
      %v439 = vpop.f32.mrf.mxu0
      %v440 = vadd.f32 0.0, %v439
      %441 = vmatmul.f32.gmra.mxu0 %v386
      %v442 = vpop.f32.mrf.mxu0
      %v443 = vadd.f32 0.0, %v442
      %444 = vmatmul.f32.gmra.mxu0 %v387
      %v445 = vpop.f32.mrf.mxu0
      %v446 = vadd.f32 0.0, %v445
      %447 = vmatmul.f32.gmra.mxu0 %v388
      %v448 = vpop.f32.mrf.mxu0
      %v449 = vadd.f32 0.0, %v448
      %450 = vmatmul.f32.gmra.mxu0 %v389
      %v451 = vpop.f32.mrf.mxu0
      %v452 = vadd.f32 0.0, %v451
      %453 = vmatmul.f32.gmra.mxu0 %v390
      %v454 = vpop.f32.mrf.mxu0
      %v455 = vadd.f32 0.0, %v454
      %456 = vmatmul.f32.gmra.mxu0 %v391
      %v457 = vpop.f32.mrf.mxu0
      %v458 = vadd.f32 0.0, %v457
      %459 = vmatmul.f32.gmra.mxu0 %v392
      %v460 = vpop.f32.mrf.mxu0
      %v461 = vadd.f32 0.0, %v460
      %462 = vmatmul.f32.gmra.mxu0 %v393
      %v463 = vpop.f32.mrf.mxu0
      %v464 = vadd.f32 0.0, %v463
      %465 = vmatmul.f32.gmra.mxu0 %v394
      %v466 = vpop.f32.mrf.mxu0
      %v467 = vadd.f32 0.0, %v466
      %468 = vmatmul.f32.gmra.mxu0 %v395
      %v469 = vpop.f32.mrf.mxu0
      %v470 = vadd.f32 0.0, %v469
      %471 = vmatmul.f32.gmra.mxu0 %v396
      %v472 = vpop.f32.mrf.mxu0
      %v473 = vadd.f32 0.0, %v472
      %474 = vmatmul.f32.gmra.mxu0 %v397
      %v475 = vpop.f32.mrf.mxu0
      %v476 = vadd.f32 0.0, %v475
      %477 = vmatmul.f32.gmra.mxu0 %v398
      %v478 = vpop.f32.mrf.mxu0
      %v479 = vadd.f32 0.0, %v478
      %480 = vdwg.mxu0
      %v481 = vadd.f32 %v336, %v434
      %v482 = vadd.f32 %v339, %v437
      %v483 = vadd.f32 %v342, %v440
      %v484 = vadd.f32 %v345, %v443
      %v485 = vadd.f32 %v348, %v446
      %v486 = vadd.f32 %v351, %v449
      %v487 = vadd.f32 %v354, %v452
      %v488 = vadd.f32 %v357, %v455
      %v489 = vadd.f32 %v360, %v458
      %v490 = vadd.f32 %v363, %v461
      %v491 = vadd.f32 %v366, %v464
      %v492 = vadd.f32 %v369, %v467
      %v493 = vadd.f32 %v372, %v470
      %v494 = vadd.f32 %v375, %v473
      %v495 = vadd.f32 %v378, %v476
      %v496 = vadd.f32 %v381, %v479
      %s497 = scalar_lea.vmem %s176, 24
      %v498 = vld [vmem:[%s497] sm:$0xff]
      %v499 = vld [vmem:[%s497 + $0x8] sm:$0xff]
      %v500 = vld [vmem:[%s497 + $0x48] sm:$0xff]
      %v501 = vld [vmem:[%s497 + $0x50] sm:$0xff]
      %v502 = vld [vmem:[%s497 + $0x90] sm:$0xff]
      %v503 = vld [vmem:[%s497 + $0x98] sm:$0xff]
      %v504 = vld [vmem:[%s497 + $0xd8] sm:$0xff]
      %v505 = vld [vmem:[%s497 + $0xe0] sm:$0xff]
      %v506 = vld [vmem:[%s497 + $0x120] sm:$0xff]
      %v507 = vld [vmem:[%s497 + $0x128] sm:$0xff]
      %v508 = vld [vmem:[%s497 + $0x168] sm:$0xff]
      %v509 = vld [vmem:[%s497 + $0x170] sm:$0xff]
      %v510 = vld [vmem:[%s497 + $0x1b0] sm:$0xff]
      %v511 = vld [vmem:[%s497 + $0x1b8] sm:$0xff]
      %v512 = vld [vmem:[%s497 + $0x1f8] sm:$0xff]
      %v513 = vld [vmem:[%s497 + $0x200] sm:$0xff]
      %s514 = scalar_lea.vmem %s1, 384
      %v515 = vld [vmem:[%s514] sm:$0xff]
      %v516 = vld [vmem:[%s514 + $0x8] sm:$0xff]
      %v517 = vld [vmem:[%s514 + $0x10] sm:$0xff]
      %v518 = vld [vmem:[%s514 + $0x18] sm:$0xff]
      %v519 = vld [vmem:[%s514 + $0x20] sm:$0xff]
      %v520 = vld [vmem:[%s514 + $0x28] sm:$0xff]
      %v521 = vld [vmem:[%s514 + $0x30] sm:$0xff]
      %v522 = vld [vmem:[%s514 + $0x38] sm:$0xff]
      %v523 = vld [vmem:[%s514 + $0x40] sm:$0xff]
      %v524 = vld [vmem:[%s514 + $0x48] sm:$0xff]
      %v525 = vld [vmem:[%s514 + $0x50] sm:$0xff]
      %v526 = vld [vmem:[%s514 + $0x58] sm:$0xff]
      %v527 = vld [vmem:[%s514 + $0x60] sm:$0xff]
      %v528 = vld [vmem:[%s514 + $0x68] sm:$0xff]
      %v529 = vld [vmem:[%s514 + $0x70] sm:$0xff]
      %v530 = vld [vmem:[%s514 + $0x78] sm:$0xff]
      %531 = vmatpush.msra.mxu0 %v530
      %532 = vmatpush.msra.mxu0 %v529
      %533 = vmatpush.msra.mxu0 %v528
      %534 = vmatpush.msra.mxu0 %v527
      %535 = vmatpush.msra.mxu0 %v526
      %536 = vmatpush.msra.mxu0 %v525
      %537 = vmatpush.msra.mxu0 %v524
      %538 = vmatpush.msra.mxu0 %v523
      %539 = vmatpush.msra.mxu0 %v522
      %540 = vmatpush.msra.mxu0 %v521
      %541 = vmatpush.msra.mxu0 %v520
      %542 = vmatpush.msra.mxu0 %v519
      %543 = vmatpush.msra.mxu0 %v518
      %544 = vmatpush.msra.mxu0 %v517
      %545 = vmatpush.msra.mxu0 %v516
      %546 = vmatpush.msra.mxu0 %v515
      %547 = vmatmul.f32.gmra.mxu0 %v498
      %v548 = vpop.f32.mrf.mxu0
      %v549 = vadd.f32 0.0, %v548
      %550 = vmatmul.f32.gmra.mxu0 %v499
      %v551 = vpop.f32.mrf.mxu0
      %v552 = vadd.f32 0.0, %v551
      %553 = vmatmul.f32.gmra.mxu0 %v500
      %v554 = vpop.f32.mrf.mxu0
      %v555 = vadd.f32 0.0, %v554
      %556 = vmatmul.f32.gmra.mxu0 %v501
      %v557 = vpop.f32.mrf.mxu0
      %v558 = vadd.f32 0.0, %v557
      %559 = vmatmul.f32.gmra.mxu0 %v502
      %v560 = vpop.f32.mrf.mxu0
      %v561 = vadd.f32 0.0, %v560
      %562 = vmatmul.f32.gmra.mxu0 %v503
      %v563 = vpop.f32.mrf.mxu0
      %v564 = vadd.f32 0.0, %v563
      %565 = vmatmul.f32.gmra.mxu0 %v504
      %v566 = vpop.f32.mrf.mxu0
      %v567 = vadd.f32 0.0, %v566
      %568 = vmatmul.f32.gmra.mxu0 %v505
      %v569 = vpop.f32.mrf.mxu0
      %v570 = vadd.f32 0.0, %v569
      %571 = vmatmul.f32.gmra.mxu0 %v506
      %v572 = vpop.f32.mrf.mxu0
      %v573 = vadd.f32 0.0, %v572
      %574 = vmatmul.f32.gmra.mxu0 %v507
      %v575 = vpop.f32.mrf.mxu0
      %v576 = vadd.f32 0.0, %v575
      %577 = vmatmul.f32.gmra.mxu0 %v508
      %v578 = vpop.f32.mrf.mxu0
      %v579 = vadd.f32 0.0, %v578
      %580 = vmatmul.f32.gmra.mxu0 %v509
      %v581 = vpop.f32.mrf.mxu0
      %v582 = vadd.f32 0.0, %v581
      %583 = vmatmul.f32.gmra.mxu0 %v510
      %v584 = vpop.f32.mrf.mxu0
      %v585 = vadd.f32 0.0, %v584
      %586 = vmatmul.f32.gmra.mxu0 %v511
      %v587 = vpop.f32.mrf.mxu0
      %v588 = vadd.f32 0.0, %v587
      %589 = vmatmul.f32.gmra.mxu0 %v512
      %v590 = vpop.f32.mrf.mxu0
      %v591 = vadd.f32 0.0, %v590
      %592 = vmatmul.f32.gmra.mxu0 %v513
      %v593 = vpop.f32.mrf.mxu0
      %v594 = vadd.f32 0.0, %v593
      %595 = vdwg.mxu0
      %v596 = vadd.f32 %v481, %v549
      %v597 = vadd.f32 %v482, %v552
      %v598 = vadd.f32 %v483, %v555
      %v599 = vadd.f32 %v484, %v558
      %v600 = vadd.f32 %v485, %v561
      %v601 = vadd.f32 %v486, %v564
      %v602 = vadd.f32 %v487, %v567
      %v603 = vadd.f32 %v488, %v570
      %v604 = vadd.f32 %v489, %v573
      %v605 = vadd.f32 %v490, %v576
      %v606 = vadd.f32 %v491, %v579
      %v607 = vadd.f32 %v492, %v582
      %v608 = vadd.f32 %v493, %v585
      %v609 = vadd.f32 %v494, %v588
      %v610 = vadd.f32 %v495, %v591
      %v611 = vadd.f32 %v496, %v594
      %v612 = vld [vmem:[%s497 + $0x1] sm:$0xff]
      %v613 = vld [vmem:[%s497 + $0x9] sm:$0xff]
      %v614 = vld [vmem:[%s497 + $0x49] sm:$0xff]
      %v615 = vld [vmem:[%s497 + $0x51] sm:$0xff]
      %v616 = vld [vmem:[%s497 + $0x91] sm:$0xff]
      %v617 = vld [vmem:[%s497 + $0x99] sm:$0xff]
      %v618 = vld [vmem:[%s497 + $0xd9] sm:$0xff]
      %v619 = vld [vmem:[%s497 + $0xe1] sm:$0xff]
      %v620 = vld [vmem:[%s497 + $0x121] sm:$0xff]
      %v621 = vld [vmem:[%s497 + $0x129] sm:$0xff]
      %v622 = vld [vmem:[%s497 + $0x169] sm:$0xff]
      %v623 = vld [vmem:[%s497 + $0x171] sm:$0xff]
      %v624 = vld [vmem:[%s497 + $0x1b1] sm:$0xff]
      %v625 = vld [vmem:[%s497 + $0x1b9] sm:$0xff]
      %v626 = vld [vmem:[%s497 + $0x1f9] sm:$0xff]
      %v627 = vld [vmem:[%s497 + $0x201] sm:$0xff]
      %s628 = scalar_lea.vmem %s1, 512
      %v629 = vld [vmem:[%s628] sm:$0xff]
      %v630 = vld [vmem:[%s628 + $0x8] sm:$0xff]
      %v631 = vld [vmem:[%s628 + $0x10] sm:$0xff]
      %v632 = vld [vmem:[%s628 + $0x18] sm:$0xff]
      %v633 = vld [vmem:[%s628 + $0x20] sm:$0xff]
      %v634 = vld [vmem:[%s628 + $0x28] sm:$0xff]
      %v635 = vld [vmem:[%s628 + $0x30] sm:$0xff]
      %v636 = vld [vmem:[%s628 + $0x38] sm:$0xff]
      %v637 = vld [vmem:[%s628 + $0x40] sm:$0xff]
      %v638 = vld [vmem:[%s628 + $0x48] sm:$0xff]
      %v639 = vld [vmem:[%s628 + $0x50] sm:$0xff]
      %v640 = vld [vmem:[%s628 + $0x58] sm:$0xff]
      %v641 = vld [vmem:[%s628 + $0x60] sm:$0xff]
      %v642 = vld [vmem:[%s628 + $0x68] sm:$0xff]
      %v643 = vld [vmem:[%s628 + $0x70] sm:$0xff]
      %v644 = vld [vmem:[%s628 + $0x78] sm:$0xff]
      %645 = vmatpush.msra.mxu0 %v644
      %646 = vmatpush.msra.mxu0 %v643
      %647 = vmatpush.msra.mxu0 %v642
      %648 = vmatpush.msra.mxu0 %v641
      %649 = vmatpush.msra.mxu0 %v640
      %650 = vmatpush.msra.mxu0 %v639
      %651 = vmatpush.msra.mxu0 %v638
      %652 = vmatpush.msra.mxu0 %v637
      %653 = vmatpush.msra.mxu0 %v636
      %654 = vmatpush.msra.mxu0 %v635
      %655 = vmatpush.msra.mxu0 %v634
      %656 = vmatpush.msra.mxu0 %v633
      %657 = vmatpush.msra.mxu0 %v632
      %658 = vmatpush.msra.mxu0 %v631
      %659 = vmatpush.msra.mxu0 %v630
      %660 = vmatpush.msra.mxu0 %v629
      %661 = vmatmul.f32.gmra.mxu0 %v612
      %v662 = vpop.f32.mrf.mxu0
      %v663 = vadd.f32 0.0, %v662
      %664 = vmatmul.f32.gmra.mxu0 %v613
      %v665 = vpop.f32.mrf.mxu0
      %v666 = vadd.f32 0.0, %v665
      %667 = vmatmul.f32.gmra.mxu0 %v614
      %v668 = vpop.f32.mrf.mxu0
      %v669 = vadd.f32 0.0, %v668
      %670 = vmatmul.f32.gmra.mxu0 %v615
      %v671 = vpop.f32.mrf.mxu0
      %v672 = vadd.f32 0.0, %v671
      %673 = vmatmul.f32.gmra.mxu0 %v616
      %v674 = vpop.f32.mrf.mxu0
      %v675 = vadd.f32 0.0, %v674
      %676 = vmatmul.f32.gmra.mxu0 %v617
      %v677 = vpop.f32.mrf.mxu0
      %v678 = vadd.f32 0.0, %v677
      %679 = vmatmul.f32.gmra.mxu0 %v618
      %v680 = vpop.f32.mrf.mxu0
      %v681 = vadd.f32 0.0, %v680
      %682 = vmatmul.f32.gmra.mxu0 %v619
      %v683 = vpop.f32.mrf.mxu0
      %v684 = vadd.f32 0.0, %v683
      %685 = vmatmul.f32.gmra.mxu0 %v620
      %v686 = vpop.f32.mrf.mxu0
      %v687 = vadd.f32 0.0, %v686
      %688 = vmatmul.f32.gmra.mxu0 %v621
      %v689 = vpop.f32.mrf.mxu0
      %v690 = vadd.f32 0.0, %v689
      %691 = vmatmul.f32.gmra.mxu0 %v622
      %v692 = vpop.f32.mrf.mxu0
      %v693 = vadd.f32 0.0, %v692
      %694 = vmatmul.f32.gmra.mxu0 %v623
      %v695 = vpop.f32.mrf.mxu0
      %v696 = vadd.f32 0.0, %v695
      %697 = vmatmul.f32.gmra.mxu0 %v624
      %v698 = vpop.f32.mrf.mxu0
      %v699 = vadd.f32 0.0, %v698
      %700 = vmatmul.f32.gmra.mxu0 %v625
      %v701 = vpop.f32.mrf.mxu0
      %v702 = vadd.f32 0.0, %v701
      %703 = vmatmul.f32.gmra.mxu0 %v626
      %v704 = vpop.f32.mrf.mxu0
      %v705 = vadd.f32 0.0, %v704
      %706 = vmatmul.f32.gmra.mxu0 %v627
      %v707 = vpop.f32.mrf.mxu0
      %v708 = vadd.f32 0.0, %v707
      %709 = vdwg.mxu0
      %v710 = vadd.f32 %v596, %v663
      %v711 = vadd.f32 %v597, %v666
      %v712 = vadd.f32 %v598, %v669
      %v713 = vadd.f32 %v599, %v672
      %v714 = vadd.f32 %v600, %v675
      %v715 = vadd.f32 %v601, %v678
      %v716 = vadd.f32 %v602, %v681
      %v717 = vadd.f32 %v603, %v684
      %v718 = vadd.f32 %v604, %v687
      %v719 = vadd.f32 %v605, %v690
      %v720 = vadd.f32 %v606, %v693
      %v721 = vadd.f32 %v607, %v696
      %v722 = vadd.f32 %v608, %v699
      %v723 = vadd.f32 %v609, %v702
      %v724 = vadd.f32 %v610, %v705
      %v725 = vadd.f32 %v611, %v708
      %v726 = vld [vmem:[%s497 + $0x2] sm:$0xff]
      %v727 = vld [vmem:[%s497 + $0xa] sm:$0xff]
      %v728 = vld [vmem:[%s497 + $0x4a] sm:$0xff]
      %v729 = vld [vmem:[%s497 + $0x52] sm:$0xff]
      %v730 = vld [vmem:[%s497 + $0x92] sm:$0xff]
      %v731 = vld [vmem:[%s497 + $0x9a] sm:$0xff]
      %v732 = vld [vmem:[%s497 + $0xda] sm:$0xff]
      %v733 = vld [vmem:[%s497 + $0xe2] sm:$0xff]
      %v734 = vld [vmem:[%s497 + $0x122] sm:$0xff]
      %v735 = vld [vmem:[%s497 + $0x12a] sm:$0xff]
      %v736 = vld [vmem:[%s497 + $0x16a] sm:$0xff]
      %v737 = vld [vmem:[%s497 + $0x172] sm:$0xff]
      %v738 = vld [vmem:[%s497 + $0x1b2] sm:$0xff]
      %v739 = vld [vmem:[%s497 + $0x1ba] sm:$0xff]
      %v740 = vld [vmem:[%s497 + $0x1fa] sm:$0xff]
      %v741 = vld [vmem:[%s497 + $0x202] sm:$0xff]
      %s742 = scalar_lea.vmem %s1, 640
      %v743 = vld [vmem:[%s742] sm:$0xff]
      %v744 = vld [vmem:[%s742 + $0x8] sm:$0xff]
      %v745 = vld [vmem:[%s742 + $0x10] sm:$0xff]
      %v746 = vld [vmem:[%s742 + $0x18] sm:$0xff]
      %v747 = vld [vmem:[%s742 + $0x20] sm:$0xff]
      %v748 = vld [vmem:[%s742 + $0x28] sm:$0xff]
      %v749 = vld [vmem:[%s742 + $0x30] sm:$0xff]
      %v750 = vld [vmem:[%s742 + $0x38] sm:$0xff]
      %v751 = vld [vmem:[%s742 + $0x40] sm:$0xff]
      %v752 = vld [vmem:[%s742 + $0x48] sm:$0xff]
      %v753 = vld [vmem:[%s742 + $0x50] sm:$0xff]
      %v754 = vld [vmem:[%s742 + $0x58] sm:$0xff]
      %v755 = vld [vmem:[%s742 + $0x60] sm:$0xff]
      %v756 = vld [vmem:[%s742 + $0x68] sm:$0xff]
      %v757 = vld [vmem:[%s742 + $0x70] sm:$0xff]
      %v758 = vld [vmem:[%s742 + $0x78] sm:$0xff]
      %759 = vmatpush.msra.mxu0 %v758
      %760 = vmatpush.msra.mxu0 %v757
      %761 = vmatpush.msra.mxu0 %v756
      %762 = vmatpush.msra.mxu0 %v755
      %763 = vmatpush.msra.mxu0 %v754
      %764 = vmatpush.msra.mxu0 %v753
      %765 = vmatpush.msra.mxu0 %v752
      %766 = vmatpush.msra.mxu0 %v751
      %767 = vmatpush.msra.mxu0 %v750
      %768 = vmatpush.msra.mxu0 %v749
      %769 = vmatpush.msra.mxu0 %v748
      %770 = vmatpush.msra.mxu0 %v747
      %771 = vmatpush.msra.mxu0 %v746
      %772 = vmatpush.msra.mxu0 %v745
      %773 = vmatpush.msra.mxu0 %v744
      %774 = vmatpush.msra.mxu0 %v743
      %775 = vmatmul.f32.gmra.mxu0 %v726
      %v776 = vpop.f32.mrf.mxu0
      %v777 = vadd.f32 0.0, %v776
      %778 = vmatmul.f32.gmra.mxu0 %v727
      %v779 = vpop.f32.mrf.mxu0
      %v780 = vadd.f32 0.0, %v779
      %781 = vmatmul.f32.gmra.mxu0 %v728
      %v782 = vpop.f32.mrf.mxu0
      %v783 = vadd.f32 0.0, %v782
      %784 = vmatmul.f32.gmra.mxu0 %v729
      %v785 = vpop.f32.mrf.mxu0
      %v786 = vadd.f32 0.0, %v785
      %787 = vmatmul.f32.gmra.mxu0 %v730
      %v788 = vpop.f32.mrf.mxu0
      %v789 = vadd.f32 0.0, %v788
      %790 = vmatmul.f32.gmra.mxu0 %v731
      %v791 = vpop.f32.mrf.mxu0
      %v792 = vadd.f32 0.0, %v791
      %793 = vmatmul.f32.gmra.mxu0 %v732
      %v794 = vpop.f32.mrf.mxu0
      %v795 = vadd.f32 0.0, %v794
      %796 = vmatmul.f32.gmra.mxu0 %v733
      %v797 = vpop.f32.mrf.mxu0
      %v798 = vadd.f32 0.0, %v797
      %799 = vmatmul.f32.gmra.mxu0 %v734
      %v800 = vpop.f32.mrf.mxu0
      %v801 = vadd.f32 0.0, %v800
      %802 = vmatmul.f32.gmra.mxu0 %v735
      %v803 = vpop.f32.mrf.mxu0
      %v804 = vadd.f32 0.0, %v803
      %805 = vmatmul.f32.gmra.mxu0 %v736
      %v806 = vpop.f32.mrf.mxu0
      %v807 = vadd.f32 0.0, %v806
      %808 = vmatmul.f32.gmra.mxu0 %v737
      %v809 = vpop.f32.mrf.mxu0
      %v810 = vadd.f32 0.0, %v809
      %811 = vmatmul.f32.gmra.mxu0 %v738
      %v812 = vpop.f32.mrf.mxu0
      %v813 = vadd.f32 0.0, %v812
      %814 = vmatmul.f32.gmra.mxu0 %v739
      %v815 = vpop.f32.mrf.mxu0
      %v816 = vadd.f32 0.0, %v815
      %817 = vmatmul.f32.gmra.mxu0 %v740
      %v818 = vpop.f32.mrf.mxu0
      %v819 = vadd.f32 0.0, %v818
      %820 = vmatmul.f32.gmra.mxu0 %v741
      %v821 = vpop.f32.mrf.mxu0
      %v822 = vadd.f32 0.0, %v821
      %823 = vdwg.mxu0
      %v824 = vadd.f32 %v710, %v777
      %v825 = vadd.f32 %v711, %v780
      %v826 = vadd.f32 %v712, %v783
      %v827 = vadd.f32 %v713, %v786
      %v828 = vadd.f32 %v714, %v789
      %v829 = vadd.f32 %v715, %v792
      %v830 = vadd.f32 %v716, %v795
      %v831 = vadd.f32 %v717, %v798
      %v832 = vadd.f32 %v718, %v801
      %v833 = vadd.f32 %v719, %v804
      %v834 = vadd.f32 %v720, %v807
      %v835 = vadd.f32 %v721, %v810
      %v836 = vadd.f32 %v722, %v813
      %v837 = vadd.f32 %v723, %v816
      %v838 = vadd.f32 %v724, %v819
      %v839 = vadd.f32 %v725, %v822
      %s840 = scalar_lea.vmem %s176, 48
      %v841 = vld [vmem:[%s840] sm:$0xff]
      %v842 = vld [vmem:[%s840 + $0x8] sm:$0xff]
      %v843 = vld [vmem:[%s840 + $0x48] sm:$0xff]
      %v844 = vld [vmem:[%s840 + $0x50] sm:$0xff]
      %v845 = vld [vmem:[%s840 + $0x90] sm:$0xff]
      %v846 = vld [vmem:[%s840 + $0x98] sm:$0xff]
      %v847 = vld [vmem:[%s840 + $0xd8] sm:$0xff]
      %v848 = vld [vmem:[%s840 + $0xe0] sm:$0xff]
      %v849 = vld [vmem:[%s840 + $0x120] sm:$0xff]
      %v850 = vld [vmem:[%s840 + $0x128] sm:$0xff]
      %v851 = vld [vmem:[%s840 + $0x168] sm:$0xff]
      %v852 = vld [vmem:[%s840 + $0x170] sm:$0xff]
      %v853 = vld [vmem:[%s840 + $0x1b0] sm:$0xff]
      %v854 = vld [vmem:[%s840 + $0x1b8] sm:$0xff]
      %v855 = vld [vmem:[%s840 + $0x1f8] sm:$0xff]
      %v856 = vld [vmem:[%s840 + $0x200] sm:$0xff]
      %s857 = scalar_lea.vmem %s1, 768
      %v858 = vld [vmem:[%s857] sm:$0xff]
      %v859 = vld [vmem:[%s857 + $0x8] sm:$0xff]
      %v860 = vld [vmem:[%s857 + $0x10] sm:$0xff]
      %v861 = vld [vmem:[%s857 + $0x18] sm:$0xff]
      %v862 = vld [vmem:[%s857 + $0x20] sm:$0xff]
      %v863 = vld [vmem:[%s857 + $0x28] sm:$0xff]
      %v864 = vld [vmem:[%s857 + $0x30] sm:$0xff]
      %v865 = vld [vmem:[%s857 + $0x38] sm:$0xff]
      %v866 = vld [vmem:[%s857 + $0x40] sm:$0xff]
      %v867 = vld [vmem:[%s857 + $0x48] sm:$0xff]
      %v868 = vld [vmem:[%s857 + $0x50] sm:$0xff]
      %v869 = vld [vmem:[%s857 + $0x58] sm:$0xff]
      %v870 = vld [vmem:[%s857 + $0x60] sm:$0xff]
      %v871 = vld [vmem:[%s857 + $0x68] sm:$0xff]
      %v872 = vld [vmem:[%s857 + $0x70] sm:$0xff]
      %v873 = vld [vmem:[%s857 + $0x78] sm:$0xff]
      %874 = vmatpush.msra.mxu0 %v873
      %875 = vmatpush.msra.mxu0 %v872
      %876 = vmatpush.msra.mxu0 %v871
      %877 = vmatpush.msra.mxu0 %v870
      %878 = vmatpush.msra.mxu0 %v869
      %879 = vmatpush.msra.mxu0 %v868
      %880 = vmatpush.msra.mxu0 %v867
      %881 = vmatpush.msra.mxu0 %v866
      %882 = vmatpush.msra.mxu0 %v865
      %883 = vmatpush.msra.mxu0 %v864
      %884 = vmatpush.msra.mxu0 %v863
      %885 = vmatpush.msra.mxu0 %v862
      %886 = vmatpush.msra.mxu0 %v861
      %887 = vmatpush.msra.mxu0 %v860
      %888 = vmatpush.msra.mxu0 %v859
      %889 = vmatpush.msra.mxu0 %v858
      %890 = vmatmul.f32.gmra.mxu0 %v841
      %v891 = vpop.f32.mrf.mxu0
      %v892 = vadd.f32 0.0, %v891
      %893 = vmatmul.f32.gmra.mxu0 %v842
      %v894 = vpop.f32.mrf.mxu0
      %v895 = vadd.f32 0.0, %v894
      %896 = vmatmul.f32.gmra.mxu0 %v843
      %v897 = vpop.f32.mrf.mxu0
      %v898 = vadd.f32 0.0, %v897
      %899 = vmatmul.f32.gmra.mxu0 %v844
      %v900 = vpop.f32.mrf.mxu0
      %v901 = vadd.f32 0.0, %v900
      %902 = vmatmul.f32.gmra.mxu0 %v845
      %v903 = vpop.f32.mrf.mxu0
      %v904 = vadd.f32 0.0, %v903
      %905 = vmatmul.f32.gmra.mxu0 %v846
      %v906 = vpop.f32.mrf.mxu0
      %v907 = vadd.f32 0.0, %v906
      %908 = vmatmul.f32.gmra.mxu0 %v847
      %v909 = vpop.f32.mrf.mxu0
      %v910 = vadd.f32 0.0, %v909
      %911 = vmatmul.f32.gmra.mxu0 %v848
      %v912 = vpop.f32.mrf.mxu0
      %v913 = vadd.f32 0.0, %v912
      %914 = vmatmul.f32.gmra.mxu0 %v849
      %v915 = vpop.f32.mrf.mxu0
      %v916 = vadd.f32 0.0, %v915
      %917 = vmatmul.f32.gmra.mxu0 %v850
      %v918 = vpop.f32.mrf.mxu0
      %v919 = vadd.f32 0.0, %v918
      %920 = vmatmul.f32.gmra.mxu0 %v851
      %v921 = vpop.f32.mrf.mxu0
      %v922 = vadd.f32 0.0, %v921
      %923 = vmatmul.f32.gmra.mxu0 %v852
      %v924 = vpop.f32.mrf.mxu0
      %v925 = vadd.f32 0.0, %v924
      %926 = vmatmul.f32.gmra.mxu0 %v853
      %v927 = vpop.f32.mrf.mxu0
      %v928 = vadd.f32 0.0, %v927
      %929 = vmatmul.f32.gmra.mxu0 %v854
      %v930 = vpop.f32.mrf.mxu0
      %v931 = vadd.f32 0.0, %v930
      %932 = vmatmul.f32.gmra.mxu0 %v855
      %v933 = vpop.f32.mrf.mxu0
      %v934 = vadd.f32 0.0, %v933
      %935 = vmatmul.f32.gmra.mxu0 %v856
      %v936 = vpop.f32.mrf.mxu0
      %v937 = vadd.f32 0.0, %v936
      %938 = vdwg.mxu0
      %v939 = vadd.f32 %v824, %v892
      %v940 = vadd.f32 %v825, %v895
      %v941 = vadd.f32 %v826, %v898
      %v942 = vadd.f32 %v827, %v901
      %v943 = vadd.f32 %v828, %v904
      %v944 = vadd.f32 %v829, %v907
      %v945 = vadd.f32 %v830, %v910
      %v946 = vadd.f32 %v831, %v913
      %v947 = vadd.f32 %v832, %v916
      %v948 = vadd.f32 %v833, %v919
      %v949 = vadd.f32 %v834, %v922
      %v950 = vadd.f32 %v835, %v925
      %v951 = vadd.f32 %v836, %v928
      %v952 = vadd.f32 %v837, %v931
      %v953 = vadd.f32 %v838, %v934
      %v954 = vadd.f32 %v839, %v937
      %v955 = vld [vmem:[%s840 + $0x1] sm:$0xff]
      %v956 = vld [vmem:[%s840 + $0x9] sm:$0xff]
      %v957 = vld [vmem:[%s840 + $0x49] sm:$0xff]
      %v958 = vld [vmem:[%s840 + $0x51] sm:$0xff]
      %v959 = vld [vmem:[%s840 + $0x91] sm:$0xff]
      %v960 = vld [vmem:[%s840 + $0x99] sm:$0xff]
      %v961 = vld [vmem:[%s840 + $0xd9] sm:$0xff]
      %v962 = vld [vmem:[%s840 + $0xe1] sm:$0xff]
      %v963 = vld [vmem:[%s840 + $0x121] sm:$0xff]
      %v964 = vld [vmem:[%s840 + $0x129] sm:$0xff]
      %v965 = vld [vmem:[%s840 + $0x169] sm:$0xff]
      %v966 = vld [vmem:[%s840 + $0x171] sm:$0xff]
      %v967 = vld [vmem:[%s840 + $0x1b1] sm:$0xff]
      %v968 = vld [vmem:[%s840 + $0x1b9] sm:$0xff]
      %v969 = vld [vmem:[%s840 + $0x1f9] sm:$0xff]
      %v970 = vld [vmem:[%s840 + $0x201] sm:$0xff]
      %s971 = scalar_lea.vmem %s1, 896
      %v972 = vld [vmem:[%s971] sm:$0xff]
      %v973 = vld [vmem:[%s971 + $0x8] sm:$0xff]
      %v974 = vld [vmem:[%s971 + $0x10] sm:$0xff]
      %v975 = vld [vmem:[%s971 + $0x18] sm:$0xff]
      %v976 = vld [vmem:[%s971 + $0x20] sm:$0xff]
      %v977 = vld [vmem:[%s971 + $0x28] sm:$0xff]
      %v978 = vld [vmem:[%s971 + $0x30] sm:$0xff]
      %v979 = vld [vmem:[%s971 + $0x38] sm:$0xff]
      %v980 = vld [vmem:[%s971 + $0x40] sm:$0xff]
      %v981 = vld [vmem:[%s971 + $0x48] sm:$0xff]
      %v982 = vld [vmem:[%s971 + $0x50] sm:$0xff]
      %v983 = vld [vmem:[%s971 + $0x58] sm:$0xff]
      %v984 = vld [vmem:[%s971 + $0x60] sm:$0xff]
      %v985 = vld [vmem:[%s971 + $0x68] sm:$0xff]
      %v986 = vld [vmem:[%s971 + $0x70] sm:$0xff]
      %v987 = vld [vmem:[%s971 + $0x78] sm:$0xff]
      %988 = vmatpush.msra.mxu0 %v987
      %989 = vmatpush.msra.mxu0 %v986
      %990 = vmatpush.msra.mxu0 %v985
      %991 = vmatpush.msra.mxu0 %v984
      %992 = vmatpush.msra.mxu0 %v983
      %993 = vmatpush.msra.mxu0 %v982
      %994 = vmatpush.msra.mxu0 %v981
      %995 = vmatpush.msra.mxu0 %v980
      %996 = vmatpush.msra.mxu0 %v979
      %997 = vmatpush.msra.mxu0 %v978
      %998 = vmatpush.msra.mxu0 %v977
      %999 = vmatpush.msra.mxu0 %v976
      %1000 = vmatpush.msra.mxu0 %v975
      %1001 = vmatpush.msra.mxu0 %v974
      %1002 = vmatpush.msra.mxu0 %v973
      %1003 = vmatpush.msra.mxu0 %v972
      %1004 = vmatmul.f32.gmra.mxu0 %v955
      %v1005 = vpop.f32.mrf.mxu0
      %v1006 = vadd.f32 0.0, %v1005
      %1007 = vmatmul.f32.gmra.mxu0 %v956
      %v1008 = vpop.f32.mrf.mxu0
      %v1009 = vadd.f32 0.0, %v1008
      %1010 = vmatmul.f32.gmra.mxu0 %v957
      %v1011 = vpop.f32.mrf.mxu0
      %v1012 = vadd.f32 0.0, %v1011
      %1013 = vmatmul.f32.gmra.mxu0 %v958
      %v1014 = vpop.f32.mrf.mxu0
      %v1015 = vadd.f32 0.0, %v1014
      %1016 = vmatmul.f32.gmra.mxu0 %v959
      %v1017 = vpop.f32.mrf.mxu0
      %v1018 = vadd.f32 0.0, %v1017
      %1019 = vmatmul.f32.gmra.mxu0 %v960
      %v1020 = vpop.f32.mrf.mxu0
      %v1021 = vadd.f32 0.0, %v1020
      %1022 = vmatmul.f32.gmra.mxu0 %v961
      %v1023 = vpop.f32.mrf.mxu0
      %v1024 = vadd.f32 0.0, %v1023
      %1025 = vmatmul.f32.gmra.mxu0 %v962
      %v1026 = vpop.f32.mrf.mxu0
      %v1027 = vadd.f32 0.0, %v1026
      %1028 = vmatmul.f32.gmra.mxu0 %v963
      %v1029 = vpop.f32.mrf.mxu0
      %v1030 = vadd.f32 0.0, %v1029
      %1031 = vmatmul.f32.gmra.mxu0 %v964
      %v1032 = vpop.f32.mrf.mxu0
      %v1033 = vadd.f32 0.0, %v1032
      %1034 = vmatmul.f32.gmra.mxu0 %v965
      %v1035 = vpop.f32.mrf.mxu0
      %v1036 = vadd.f32 0.0, %v1035
      %1037 = vmatmul.f32.gmra.mxu0 %v966
      %v1038 = vpop.f32.mrf.mxu0
      %v1039 = vadd.f32 0.0, %v1038
      %1040 = vmatmul.f32.gmra.mxu0 %v967
      %v1041 = vpop.f32.mrf.mxu0
      %v1042 = vadd.f32 0.0, %v1041
      %1043 = vmatmul.f32.gmra.mxu0 %v968
      %v1044 = vpop.f32.mrf.mxu0
      %v1045 = vadd.f32 0.0, %v1044
      %1046 = vmatmul.f32.gmra.mxu0 %v969
      %v1047 = vpop.f32.mrf.mxu0
      %v1048 = vadd.f32 0.0, %v1047
      %1049 = vmatmul.f32.gmra.mxu0 %v970
      %v1050 = vpop.f32.mrf.mxu0
      %v1051 = vadd.f32 0.0, %v1050
      %1052 = vdwg.mxu0
      %v1053 = vadd.f32 %v939, %v1006
      %v1054 = vadd.f32 %v940, %v1009
      %v1055 = vadd.f32 %v941, %v1012
      %v1056 = vadd.f32 %v942, %v1015
      %v1057 = vadd.f32 %v943, %v1018
      %v1058 = vadd.f32 %v944, %v1021
      %v1059 = vadd.f32 %v945, %v1024
      %v1060 = vadd.f32 %v946, %v1027
      %v1061 = vadd.f32 %v947, %v1030
      %v1062 = vadd.f32 %v948, %v1033
      %v1063 = vadd.f32 %v949, %v1036
      %v1064 = vadd.f32 %v950, %v1039
      %v1065 = vadd.f32 %v951, %v1042
      %v1066 = vadd.f32 %v952, %v1045
      %v1067 = vadd.f32 %v953, %v1048
      %v1068 = vadd.f32 %v954, %v1051
      %v1069 = vld [vmem:[%s840 + $0x2] sm:$0xff]
      %v1070 = vld [vmem:[%s840 + $0xa] sm:$0xff]
      %v1071 = vld [vmem:[%s840 + $0x4a] sm:$0xff]
      %v1072 = vld [vmem:[%s840 + $0x52] sm:$0xff]
      %v1073 = vld [vmem:[%s840 + $0x92] sm:$0xff]
      %v1074 = vld [vmem:[%s840 + $0x9a] sm:$0xff]
      %v1075 = vld [vmem:[%s840 + $0xda] sm:$0xff]
      %v1076 = vld [vmem:[%s840 + $0xe2] sm:$0xff]
      %v1077 = vld [vmem:[%s840 + $0x122] sm:$0xff]
      %v1078 = vld [vmem:[%s840 + $0x12a] sm:$0xff]
      %v1079 = vld [vmem:[%s840 + $0x16a] sm:$0xff]
      %v1080 = vld [vmem:[%s840 + $0x172] sm:$0xff]
      %v1081 = vld [vmem:[%s840 + $0x1b2] sm:$0xff]
      %v1082 = vld [vmem:[%s840 + $0x1ba] sm:$0xff]
      %v1083 = vld [vmem:[%s840 + $0x1fa] sm:$0xff]
      %v1084 = vld [vmem:[%s840 + $0x202] sm:$0xff]
      %s1085 = scalar_lea.vmem %s1, 1024
      %v1086 = vld [vmem:[%s1085] sm:$0xff]
      %v1087 = vld [vmem:[%s1085 + $0x8] sm:$0xff]
      %v1088 = vld [vmem:[%s1085 + $0x10] sm:$0xff]
      %v1089 = vld [vmem:[%s1085 + $0x18] sm:$0xff]
      %v1090 = vld [vmem:[%s1085 + $0x20] sm:$0xff]
      %v1091 = vld [vmem:[%s1085 + $0x28] sm:$0xff]
      %v1092 = vld [vmem:[%s1085 + $0x30] sm:$0xff]
      %v1093 = vld [vmem:[%s1085 + $0x38] sm:$0xff]
      %v1094 = vld [vmem:[%s1085 + $0x40] sm:$0xff]
      %v1095 = vld [vmem:[%s1085 + $0x48] sm:$0xff]
      %v1096 = vld [vmem:[%s1085 + $0x50] sm:$0xff]
      %v1097 = vld [vmem:[%s1085 + $0x58] sm:$0xff]
      %v1098 = vld [vmem:[%s1085 + $0x60] sm:$0xff]
      %v1099 = vld [vmem:[%s1085 + $0x68] sm:$0xff]
      %v1100 = vld [vmem:[%s1085 + $0x70] sm:$0xff]
      %v1101 = vld [vmem:[%s1085 + $0x78] sm:$0xff]
      %1102 = vmatpush.msra.mxu0 %v1101
      %1103 = vmatpush.msra.mxu0 %v1100
      %1104 = vmatpush.msra.mxu0 %v1099
      %1105 = vmatpush.msra.mxu0 %v1098
      %1106 = vmatpush.msra.mxu0 %v1097
      %1107 = vmatpush.msra.mxu0 %v1096
      %1108 = vmatpush.msra.mxu0 %v1095
      %1109 = vmatpush.msra.mxu0 %v1094
      %1110 = vmatpush.msra.mxu0 %v1093
      %1111 = vmatpush.msra.mxu0 %v1092
      %1112 = vmatpush.msra.mxu0 %v1091
      %1113 = vmatpush.msra.mxu0 %v1090
      %1114 = vmatpush.msra.mxu0 %v1089
      %1115 = vmatpush.msra.mxu0 %v1088
      %1116 = vmatpush.msra.mxu0 %v1087
      %1117 = vmatpush.msra.mxu0 %v1086
      %1118 = vmatmul.f32.gmra.mxu0 %v1069
      %v1119 = vpop.f32.mrf.mxu0
      %v1120 = vadd.f32 0.0, %v1119
      %1121 = vmatmul.f32.gmra.mxu0 %v1070
      %v1122 = vpop.f32.mrf.mxu0
      %v1123 = vadd.f32 0.0, %v1122
      %1124 = vmatmul.f32.gmra.mxu0 %v1071
      %v1125 = vpop.f32.mrf.mxu0
      %v1126 = vadd.f32 0.0, %v1125
      %1127 = vmatmul.f32.gmra.mxu0 %v1072
      %v1128 = vpop.f32.mrf.mxu0
      %v1129 = vadd.f32 0.0, %v1128
      %1130 = vmatmul.f32.gmra.mxu0 %v1073
      %v1131 = vpop.f32.mrf.mxu0
      %v1132 = vadd.f32 0.0, %v1131
      %1133 = vmatmul.f32.gmra.mxu0 %v1074
      %v1134 = vpop.f32.mrf.mxu0
      %v1135 = vadd.f32 0.0, %v1134
      %1136 = vmatmul.f32.gmra.mxu0 %v1075
      %v1137 = vpop.f32.mrf.mxu0
      %v1138 = vadd.f32 0.0, %v1137
      %1139 = vmatmul.f32.gmra.mxu0 %v1076
      %v1140 = vpop.f32.mrf.mxu0
      %v1141 = vadd.f32 0.0, %v1140
      %1142 = vmatmul.f32.gmra.mxu0 %v1077
      %v1143 = vpop.f32.mrf.mxu0
      %v1144 = vadd.f32 0.0, %v1143
      %1145 = vmatmul.f32.gmra.mxu0 %v1078
      %v1146 = vpop.f32.mrf.mxu0
      %v1147 = vadd.f32 0.0, %v1146
      %1148 = vmatmul.f32.gmra.mxu0 %v1079
      %v1149 = vpop.f32.mrf.mxu0
      %v1150 = vadd.f32 0.0, %v1149
      %1151 = vmatmul.f32.gmra.mxu0 %v1080
      %v1152 = vpop.f32.mrf.mxu0
      %v1153 = vadd.f32 0.0, %v1152
      %1154 = vmatmul.f32.gmra.mxu0 %v1081
      %v1155 = vpop.f32.mrf.mxu0
      %v1156 = vadd.f32 0.0, %v1155
      %1157 = vmatmul.f32.gmra.mxu0 %v1082
      %v1158 = vpop.f32.mrf.mxu0
      %v1159 = vadd.f32 0.0, %v1158
      %1160 = vmatmul.f32.gmra.mxu0 %v1083
      %v1161 = vpop.f32.mrf.mxu0
      %v1162 = vadd.f32 0.0, %v1161
      %1163 = vmatmul.f32.gmra.mxu0 %v1084
      %v1164 = vpop.f32.mrf.mxu0
      %v1165 = vadd.f32 0.0, %v1164
      %1166 = vdwg.mxu0
      %v1167 = vadd.f32 %v1053, %v1120
      %v1168 = vadd.f32 %v1054, %v1123
      %v1169 = vadd.f32 %v1055, %v1126
      %v1170 = vadd.f32 %v1056, %v1129
      %v1171 = vadd.f32 %v1057, %v1132
      %v1172 = vadd.f32 %v1058, %v1135
      %v1173 = vadd.f32 %v1059, %v1138
      %v1174 = vadd.f32 %v1060, %v1141
      %v1175 = vadd.f32 %v1061, %v1144
      %v1176 = vadd.f32 %v1062, %v1147
      %v1177 = vadd.f32 %v1063, %v1150
      %v1178 = vadd.f32 %v1064, %v1153
      %v1179 = vadd.f32 %v1065, %v1156
      %v1180 = vadd.f32 %v1066, %v1159
      %v1181 = vadd.f32 %v1067, %v1162
      %v1182 = vadd.f32 %v1068, %v1165
      %1183 = vst [vmem:[%s182] sm:$0xff] %v1167
      %1184 = vst [vmem:[%s182 + $0x8] sm:$0xff] %v1168
      %1185 = vst [vmem:[%s182 + $0x10] sm:$0xff] %v1169
      %1186 = vst [vmem:[%s182 + $0x18] sm:$0xff] %v1170
      %1187 = vst [vmem:[%s182 + $0x20] sm:$0xff] %v1171
      %1188 = vst [vmem:[%s182 + $0x28] sm:$0xff] %v1172
      %1189 = vst [vmem:[%s182 + $0x30] sm:$0xff] %v1173
      %1190 = vst [vmem:[%s182 + $0x38] sm:$0xff] %v1174
      %1191 = vst [vmem:[%s182 + $0x40] sm:$0xff] %v1175
      %1192 = vst [vmem:[%s182 + $0x48] sm:$0xff] %v1176
      %1193 = vst [vmem:[%s182 + $0x50] sm:$0xff] %v1177
      %1194 = vst [vmem:[%s182 + $0x58] sm:$0xff] %v1178
      %1195 = vst [vmem:[%s182 + $0x60] sm:$0xff] %v1179
      %1196 = vst [vmem:[%s182 + $0x68] sm:$0xff] %v1180
      %1197 = vst [vmem:[%s182 + $0x70] sm:$0xff] %v1181
      %1198 = vst [vmem:[%s182 + $0x78] sm:$0xff] %v1182
      %v1199 = vadd.f32 %v1167, %v1168
      %v1200 = vadd.f32 %v1199, %v1169
      %v1201 = vadd.f32 %v1200, %v1170
      %v1202 = vadd.f32 %v1201, %v1171
      %v1203 = vadd.f32 %v1202, %v1172
      %v1204 = vadd.f32 %v1203, %v1173
      %v1205 = vadd.f32 %v1204, %v1174
      %v1206 = vadd.f32 %v1205, %v1175
      %v1207 = vadd.f32 %v1206, %v1176
      %v1208 = vadd.f32 %v1207, %v1177
      %v1209 = vadd.f32 %v1208, %v1178
      %v1210 = vadd.f32 %v1209, %v1179
      %v1211 = vadd.f32 %v1210, %v1180
      %v1212 = vadd.f32 %v1211, %v1181
      %v1213 = vadd.f32 %v1212, %v1182
      %v1214 = vrot.slane %v1213, 4
      %v1215 = vadd.f32 %v1213, %v1214
      %v1216 = vrot.slane %v1215, 2
      %v1217 = vadd.f32 %v1215, %v1216
      %v1218 = vrot.slane %v1217, 1
      %v1219 = vadd.f32 %v1217, %v1218
      %v1220 = vmul.f32 %v1167, %v1167
      %v1221 = vmul.f32 %v1168, %v1168
      %v1222 = vmul.f32 %v1169, %v1169
      %v1223 = vmul.f32 %v1170, %v1170
      %v1224 = vmul.f32 %v1171, %v1171
      %v1225 = vmul.f32 %v1172, %v1172
      %v1226 = vmul.f32 %v1173, %v1173
      %v1227 = vmul.f32 %v1174, %v1174
      %v1228 = vmul.f32 %v1175, %v1175
      %v1229 = vmul.f32 %v1176, %v1176
      %v1230 = vmul.f32 %v1177, %v1177
      %v1231 = vmul.f32 %v1178, %v1178
      %v1232 = vmul.f32 %v1179, %v1179
      %v1233 = vmul.f32 %v1180, %v1180
      %v1234 = vmul.f32 %v1181, %v1181
      %v1235 = vmul.f32 %v1182, %v1182
      %v1236 = vadd.f32 %v1220, %v1221
      %v1237 = vadd.f32 %v1236, %v1222
      %v1238 = vadd.f32 %v1237, %v1223
      %v1239 = vadd.f32 %v1238, %v1224
      %v1240 = vadd.f32 %v1239, %v1225
      %v1241 = vadd.f32 %v1240, %v1226
      %v1242 = vadd.f32 %v1241, %v1227
      %v1243 = vadd.f32 %v1242, %v1228
      %v1244 = vadd.f32 %v1243, %v1229
      %v1245 = vadd.f32 %v1244, %v1230
      %v1246 = vadd.f32 %v1245, %v1231
      %v1247 = vadd.f32 %v1246, %v1232
      %v1248 = vadd.f32 %v1247, %v1233
      %v1249 = vadd.f32 %v1248, %v1234
      %v1250 = vadd.f32 %v1249, %v1235
      %v1251 = vrot.slane %v1250, 4
      %v1252 = vadd.f32 %v1250, %v1251
      %v1253 = vrot.slane %v1252, 2
      %v1254 = vadd.f32 %v1252, %v1253
      %v1255 = vrot.slane %v1254, 1
      %v1256 = vadd.f32 %v1254, %v1255
      %vm1257 = vcmask 1040384
      %v1258 = vsel %vm1257, %v1219, %v1256
      %1259 = vst [vmem:[%s187] sm:$0x3] %v1258
      %s1260 = smul.u32 16, %s15
      %p1261 = scmp.lt.s32.totalorder %s1260, 63
      %s1262 = scalar_select %p1261, %s1260, 63
      %s1263 = smul.addr %s1262, 8
      %s1264 = scalar_lea.vmem %s2, %s1263
      %p1265 = scmp.lt.s32.totalorder %s15, 3
      %s1266 = scalar_select %p1265, %s15, 3
      %s1267 = smul.addr %s1266, 2
      %s1268 = scalar_lea.vmem %s3, %s1267
      // Predicated region
      $region29: #{conv_block_forward.6} parent=27 // pred_check
        %p1269 = pneg %p80
      $region30: #{conv_block_forward.6} parent=27 // pred_check_branch
        %1271 = sbr.rel (%p1269) target = $region32
      $region31: #{conv_block_forward.6} parent=27 // pred_region
        %s1272 = smul.u32 16, %s15
      $region32: #{conv_block_forward.6} parent=27 // pred_fallthru
        _
      // Predicated region
      $region33: #{conv_block_forward.6} parent=27 // pred_check
        %p1273 = pneg %p106
      $region34: #{conv_block_forward.6} parent=27 // pred_check_branch
        %1275 = sbr.rel (%p1273) target = $region36
      $region35: #{conv_block_forward.6} parent=27 // pred_region
        _
      $region36: #{conv_block_forward.6} parent=27 // pred_fallthru
        _
    $region28: #{conv_block_forward.6} parent=5 // pred_fallthru
      _
    %p1276 = scmp.le.s32.totalorder 2, %s10
    // Predicated region
    $region37: #{conv_block_forward.6} parent=5 // pred_check
      %p1277 = pneg %p1276
    $region38: #{conv_block_forward.6} parent=5 // pred_check_branch
      %1279 = sbr.rel (%p1277) target = $region40
    $region39: #{conv_block_forward.6} parent=5 // pred_region
      %s1280 = ssub.s32 %s10, 2
      // Predicated region
      $region41: #{conv_block_forward.6} parent=39 // pred_check
        %p1281 = pneg %p86
      $region42: #{conv_block_forward.6} parent=39 // pred_check_branch
        %1283 = sbr.rel (%p1281) target = $region44
      $region43: #{conv_block_forward.6} parent=39 // pred_region
        %s1284 = smul.u32 16, %s16
        %p1285 = scmp.lt.s32.totalorder %s1284, 63
        %s1286 = scalar_select %p1285, %s1284, 63
        %s1287 = smul.addr %s1286, 8
        %s1288 = scalar_lea.vmem %s2, %s1287
      $region44: #{conv_block_forward.6} parent=39 // pred_fallthru
        _
      // Predicated region
      $region45: #{conv_block_forward.6} parent=39 // pred_check
        %p1289 = pneg %p112
      $region46: #{conv_block_forward.6} parent=39 // pred_check_branch
        %1291 = sbr.rel (%p1289) target = $region48
      $region47: #{conv_block_forward.6} parent=39 // pred_region
        %p1292 = scmp.lt.s32.totalorder %s16, 3
        %s1293 = scalar_select %p1292, %s16, 3
        %s1294 = smul.addr %s1293, 2
        %s1295 = scalar_lea.vmem %s3, %s1294
      $region48: #{conv_block_forward.6} parent=39 // pred_fallthru
        _
    $region40: #{conv_block_forward.6} parent=5 // pred_fallthru
      _
  $region6: #{conv_block_forward.6} parent=0 // loop_footer
    %s14 = sadd.s32 1, %s10
  $region7: #{conv_block_forward.6} parent=0 // loop_footer_branch
    %9 = sbr.rel target = $region3
  $region8: #{conv_block_forward.6} parent=0 // loop_exit
    _

</llo_original>
